<compile_context>
chip_gen: v7x
topology: tpu7x:2x2x1
jax: 0.10.0
libtpu: 0.0.40
codegen_flags: <defaults>
</compile_context>

<pallas_src>
import functools

import jax
import jax.numpy as jnp
from jax import lax
from jax.experimental import pallas as pl
from jax.experimental.pallas import tpu as pltpu


def _round_up(x, m):
    return (x + m - 1) // m * m


def fire_kernel(x_ref, wsq_ref, bsq_ref, we1_ref, be1_ref, w3_ref, be3_ref,
                out_ref, spad_ref):
    # x_ref:    (NB, H, W, Cin_p)  bf16   -- NB un-padded NHWC images
    # spad_ref: (NB, H+2, W+2, Csq_p) bf16 VMEM scratch (persistent)
    NB, H, W, Cin_p = x_ref.shape
    Csq_p = wsq_ref.shape[1]
    Ce_p = we1_ref.shape[1]
    M = NB * H * W

    # ---- squeeze 1x1 conv + bias + ReLU (interior pixels only) ----
    x2d = x_ref[...].reshape(M, Cin_p)                    # lane-dense relabel
    s = jnp.dot(x2d, wsq_ref[...], preferred_element_type=jnp.float32)
    s = jnp.maximum(s + bsq_ref[...], 0.0)                # f32 bias + ReLU
    s_bf = s.astype(jnp.bfloat16)                         # bf16 MXU operand

    # ---- expand 1x1: single bf16 matmul, direct lane-aligned store ----
    e1 = jnp.dot(s_bf, we1_ref[...], preferred_element_type=jnp.float32)
    e1 = e1 + be1_ref[...]
    out_ref[:, :, :Ce_p] = e1.reshape(NB, H * W, Ce_p).astype(out_ref.dtype)

    # ---- spatially zero-padded squeeze activation in VMEM scratch ----
    # Border ring zeroed every step (tiny; safe under megacore sharding where
    # a `pl.when(program_id==0)` init would only run on one core's scratch).
    spad_ref[:, 0:1, :, :] = jnp.zeros((NB, 1, W + 2, Csq_p), jnp.bfloat16)
    spad_ref[:, H + 1:H + 2, :, :] = jnp.zeros((NB, 1, W + 2, Csq_p), jnp.bfloat16)
    spad_ref[:, :, 0:1, :] = jnp.zeros((NB, H + 2, 1, Csq_p), jnp.bfloat16)
    spad_ref[:, :, W + 1:W + 2, :] = jnp.zeros((NB, H + 2, 1, Csq_p), jnp.bfloat16)
    # Interior written once with a single ref-slice store.
    spad_ref[:, 1:H + 1, 1:W + 1, :] = s_bf.reshape(NB, H, W, Csq_p)

    # ---- expand 3x3 (padding=1): 3 accumulating dots, one per kernel row ----
    # w3_ref rows are tap-major: row = kh*(3*Csq_p) + kw*Csq_p + ci.
    e3 = None
    for kh in range(3):
        cols = jnp.concatenate(
            [spad_ref[:, kh:kh + H, kw:kw + W, :].reshape(M, Csq_p)
             for kw in range(3)],
            axis=-1)                                      # (M, 3*Csq_p) bf16
        part = jnp.dot(cols,
                       w3_ref[kh * 3 * Csq_p:(kh + 1) * 3 * Csq_p, :],
                       preferred_element_type=jnp.float32)
        e3 = part if e3 is None else e3 + part
    e3 = e3 + be3_ref[...]
    out_ref[:, :, Ce_p:] = e3.reshape(NB, H * W, Ce_p).astype(out_ref.dtype)


def _pick_batch_block(n, hw, max_rows=1024, min_steps=2):
    """Largest divisor NB of n with NB*hw <= max_rows while keeping the grid
    length n//NB >= min_steps (so pipelining / 2-TC sharding stay active)."""
    best = 1
    for cand in range(1, n + 1):
        if n % cand:
            continue
        if cand * hw > max_rows:
            continue
        if cand != 1 and n // cand < min_steps:
            continue
        best = cand
    return best


@functools.partial(jax.jit, static_argnames=("out_dtype",))
def fire_forward(x_nchw, params, out_dtype=jnp.bfloat16):
    """x_nchw: (N, Cin, H, W) f32 -> (N, 2*Ce, H, W) out_dtype."""
    wsq, bsq, we1, be1, w3, be3 = params
    N, Cin, H, W = x_nchw.shape
    Csq = wsq.shape[1]
    Ce = we1.shape[1]

    LANE = 128
    Cin_p = _round_up(Cin, LANE)
    Csq_p = _round_up(Csq, LANE)
    Ce_p = _round_up(Ce, LANE)

    NB = _pick_batch_block(N, H * W)
    grid = (N // NB,)

    # ---- glue: cast to bf16 FIRST, then NCHW -> NHWC + lane-pad channels ----
    x_bf = x_nchw.astype(jnp.bfloat16)
    x_nhwc = jnp.transpose(x_bf, (0, 2, 3, 1))
    x_p = jnp.pad(x_nhwc, ((0, 0), (0, 0), (0, 0), (0, Cin_p - Cin)))

    wsq_p = jnp.pad(wsq, ((0, Cin_p - Cin), (0, Csq_p - Csq))).astype(jnp.bfloat16)
    we1_p = jnp.pad(we1, ((0, Csq_p - Csq), (0, Ce_p - Ce))).astype(jnp.bfloat16)
    w3_p = jnp.pad(w3, ((0, 0), (0, 0), (0, Csq_p - Csq), (0, Ce_p - Ce)))
    w3_p = w3_p.astype(jnp.bfloat16).reshape(9 * Csq_p, Ce_p)  # tap-major rows

    bsq_p = jnp.pad(bsq, (0, Csq_p - Csq)).reshape(1, Csq_p)    # biases stay f32
    be1_p = jnp.pad(be1, (0, Ce_p - Ce)).reshape(1, Ce_p)
    be3_p = jnp.pad(be3, (0, Ce_p - Ce)).reshape(1, Ce_p)

    # Cost estimate from the TRUE channel counts (not the 128-padded dims).
    out_itemsize = jnp.dtype(out_dtype).itemsize
    flops = 2 * N * H * W * Csq * (Cin + Ce + 9 * Ce)
    bytes_accessed = (N * H * W * Cin * 2
                      + (Cin * Csq + Csq * Ce + 9 * Csq * Ce) * 2
                      + (Csq + 2 * Ce) * 4
                      + N * H * W * 2 * Ce * out_itemsize)

    out_flat = pl.pallas_call(
        fire_kernel,
        out_shape=jax.ShapeDtypeStruct((N, H * W, 2 * Ce_p), out_dtype),
        grid_spec=pltpu.PrefetchScalarGridSpec(
            num_scalar_prefetch=0,
            grid=grid,
            in_specs=[
                pl.BlockSpec((NB, H, W, Cin_p), lambda b: (b, 0, 0, 0)),
                pl.BlockSpec((Cin_p, Csq_p), lambda b: (0, 0)),
                pl.BlockSpec((1, Csq_p), lambda b: (0, 0)),
                pl.BlockSpec((Csq_p, Ce_p), lambda b: (0, 0)),
                pl.BlockSpec((1, Ce_p), lambda b: (0, 0)),
                pl.BlockSpec((9 * Csq_p, Ce_p), lambda b: (0, 0)),
                pl.BlockSpec((1, Ce_p), lambda b: (0, 0)),
            ],
            out_specs=pl.BlockSpec((NB, H * W, 2 * Ce_p), lambda b: (b, 0, 0)),
            scratch_shapes=[
                pltpu.VMEM((NB, H + 2, W + 2, Csq_p), jnp.bfloat16),
            ]),
        compiler_params=pltpu.CompilerParams(
            dimension_semantics=("parallel",),
            vmem_limit_bytes=32 * 1024 * 1024),   # fits v7x's 64 MiB physical
        cost_estimate=pl.CostEstimate(flops=flops, transcendentals=0,
                                      bytes_accessed=bytes_accessed),
    )(x_p, wsq_p, bsq_p, we1_p, be1_p, w3_p, be3_p)

    # ---- glue: strip channel padding, (N, H*W, 2*Ce_p) -> (N, 2*Ce, H, W) ----
    out = out_flat.reshape(N, H, W, 2 * Ce_p)
    out = jnp.concatenate([out[..., :Ce], out[..., Ce_p:Ce_p + Ce]], axis=-1)
    return jnp.transpose(out, (0, 3, 1, 2))


def fire_reference(x_nchw, params, matmul_dtype=jnp.float32):
    """Pure-JAX reference matching PyTorch Fire.forward (NCHW).

    With matmul_dtype=bfloat16 the conv inputs/weights (and the squeeze
    activation) are rounded to bf16 while accumulation/bias/ReLU stay f32 --
    the kernel's precision policy.
    """
    wsq, bsq, we1, be1, w3, be3 = params
    dn = ('NCHW', 'OIHW', 'NCHW')
    hi = lax.Precision.HIGHEST

    def rnd(a):
        return a.astype(matmul_dtype).astype(jnp.float32)

    wsq_oihw = rnd(jnp.transpose(wsq, (1, 0))[:, :, None, None])
    we1_oihw = rnd(jnp.transpose(we1, (1, 0))[:, :, None, None])
    w3_oihw = rnd(jnp.transpose(w3, (3, 2, 0, 1)))            # (Ce, Csq, 3, 3)

    s = lax.conv_general_dilated(rnd(x_nchw), wsq_oihw, (1, 1), 'VALID',
                                 dimension_numbers=dn, precision=hi)
    s = jax.nn.relu(s + bsq[None, :, None, None])
    s = rnd(s)
    e1 = lax.conv_general_dilated(s, we1_oihw, (1, 1), 'VALID',
                                  dimension_numbers=dn, precision=hi)
    e1 = e1 + be1[None, :, None, None]
    e3 = lax.conv_general_dilated(s, w3_oihw, (1, 1), ((1, 1), (1, 1)),
                                  dimension_numbers=dn, precision=hi)
    e3 = e3 + be3[None, :, None, None]
    return jnp.concatenate([e1, e3], axis=1)


def init_params(key, in_channels, squeeze_channels, expand_channels):
    k1, k2, k3, k4, k5, k6 = jax.random.split(key, 6)
    wsq = 0.1 * jax.random.normal(k1, (in_channels, squeeze_channels), jnp.float32)
    bsq = 0.1 * jax.random.normal(k2, (squeeze_channels,), jnp.float32)
    we1 = 0.1 * jax.random.normal(k3, (squeeze_channels, expand_channels), jnp.float32)
    be1 = 0.1 * jax.random.normal(k4, (expand_channels,), jnp.float32)
    w3 = 0.1 * jax.random.normal(k5, (3, 3, squeeze_channels, expand_channels), jnp.float32)
    be3 = 0.1 * jax.random.normal(k6, (expand_channels,), jnp.float32)
    return wsq, bsq, we1, be1, w3, be3


if __name__ == "__main__":
    # Toy sizes (consistent with the module); real Fire blocks use Csq>=16,
    # Ce>=64 where the 128-lane padding overhead becomes negligible.
    N, Cin, H, W = 2, 4, 16, 16
    Csq, Ce = 8, 16

    key = jax.random.PRNGKey(0)
    kx, kp = jax.random.split(key)
    x = jax.random.normal(kx, (N, Cin, H, W), jnp.float32)
    params = init_params(kp, Cin, Csq, Ce)

    out = jax.block_until_ready(fire_forward(x, params))
    assert out.shape == (N, 2 * Ce, H, W), out.shape
    out_f32 = out.astype(jnp.float32)

    # Tight check: reference with the kernel's bf16-operand / f32-accum policy,
    # rounded to the kernel's bf16 output dtype.
    ref_bf = fire_reference(x, params, matmul_dtype=jnp.bfloat16)
    ref_bf_q = ref_bf.astype(jnp.bfloat16).astype(jnp.float32)
    err_bf = jnp.max(jnp.abs(out_f32 - ref_bf_q))
    assert err_bf < 2e-2, f"max abs err vs bf16-policy reference {err_bf}"

    # Loose sanity check: pure-f32 PyTorch semantics (bounds bf16 rounding).
    ref_f32 = fire_reference(x, params)
    err_f32 = jnp.max(jnp.abs(out_f32 - ref_f32))
    assert err_f32 < 2e-1, f"max abs err vs f32 reference {err_f32}"

    print("KERNEL_OK")
</pallas_src>

<mosaic_0001>
module attributes {stable_mosaic.version = 11 : i64} {
  func.func @fire_kernel(%arg0: i32, %arg1: memref<1x16x16x128xbf16, #tpu.memory_space<vmem>>, %arg2: memref<128x128xbf16, #tpu.memory_space<vmem>>, %arg3: memref<1x128xf32, #tpu.memory_space<vmem>>, %arg4: memref<128x128xbf16, #tpu.memory_space<vmem>>, %arg5: memref<1x128xf32, #tpu.memory_space<vmem>>, %arg6: memref<1152x128xbf16, #tpu.memory_space<vmem>>, %arg7: memref<1x128xf32, #tpu.memory_space<vmem>>, %arg8: memref<1x256x256xbf16, #tpu.memory_space<vmem>>, %arg9: memref<1x18x18x128xbf16, #tpu.memory_space<vmem>>) attributes {dimension_semantics = [#tpu.dimension_semantics<parallel>], iteration_bounds = array<i64: 2>, scalar_prefetch = 0 : i64, scratch_operands = 1 : i64, tpu.core_type = #tpu.core_type<tc>, window_params = [{transform_indices = @transform_0, window_bounds = array<i64: 1, 16, 16, 128>}, {pipeline_mode = #tpu.pipeline_mode<synchronous>, transform_indices = @transform_1, window_bounds = array<i64: 128, 128>}, {pipeline_mode = #tpu.pipeline_mode<synchronous>, transform_indices = @transform_2, window_bounds = array<i64: 1, 128>}, {pipeline_mode = #tpu.pipeline_mode<synchronous>, transform_indices = @transform_3, window_bounds = array<i64: 128, 128>}, {pipeline_mode = #tpu.pipeline_mode<synchronous>, transform_indices = @transform_4, window_bounds = array<i64: 1, 128>}, {pipeline_mode = #tpu.pipeline_mode<synchronous>, transform_indices = @transform_5, window_bounds = array<i64: 1152, 128>}, {pipeline_mode = #tpu.pipeline_mode<synchronous>, transform_indices = @transform_6, window_bounds = array<i64: 1, 128>}, {transform_indices = @transform_7, window_bounds = array<i64: 1, 256, 256>}]} {
    %c0 = arith.constant 0 : index
    %c0_0 = arith.constant 0 : index
    %c0_1 = arith.constant 0 : index
    %c0_2 = arith.constant 0 : index
    %0 = vector.load %arg1[%c0, %c0_0, %c0_1, %c0_2] : memref<1x16x16x128xbf16, #tpu.memory_space<vmem>>, vector<1x16x16x128xbf16>
    %1 = vector.shape_cast %0 : vector<1x16x16x128xbf16> to vector<256x128xbf16>
    %c0_3 = arith.constant 0 : index
    %c0_4 = arith.constant 0 : index
    %2 = vector.load %arg2[%c0_3, %c0_4] : memref<128x128xbf16, #tpu.memory_space<vmem>>, vector<128x128xbf16>
    %cst = arith.constant dense<0.000000e+00> : vector<256x128xf32>
    %3 = tpu.matmul %1, %2, %cst {dimension_numbers = #tpu.dot_dimension_numbers<[1], [0], [0], [1], [0, 0, 1, 1], [], []>} : vector<256x128xbf16>, vector<128x128xbf16>, vector<256x128xf32> -> vector<256x128xf32>
    %c0_5 = arith.constant 0 : index
    %c0_6 = arith.constant 0 : index
    %4 = vector.load %arg3[%c0_5, %c0_6] : memref<1x128xf32, #tpu.memory_space<vmem>>, vector<1x128xf32>
    %5 = vector.broadcast %4 : vector<1x128xf32> to vector<256x128xf32>
    %6 = arith.addf %3, %5 : vector<256x128xf32>
    %cst_7 = arith.constant 0.000000e+00 : f32
    %7 = vector.broadcast %cst_7 : f32 to vector<256x128xf32>
    %8 = arith.maximumf %6, %7 : vector<256x128xf32>
    %9 = arith.truncf %8 : vector<256x128xf32> to vector<256x128xbf16>
    %c0_8 = arith.constant 0 : index
    %c0_9 = arith.constant 0 : index
    %10 = vector.load %arg4[%c0_8, %c0_9] : memref<128x128xbf16, #tpu.memory_space<vmem>>, vector<128x128xbf16>
    %cst_10 = arith.constant dense<0.000000e+00> : vector<256x128xf32>
    %11 = tpu.matmul %9, %10, %cst_10 {dimension_numbers = #tpu.dot_dimension_numbers<[1], [0], [0], [1], [0, 0, 1, 1], [], []>} : vector<256x128xbf16>, vector<128x128xbf16>, vector<256x128xf32> -> vector<256x128xf32>
    %c0_11 = arith.constant 0 : index
    %c0_12 = arith.constant 0 : index
    %12 = vector.load %arg5[%c0_11, %c0_12] : memref<1x128xf32, #tpu.memory_space<vmem>>, vector<1x128xf32>
    %13 = vector.broadcast %12 : vector<1x128xf32> to vector<256x128xf32>
    %14 = arith.addf %11, %13 : vector<256x128xf32>
    %15 = vector.shape_cast %14 : vector<256x128xf32> to vector<1x256x128xf32>
    %16 = arith.truncf %15 : vector<1x256x128xf32> to vector<1x256x128xbf16>
    %c0_13 = arith.constant 0 : index
    %c0_14 = arith.constant 0 : index
    %c0_15 = arith.constant 0 : index
    %17 = vector.load %arg8[%c0_13, %c0_14, %c0_15] : memref<1x256x256xbf16, #tpu.memory_space<vmem>>, vector<1x256x128xbf16>
    tpu.vector_store %arg8[%c0_13, %c0_14, %c0_15], %16 {strides = array<i32>} : memref<1x256x256xbf16, #tpu.memory_space<vmem>>, vector<1x256x128xbf16>,
    %cst_16 = arith.constant 0.000000e+00 : bf16
    %18 = vector.broadcast %cst_16 : bf16 to vector<1x1x18x128xbf16>
    %c0_17 = arith.constant 0 : index
    %c0_18 = arith.constant 0 : index
    %c0_19 = arith.constant 0 : index
    %c0_20 = arith.constant 0 : index
    %19 = vector.load %arg9[%c0_17, %c0_18, %c0_19, %c0_20] : memref<1x18x18x128xbf16, #tpu.memory_space<vmem>>, vector<1x1x18x128xbf16>
    tpu.vector_store %arg9[%c0_17, %c0_18, %c0_19, %c0_20], %18 {strides = array<i32>} : memref<1x18x18x128xbf16, #tpu.memory_space<vmem>>, vector<1x1x18x128xbf16>,
    %cst_21 = arith.constant 0.000000e+00 : bf16
    %20 = vector.broadcast %cst_21 : bf16 to vector<1x1x18x128xbf16>
    %c0_22 = arith.constant 0 : index
    %c17 = arith.constant 17 : index
    %c0_23 = arith.constant 0 : index
    %c0_24 = arith.constant 0 : index
    %21 = vector.load %arg9[%c0_22, %c17, %c0_23, %c0_24] : memref<1x18x18x128xbf16, #tpu.memory_space<vmem>>, vector<1x1x18x128xbf16>
    tpu.vector_store %arg9[%c0_22, %c17, %c0_23, %c0_24], %20 {strides = array<i32>} : memref<1x18x18x128xbf16, #tpu.memory_space<vmem>>, vector<1x1x18x128xbf16>,
    %cst_25 = arith.constant 0.000000e+00 : bf16
    %22 = vector.broadcast %cst_25 : bf16 to vector<1x18x1x128xbf16>
    %c0_26 = arith.constant 0 : index
    %c0_27 = arith.constant 0 : index
    %c0_28 = arith.constant 0 : index
    %c0_29 = arith.constant 0 : index
    %23 = vector.load %arg9[%c0_26, %c0_27, %c0_28, %c0_29] : memref<1x18x18x128xbf16, #tpu.memory_space<vmem>>, vector<1x18x1x128xbf16>
    tpu.vector_store %arg9[%c0_26, %c0_27, %c0_28, %c0_29], %22 {strides = array<i32>} : memref<1x18x18x128xbf16, #tpu.memory_space<vmem>>, vector<1x18x1x128xbf16>,
    %cst_30 = arith.constant 0.000000e+00 : bf16
    %24 = vector.broadcast %cst_30 : bf16 to vector<1x18x1x128xbf16>
    %c0_31 = arith.constant 0 : index
    %c0_32 = arith.constant 0 : index
    %c17_33 = arith.constant 17 : index
    %c0_34 = arith.constant 0 : index
    %25 = vector.load %arg9[%c0_31, %c0_32, %c17_33, %c0_34] : memref<1x18x18x128xbf16, #tpu.memory_space<vmem>>, vector<1x18x1x128xbf16>
    tpu.vector_store %arg9[%c0_31, %c0_32, %c17_33, %c0_34], %24 {strides = array<i32>} : memref<1x18x18x128xbf16, #tpu.memory_space<vmem>>, vector<1x18x1x128xbf16>,
    %26 = vector.shape_cast %9 : vector<256x128xbf16> to vector<1x16x16x128xbf16>
    %c0_35 = arith.constant 0 : index
    %c1 = arith.constant 1 : index
    %c1_36 = arith.constant 1 : index
    %c0_37 = arith.constant 0 : index
    %27 = vector.load %arg9[%c0_35, %c1, %c1_36, %c0_37] : memref<1x18x18x128xbf16, #tpu.memory_space<vmem>>, vector<1x16x16x128xbf16>
    tpu.vector_store %arg9[%c0_35, %c1, %c1_36, %c0_37], %26 {strides = array<i32>} : memref<1x18x18x128xbf16, #tpu.memory_space<vmem>>, vector<1x16x16x128xbf16>,
    %c0_38 = arith.constant 0 : index
    %c0_39 = arith.constant 0 : index
    %c0_40 = arith.constant 0 : index
    %c0_41 = arith.constant 0 : index
    %28 = vector.load %arg9[%c0_38, %c0_39, %c0_40, %c0_41] : memref<1x18x18x128xbf16, #tpu.memory_space<vmem>>, vector<1x16x16x128xbf16>
    %29 = vector.shape_cast %28 : vector<1x16x16x128xbf16> to vector<256x128xbf16>
    %c0_42 = arith.constant 0 : index
    %c0_43 = arith.constant 0 : index
    %c1_44 = arith.constant 1 : index
    %c0_45 = arith.constant 0 : index
    %30 = vector.load %arg9[%c0_42, %c0_43, %c1_44, %c0_45] : memref<1x18x18x128xbf16, #tpu.memory_space<vmem>>, vector<1x16x16x128xbf16>
    %31 = vector.shape_cast %30 : vector<1x16x16x128xbf16> to vector<256x128xbf16>
    %c0_46 = arith.constant 0 : index
    %c0_47 = arith.constant 0 : index
    %c2 = arith.constant 2 : index
    %c0_48 = arith.constant 0 : index
    %32 = vector.load %arg9[%c0_46, %c0_47, %c2, %c0_48] : memref<1x18x18x128xbf16, #tpu.memory_space<vmem>>, vector<1x16x16x128xbf16>
    %33 = vector.shape_cast %32 : vector<1x16x16x128xbf16> to vector<256x128xbf16>
    %34 = tpu.concatenate %29, %31, %33 in 1 : vector<256x128xbf16>, vector<256x128xbf16>, vector<256x128xbf16> -> vector<256x384xbf16>
    %c0_49 = arith.constant 0 : index
    %c0_50 = arith.constant 0 : index
    %35 = vector.load %arg6[%c0_49, %c0_50] : memref<1152x128xbf16, #tpu.memory_space<vmem>>, vector<384x128xbf16>
    %cst_51 = arith.constant dense<0.000000e+00> : vector<256x128xf32>
    %36 = tpu.matmul %34, %35, %cst_51 {dimension_numbers = #tpu.dot_dimension_numbers<[1], [0], [0], [1], [0, 0, 1, 1], [], []>} : vector<256x384xbf16>, vector<384x128xbf16>, vector<256x128xf32> -> vector<256x128xf32>
    %c0_52 = arith.constant 0 : index
    %c1_53 = arith.constant 1 : index
    %c0_54 = arith.constant 0 : index
    %c0_55 = arith.constant 0 : index
    %37 = vector.load %arg9[%c0_52, %c1_53, %c0_54, %c0_55] : memref<1x18x18x128xbf16, #tpu.memory_space<vmem>>, vector<1x16x16x128xbf16>
    %38 = vector.shape_cast %37 : vector<1x16x16x128xbf16> to vector<256x128xbf16>
    %c0_56 = arith.constant 0 : index
    %c1_57 = arith.constant 1 : index
    %c1_58 = arith.constant 1 : index
    %c0_59 = arith.constant 0 : index
    %39 = vector.load %arg9[%c0_56, %c1_57, %c1_58, %c0_59] : memref<1x18x18x128xbf16, #tpu.memory_space<vmem>>, vector<1x16x16x128xbf16>
    %40 = vector.shape_cast %39 : vector<1x16x16x128xbf16> to vector<256x128xbf16>
    %c0_60 = arith.constant 0 : index
    %c1_61 = arith.constant 1 : index
    %c2_62 = arith.constant 2 : index
    %c0_63 = arith.constant 0 : index
    %41 = vector.load %arg9[%c0_60, %c1_61, %c2_62, %c0_63] : memref<1x18x18x128xbf16, #tpu.memory_space<vmem>>, vector<1x16x16x128xbf16>
    %42 = vector.shape_cast %41 : vector<1x16x16x128xbf16> to vector<256x128xbf16>
    %43 = tpu.concatenate %38, %40, %42 in 1 : vector<256x128xbf16>, vector<256x128xbf16>, vector<256x128xbf16> -> vector<256x384xbf16>
    %c384 = arith.constant 384 : index
    %c0_64 = arith.constant 0 : index
    %44 = vector.load %arg6[%c384, %c0_64] : memref<1152x128xbf16, #tpu.memory_space<vmem>>, vector<384x128xbf16>
    %cst_65 = arith.constant dense<0.000000e+00> : vector<256x128xf32>
    %45 = tpu.matmul %43, %44, %cst_65 {dimension_numbers = #tpu.dot_dimension_numbers<[1], [0], [0], [1], [0, 0, 1, 1], [], []>} : vector<256x384xbf16>, vector<384x128xbf16>, vector<256x128xf32> -> vector<256x128xf32>
    %46 = arith.addf %36, %45 : vector<256x128xf32>
    %c0_66 = arith.constant 0 : index
    %c2_67 = arith.constant 2 : index
    %c0_68 = arith.constant 0 : index
    %c0_69 = arith.constant 0 : index
    %47 = vector.load %arg9[%c0_66, %c2_67, %c0_68, %c0_69] : memref<1x18x18x128xbf16, #tpu.memory_space<vmem>>, vector<1x16x16x128xbf16>
    %48 = vector.shape_cast %47 : vector<1x16x16x128xbf16> to vector<256x128xbf16>
    %c0_70 = arith.constant 0 : index
    %c2_71 = arith.constant 2 : index
    %c1_72 = arith.constant 1 : index
    %c0_73 = arith.constant 0 : index
    %49 = vector.load %arg9[%c0_70, %c2_71, %c1_72, %c0_73] : memref<1x18x18x128xbf16, #tpu.memory_space<vmem>>, vector<1x16x16x128xbf16>
    %50 = vector.shape_cast %49 : vector<1x16x16x128xbf16> to vector<256x128xbf16>
    %c0_74 = arith.constant 0 : index
    %c2_75 = arith.constant 2 : index
    %c2_76 = arith.constant 2 : index
    %c0_77 = arith.constant 0 : index
    %51 = vector.load %arg9[%c0_74, %c2_75, %c2_76, %c0_77] : memref<1x18x18x128xbf16, #tpu.memory_space<vmem>>, vector<1x16x16x128xbf16>
    %52 = vector.shape_cast %51 : vector<1x16x16x128xbf16> to vector<256x128xbf16>
    %53 = tpu.concatenate %48, %50, %52 in 1 : vector<256x128xbf16>, vector<256x128xbf16>, vector<256x128xbf16> -> vector<256x384xbf16>
    %c768 = arith.constant 768 : index
    %c0_78 = arith.constant 0 : index
    %54 = vector.load %arg6[%c768, %c0_78] : memref<1152x128xbf16, #tpu.memory_space<vmem>>, vector<384x128xbf16>
    %cst_79 = arith.constant dense<0.000000e+00> : vector<256x128xf32>
    %55 = tpu.matmul %53, %54, %cst_79 {dimension_numbers = #tpu.dot_dimension_numbers<[1], [0], [0], [1], [0, 0, 1, 1], [], []>} : vector<256x384xbf16>, vector<384x128xbf16>, vector<256x128xf32> -> vector<256x128xf32>
    %56 = arith.addf %46, %55 : vector<256x128xf32>
    %c0_80 = arith.constant 0 : index
    %c0_81 = arith.constant 0 : index
    %57 = vector.load %arg7[%c0_80, %c0_81] : memref<1x128xf32, #tpu.memory_space<vmem>>, vector<1x128xf32>
    %58 = vector.broadcast %57 : vector<1x128xf32> to vector<256x128xf32>
    %59 = arith.addf %56, %58 : vector<256x128xf32>
    %60 = vector.shape_cast %59 : vector<256x128xf32> to vector<1x256x128xf32>
    %61 = arith.truncf %60 : vector<1x256x128xf32> to vector<1x256x128xbf16>
    %c0_82 = arith.constant 0 : index
    %c0_83 = arith.constant 0 : index
    %c128 = arith.constant 128 : index
    %62 = vector.load %arg8[%c0_82, %c0_83, %c128] : memref<1x256x256xbf16, #tpu.memory_space<vmem>>, vector<1x256x128xbf16>
    tpu.vector_store %arg8[%c0_82, %c0_83, %c128], %61 {strides = array<i32>} : memref<1x256x256xbf16, #tpu.memory_space<vmem>>, vector<1x256x128xbf16>,
    return
  }
  func.func @transform_0(%arg0: i32) -> (i32, i32, i32, i32) {
    %c0_i32 = arith.constant 0 : i32
    %c0_i32_0 = arith.constant 0 : i32
    %c0_i32_1 = arith.constant 0 : i32
    %c0_i32_2 = arith.constant 0 : i32
    return %arg0, %c0_i32, %c0_i32_0, %c0_i32_1 : i32, i32, i32, i32
  }
  func.func @transform_1(%arg0: i32) -> (i32, i32) {
    %c0_i32 = arith.constant 0 : i32
    %c0_i32_0 = arith.constant 0 : i32
    %c0_i32_1 = arith.constant 0 : i32
    return %c0_i32, %c0_i32_0 : i32, i32
  }
  func.func @transform_2(%arg0: i32) -> (i32, i32) {
    %c0_i32 = arith.constant 0 : i32
    %c0_i32_0 = arith.constant 0 : i32
    %c0_i32_1 = arith.constant 0 : i32
    return %c0_i32, %c0_i32_0 : i32, i32
  }
  func.func @transform_3(%arg0: i32) -> (i32, i32) {
    %c0_i32 = arith.constant 0 : i32
    %c0_i32_0 = arith.constant 0 : i32
    %c0_i32_1 = arith.constant 0 : i32
    return %c0_i32, %c0_i32_0 : i32, i32
  }
  func.func @transform_4(%arg0: i32) -> (i32, i32) {
    %c0_i32 = arith.constant 0 : i32
    %c0_i32_0 = arith.constant 0 : i32
    %c0_i32_1 = arith.constant 0 : i32
    return %c0_i32, %c0_i32_0 : i32, i32
  }
  func.func @transform_5(%arg0: i32) -> (i32, i32) {
    %c0_i32 = arith.constant 0 : i32
    %c0_i32_0 = arith.constant 0 : i32
    %c0_i32_1 = arith.constant 0 : i32
    return %c0_i32, %c0_i32_0 : i32, i32
  }
  func.func @transform_6(%arg0: i32) -> (i32, i32) {
    %c0_i32 = arith.constant 0 : i32
    %c0_i32_0 = arith.constant 0 : i32
    %c0_i32_1 = arith.constant 0 : i32
    return %c0_i32, %c0_i32_0 : i32, i32
  }
  func.func @transform_7(%arg0: i32) -> (i32, i32, i32) {
    %c0_i32 = arith.constant 0 : i32
    %c0_i32_0 = arith.constant 0 : i32
    %c0_i32_1 = arith.constant 0 : i32
    return %arg0, %c0_i32, %c0_i32_0 : i32, i32, i32
  }
}

</mosaic_0001>

<llo_original>
// kernel: fire_forward.1
$region0: #{fire_forward.1}
  #allocation0 [shape = 'u32[]', space=smem, size = 0x4, offset = 0x4, fixed_abs, tag = 'smem constant byte address 0x4 - core index']
  #allocation1 [shape = 'u32[144,128]{1,0:T(1,128)}', space=vmem, size = 0x12000, scoped, tag = 'internal scratch']
  #allocation2 [shape = 'bf16[1,18,18,128]{3,2,1,0:T(8,128)(2,1)}', space=vmem, size = 0x1b000, scoped, tag = 'scratch operand']
  %s0 = inlined_call_operand.vmem [shape: bf16[2,16,16,128], index: 0, kind: input, shape index: {}]
  %s1 = inlined_call_operand.vmem [shape: bf16[128,128], index: 1, kind: input, shape index: {}]
  %s2 = inlined_call_operand.vmem [shape: f32[1,128], index: 2, kind: input, shape index: {}]
  %s3 = inlined_call_operand.vmem [shape: bf16[128,128], index: 3, kind: input, shape index: {}]
  %s4 = inlined_call_operand.vmem [shape: f32[1,128], index: 4, kind: input, shape index: {}]
  %s5 = inlined_call_operand.vmem [shape: bf16[1152,128], index: 5, kind: input, shape index: {}]
  %s6 = inlined_call_operand.vmem [shape: f32[1,128], index: 6, kind: input, shape index: {}]
  %s7 = inlined_call_operand.vmem [shape: bf16[2,256,256], index: 7, kind: output, shape index: {}]
  %s8 = sld [smem:[#allocation0]]
  $region61: #{fire_forward.1} parent=0
    _
  %s10 = ssub.s32 1, %s8
  %s11 = scalar_select 0, %s10, %s8
  loop: start=0, step=1, limit=4
  $region2: #{fire_forward.1} parent=0 // loop_pre_header
    _
  $region3: #{fire_forward.1} parent=0 // loop_header
    %s13 = sphi 0, %s17
    %p14 = scmp.ge.s32.totalorder %s13, 4
    %s23 = sphi 0, %s25
    %s26 = sphi 0, %s23
    %s27 = sphi 0, %s26
    %s43 = sphi 0, %s27
    %s47 = sphi 0, %s47
    %s49 = sphi 0, %s47
    %s50 = sphi 0, %s49
    %s64 = sphi 0, %s50
    %s68 = sphi 0, %s68
    %s70 = sphi 0, %s68
    %s71 = sphi 0, %s70
    %s85 = sphi 0, %s71
    %s89 = sphi 0, %s89
    %s91 = sphi 0, %s89
    %s92 = sphi 0, %s91
    %s106 = sphi 0, %s92
    %s110 = sphi 0, %s110
    %s112 = sphi 0, %s110
    %s113 = sphi 0, %s112
    %s127 = sphi 0, %s113
    %s131 = sphi 0, %s131
    %s133 = sphi 0, %s131
    %s134 = sphi 0, %s133
    %s148 = sphi 0, %s134
    %s152 = sphi 0, %s152
    %s154 = sphi 0, %s152
    %s155 = sphi 0, %s154
    %s169 = sphi 0, %s155
    %s175 = sphi 0, %s177
    %s178 = sphi 0, %s175
    %s179 = sphi 0, %s178
    %s195 = sphi 0, %s179
  $region4: #{fire_forward.1} parent=0 // loop_header_branch
    %16 = sbr.rel (%p14) target = $region8
  $region5: #{fire_forward.1} parent=0 // loop_body
    %s18 = ssub.s32 %s13, 1
    %s19 = ssub.s32 %s13, 2
    %s20 = sadd.s32 %s13, 1
    %s21 = ssub.s32 %s13, %s20
    %p22 = scmp.eq.s32.totalorder %s21, 0
    %s24 = sadd.s32 %s23, 1
    %s25 = scalar_select %p22, %s23, %s24
    %p28 = pneg %p22
    %p29 = scmp.eq.s32.totalorder %s13, 1
    %p30 = por %p28, %p29
    %p31 = scmp.ne.s32.totalorder %s23, %s26
    %p32 = scmp.eq.s32.totalorder %s13, 0
    %p33 = por %p31, %p32
    %p34 = scmp.ne.s32.totalorder %s23, %s26
    %p35 = scmp.eq.s32.totalorder %s18, 1
    %p36 = por %p34, %p35
    %p37 = scmp.ne.s32.totalorder %s26, %s27
    %p38 = scmp.eq.s32.totalorder %s18, 0
    %p39 = por %p37, %p38
    %p40 = scmp.ne.s32.totalorder %s26, %s27
    %p41 = scmp.eq.s32.totalorder %s19, 1
    %p42 = por %p40, %p41
    %p44 = scmp.ne.s32.totalorder %s27, %s43
    %p45 = scmp.eq.s32.totalorder %s19, 0
    %p46 = por %p44, %p45
    %s48 = sadd.s32 %s47, 1
    %p51 = scmp.eq.s32.totalorder %s13, 1
    %p52 = scmp.ne.s32.totalorder %s47, %s49
    %p53 = scmp.eq.s32.totalorder %s13, 0
    %p54 = por %p52, %p53
    %p55 = scmp.ne.s32.totalorder %s47, %s49
    %p56 = scmp.eq.s32.totalorder %s18, 1
    %p57 = por %p55, %p56
    %p58 = scmp.ne.s32.totalorder %s49, %s50
    %p59 = scmp.eq.s32.totalorder %s18, 0
    %p60 = por %p58, %p59
    %p61 = scmp.ne.s32.totalorder %s49, %s50
    %p62 = scmp.eq.s32.totalorder %s19, 1
    %p63 = por %p61, %p62
    %p65 = scmp.ne.s32.totalorder %s50, %s64
    %p66 = scmp.eq.s32.totalorder %s19, 0
    %p67 = por %p65, %p66
    %s69 = sadd.s32 %s68, 1
    %p72 = scmp.eq.s32.totalorder %s13, 1
    %p73 = scmp.ne.s32.totalorder %s68, %s70
    %p74 = scmp.eq.s32.totalorder %s13, 0
    %p75 = por %p73, %p74
    %p76 = scmp.ne.s32.totalorder %s68, %s70
    %p77 = scmp.eq.s32.totalorder %s18, 1
    %p78 = por %p76, %p77
    %p79 = scmp.ne.s32.totalorder %s70, %s71
    %p80 = scmp.eq.s32.totalorder %s18, 0
    %p81 = por %p79, %p80
    %p82 = scmp.ne.s32.totalorder %s70, %s71
    %p83 = scmp.eq.s32.totalorder %s19, 1
    %p84 = por %p82, %p83
    %p86 = scmp.ne.s32.totalorder %s71, %s85
    %p87 = scmp.eq.s32.totalorder %s19, 0
    %p88 = por %p86, %p87
    %s90 = sadd.s32 %s89, 1
    %p93 = scmp.eq.s32.totalorder %s13, 1
    %p94 = scmp.ne.s32.totalorder %s89, %s91
    %p95 = scmp.eq.s32.totalorder %s13, 0
    %p96 = por %p94, %p95
    %p97 = scmp.ne.s32.totalorder %s89, %s91
    %p98 = scmp.eq.s32.totalorder %s18, 1
    %p99 = por %p97, %p98
    %p100 = scmp.ne.s32.totalorder %s91, %s92
    %p101 = scmp.eq.s32.totalorder %s18, 0
    %p102 = por %p100, %p101
    %p103 = scmp.ne.s32.totalorder %s91, %s92
    %p104 = scmp.eq.s32.totalorder %s19, 1
    %p105 = por %p103, %p104
    %p107 = scmp.ne.s32.totalorder %s92, %s106
    %p108 = scmp.eq.s32.totalorder %s19, 0
    %p109 = por %p107, %p108
    %s111 = sadd.s32 %s110, 1
    %p114 = scmp.eq.s32.totalorder %s13, 1
    %p115 = scmp.ne.s32.totalorder %s110, %s112
    %p116 = scmp.eq.s32.totalorder %s13, 0
    %p117 = por %p115, %p116
    %p118 = scmp.ne.s32.totalorder %s110, %s112
    %p119 = scmp.eq.s32.totalorder %s18, 1
    %p120 = por %p118, %p119
    %p121 = scmp.ne.s32.totalorder %s112, %s113
    %p122 = scmp.eq.s32.totalorder %s18, 0
    %p123 = por %p121, %p122
    %p124 = scmp.ne.s32.totalorder %s112, %s113
    %p125 = scmp.eq.s32.totalorder %s19, 1
    %p126 = por %p124, %p125
    %p128 = scmp.ne.s32.totalorder %s113, %s127
    %p129 = scmp.eq.s32.totalorder %s19, 0
    %p130 = por %p128, %p129
    %s132 = sadd.s32 %s131, 1
    %p135 = scmp.eq.s32.totalorder %s13, 1
    %p136 = scmp.ne.s32.totalorder %s131, %s133
    %p137 = scmp.eq.s32.totalorder %s13, 0
    %p138 = por %p136, %p137
    %p139 = scmp.ne.s32.totalorder %s131, %s133
    %p140 = scmp.eq.s32.totalorder %s18, 1
    %p141 = por %p139, %p140
    %p142 = scmp.ne.s32.totalorder %s133, %s134
    %p143 = scmp.eq.s32.totalorder %s18, 0
    %p144 = por %p142, %p143
    %p145 = scmp.ne.s32.totalorder %s133, %s134
    %p146 = scmp.eq.s32.totalorder %s19, 1
    %p147 = por %p145, %p146
    %p149 = scmp.ne.s32.totalorder %s134, %s148
    %p150 = scmp.eq.s32.totalorder %s19, 0
    %p151 = por %p149, %p150
    %s153 = sadd.s32 %s152, 1
    %p156 = scmp.eq.s32.totalorder %s13, 1
    %p157 = scmp.ne.s32.totalorder %s152, %s154
    %p158 = scmp.eq.s32.totalorder %s13, 0
    %p159 = por %p157, %p158
    %p160 = scmp.ne.s32.totalorder %s152, %s154
    %p161 = scmp.eq.s32.totalorder %s18, 1
    %p162 = por %p160, %p161
    %p163 = scmp.ne.s32.totalorder %s154, %s155
    %p164 = scmp.eq.s32.totalorder %s18, 0
    %p165 = por %p163, %p164
    %p166 = scmp.ne.s32.totalorder %s154, %s155
    %p167 = scmp.eq.s32.totalorder %s19, 1
    %p168 = por %p166, %p167
    %p170 = scmp.ne.s32.totalorder %s155, %s169
    %p171 = scmp.eq.s32.totalorder %s19, 0
    %p172 = por %p170, %p171
    %s173 = ssub.s32 %s13, %s20
    %p174 = scmp.eq.s32.totalorder %s173, 0
    %s176 = sadd.s32 %s175, 1
    %s177 = scalar_select %p174, %s175, %s176
    %p180 = pneg %p174
    %p181 = scmp.eq.s32.totalorder %s13, 1
    %p182 = por %p180, %p181
    %p183 = scmp.ne.s32.totalorder %s175, %s178
    %p184 = scmp.eq.s32.totalorder %s13, 0
    %p185 = por %p183, %p184
    %p186 = scmp.ne.s32.totalorder %s175, %s178
    %p187 = scmp.eq.s32.totalorder %s18, 1
    %p188 = por %p186, %p187
    %p189 = scmp.ne.s32.totalorder %s178, %s179
    %p190 = scmp.eq.s32.totalorder %s18, 0
    %p191 = por %p189, %p190
    %p192 = scmp.ne.s32.totalorder %s178, %s179
    %p193 = scmp.eq.s32.totalorder %s19, 1
    %p194 = por %p192, %p193
    %p196 = scmp.ne.s32.totalorder %s179, %s195
    %p197 = scmp.eq.s32.totalorder %s19, 0
    %p198 = por %p196, %p197
    %p199 = scmp.le.s32.totalorder 1, %s13
    %p200 = scmp.lt.s32.totalorder %s13, 3
    %p201 = pnand %p199, %p200
    %p202 = pneg %p201
    // Predicated region
    $region9: #{fire_forward.1} parent=5 // pred_check
      _
    $region10: #{fire_forward.1} parent=5 // pred_check_branch
      %204 = sbr.rel (%p201) target = $region12
    $region11: #{fire_forward.1} parent=5 // pred_region
      %s205 = ssub.s32 %s13, 1
      // Predicated region
      $region13: #{fire_forward.1} parent=11 // pred_check
        %p206 = pneg %p60
      $region14: #{fire_forward.1} parent=11 // pred_check_branch
        %208 = sbr.rel (%p206) target = $region16
      $region15: #{fire_forward.1} parent=11 // pred_region
        _
      $region16: #{fire_forward.1} parent=11 // pred_fallthru
        _
      // Predicated region
      $region17: #{fire_forward.1} parent=11 // pred_check
        %p209 = pneg %p81
      $region18: #{fire_forward.1} parent=11 // pred_check_branch
        %211 = sbr.rel (%p209) target = $region20
      $region19: #{fire_forward.1} parent=11 // pred_region
        _
      $region20: #{fire_forward.1} parent=11 // pred_fallthru
        _
      // Predicated region
      $region21: #{fire_forward.1} parent=11 // pred_check
        %p212 = pneg %p102
      $region22: #{fire_forward.1} parent=11 // pred_check_branch
        %214 = sbr.rel (%p212) target = $region24
      $region23: #{fire_forward.1} parent=11 // pred_region
        _
      $region24: #{fire_forward.1} parent=11 // pred_fallthru
        _
      // Predicated region
      $region25: #{fire_forward.1} parent=11 // pred_check
        %p215 = pneg %p123
      $region26: #{fire_forward.1} parent=11 // pred_check_branch
        %217 = sbr.rel (%p215) target = $region28
      $region27: #{fire_forward.1} parent=11 // pred_region
        _
      $region28: #{fire_forward.1} parent=11 // pred_fallthru
        _
      // Predicated region
      $region29: #{fire_forward.1} parent=11 // pred_check
        %p218 = pneg %p144
      $region30: #{fire_forward.1} parent=11 // pred_check_branch
        %220 = sbr.rel (%p218) target = $region32
      $region31: #{fire_forward.1} parent=11 // pred_region
        _
      $region32: #{fire_forward.1} parent=11 // pred_fallthru
        _
      // Predicated region
      $region33: #{fire_forward.1} parent=11 // pred_check
        %p221 = pneg %p165
      $region34: #{fire_forward.1} parent=11 // pred_check_branch
        %223 = sbr.rel (%p221) target = $region36
      $region35: #{fire_forward.1} parent=11 // pred_region
        _
      $region36: #{fire_forward.1} parent=11 // pred_fallthru
        _
    $region12: #{fire_forward.1} parent=5 // pred_fallthru
      _
    %p224 = scmp.lt.s32.totalorder %s13, 2
    // Predicated region
    $region37: #{fire_forward.1} parent=5 // pred_check
      %p225 = pneg %p224
    $region38: #{fire_forward.1} parent=5 // pred_check_branch
      %227 = sbr.rel (%p225) target = $region40
    $region39: #{fire_forward.1} parent=5 // pred_region
      // Predicated region
      $region41: #{fire_forward.1} parent=39 // pred_check
        %p228 = pneg %p33
      $region42: #{fire_forward.1} parent=39 // pred_check_branch
        %230 = sbr.rel (%p228) target = $region44
      $region43: #{fire_forward.1} parent=39 // pred_region
        %p231 = scmp.lt.s32.totalorder %s13, 1
        %s232 = scalar_select %p231, %s13, 1
        %s233 = smul.addr %s232, 32
        %s234 = smul.addr %s233, 4
        %s235 = scalar_lea.vmem %s0, %s234
      $region44: #{fire_forward.1} parent=39 // pred_fallthru
        _
    $region40: #{fire_forward.1} parent=5 // pred_fallthru
      _
    %p236 = scmp.le.s32.totalorder 1, %s13
    %p237 = scmp.lt.s32.totalorder %s13, 3
    %p238 = pnand %p236, %p237
    %p239 = pneg %p238
    // Predicated region
    $region45: #{fire_forward.1} parent=5 // pred_check
      _
    $region46: #{fire_forward.1} parent=5 // pred_check_branch
      %241 = sbr.rel (%p238) target = $region48
    $region47: #{fire_forward.1} parent=5 // pred_region
      %s242 = ssub.s32 %s13, 1
      %p243 = scmp.lt.s32.totalorder %s18, 1
      %s244 = scalar_select %p243, %s18, 1
      %s245 = smul.addr %s244, 32
      %s246 = smul.addr %s245, 4
      %s247 = scalar_lea.vmem %s0, %s246
      %p248 = pneg %p39
      %p249 = pneg %p36
      %p250 = pneg %p60
      %p251 = pneg %p57
      %p252 = pneg %p81
      %p253 = pneg %p78
      %p254 = pneg %p102
      %p255 = pneg %p99
      %p256 = pneg %p123
      %p257 = pneg %p120
      %p258 = pneg %p144
      %p259 = pneg %p141
      %p260 = pneg %p165
      %p261 = pneg %p162
      %p262 = pneg %p191
      %p263 = pneg %p188
      %p264 = scmp.lt.s32.totalorder %s18, 1
      %s265 = scalar_select %p264, %s18, 1
      %s266 = smul.addr %s265, 64
      %s267 = smul.addr %s266, 4
      %s268 = scalar_lea.vmem %s7, %s267
      %p269 = scmp.lt.s32.totalorder %s18, 1
      %s270 = scalar_select %p269, %s18, 1
      %s271 = smul.addr %s270, 32
      %s272 = smul.addr %s271, 4
      %s273 = scalar_lea.vmem %s0, %s272
      %p274 = scmp.lt.s32.totalorder %s18, 1
      %s275 = scalar_select %p274, %s18, 1
      %s276 = smul.addr %s275, 64
      %s277 = smul.addr %s276, 4
      %s278 = scalar_lea.vmem %s7, %s277
      %v280 = vld [vmem:[%s273] sm:$0xf]
      %v281 = vld [vmem:[%s273 + $0x4] sm:$0xf]
      %v282 = vld [vmem:[%s273 + $0x8] sm:$0xf]
      %v283 = vld [vmem:[%s273 + $0xc] sm:$0xf]
      %v284 = vld [vmem:[%s273 + $0x10] sm:$0xf]
      %v285 = vld [vmem:[%s273 + $0x14] sm:$0xf]
      %v286 = vld [vmem:[%s273 + $0x18] sm:$0xf]
      %v287 = vld [vmem:[%s273 + $0x1c] sm:$0xf]
      %v288 = vld [vmem:[%s273 + $0x20] sm:$0xf]
      %v289 = vld [vmem:[%s273 + $0x24] sm:$0xf]
      %v290 = vld [vmem:[%s273 + $0x28] sm:$0xf]
      %v291 = vld [vmem:[%s273 + $0x2c] sm:$0xf]
      %v292 = vld [vmem:[%s273 + $0x30] sm:$0xf]
      %v293 = vld [vmem:[%s273 + $0x34] sm:$0xf]
      %v294 = vld [vmem:[%s273 + $0x38] sm:$0xf]
      %v295 = vld [vmem:[%s273 + $0x3c] sm:$0xf]
      %v296 = vld [vmem:[%s273 + $0x40] sm:$0xf]
      %v297 = vld [vmem:[%s273 + $0x44] sm:$0xf]
      %v298 = vld [vmem:[%s273 + $0x48] sm:$0xf]
      %v299 = vld [vmem:[%s273 + $0x4c] sm:$0xf]
      %v300 = vld [vmem:[%s273 + $0x50] sm:$0xf]
      %v301 = vld [vmem:[%s273 + $0x54] sm:$0xf]
      %v302 = vld [vmem:[%s273 + $0x58] sm:$0xf]
      %v303 = vld [vmem:[%s273 + $0x5c] sm:$0xf]
      %v304 = vld [vmem:[%s273 + $0x60] sm:$0xf]
      %v305 = vld [vmem:[%s273 + $0x64] sm:$0xf]
      %v306 = vld [vmem:[%s273 + $0x68] sm:$0xf]
      %v307 = vld [vmem:[%s273 + $0x6c] sm:$0xf]
      %v308 = vld [vmem:[%s273 + $0x70] sm:$0xf]
      %v309 = vld [vmem:[%s273 + $0x74] sm:$0xf]
      %v310 = vld [vmem:[%s273 + $0x78] sm:$0xf]
      %v311 = vld [vmem:[%s273 + $0x7c] sm:$0xf]
      %v312 = vld [vmem:[%s1] sm:$0xf]
      %v313 = vld [vmem:[%s1 + $0x4] sm:$0xf]
      %v314 = vld [vmem:[%s1 + $0x8] sm:$0xf]
      %v315 = vld [vmem:[%s1 + $0xc] sm:$0xf]
      %v316 = vld [vmem:[%s1 + $0x10] sm:$0xf]
      %v317 = vld [vmem:[%s1 + $0x14] sm:$0xf]
      %v318 = vld [vmem:[%s1 + $0x18] sm:$0xf]
      %v319 = vld [vmem:[%s1 + $0x1c] sm:$0xf]
      %v320 = vld [vmem:[%s1 + $0x20] sm:$0xf]
      %v321 = vld [vmem:[%s1 + $0x24] sm:$0xf]
      %v322 = vld [vmem:[%s1 + $0x28] sm:$0xf]
      %v323 = vld [vmem:[%s1 + $0x2c] sm:$0xf]
      %v324 = vld [vmem:[%s1 + $0x30] sm:$0xf]
      %v325 = vld [vmem:[%s1 + $0x34] sm:$0xf]
      %v326 = vld [vmem:[%s1 + $0x38] sm:$0xf]
      %v327 = vld [vmem:[%s1 + $0x3c] sm:$0xf]
      %v328 = vld [vmem:[%s2] sm:$0x1]
      %v330 = vlaneseq
      %v331 = vshrl.u32 %v330, 7
      %v332 = vsub.s32 0, %v331
      %v333 = vrot.slane %v328, %v332
      %v367 = vunpack.c.l.b16 %v280
      %v368 = vunpack.c.l.b16 %v281
      %v369 = vunpack.c.l.b16 %v282
      %v370 = vunpack.c.l.b16 %v283
      %v371 = vunpack.c.l.b16 %v284
      %v372 = vunpack.c.l.b16 %v285
      %v373 = vunpack.c.l.b16 %v286
      %v374 = vunpack.c.l.b16 %v287
      %v375 = vunpack.c.l.b16 %v288
      %v376 = vunpack.c.l.b16 %v289
      %v377 = vunpack.c.l.b16 %v290
      %v378 = vunpack.c.l.b16 %v291
      %v379 = vunpack.c.l.b16 %v292
      %v380 = vunpack.c.l.b16 %v293
      %v381 = vunpack.c.l.b16 %v294
      %v382 = vunpack.c.l.b16 %v295
      %v383 = vunpack.c.l.b16 %v296
      %v384 = vunpack.c.l.b16 %v297
      %v385 = vunpack.c.l.b16 %v298
      %v386 = vunpack.c.l.b16 %v299
      %v387 = vunpack.c.l.b16 %v300
      %v388 = vunpack.c.l.b16 %v301
      %v389 = vunpack.c.l.b16 %v302
      %v390 = vunpack.c.l.b16 %v303
      %v391 = vunpack.c.l.b16 %v304
      %v392 = vunpack.c.l.b16 %v305
      %v393 = vunpack.c.l.b16 %v306
      %v394 = vunpack.c.l.b16 %v307
      %v395 = vunpack.c.l.b16 %v308
      %v396 = vunpack.c.l.b16 %v309
      %v397 = vunpack.c.l.b16 %v310
      %v398 = vunpack.c.l.b16 %v311
      %v399 = vpack.c.b16 %v368, %v367
      %v400 = vpack.c.b16 %v370, %v369
      %v401 = vpack.c.b16 %v372, %v371
      %v402 = vpack.c.b16 %v374, %v373
      %v403 = vpack.c.b16 %v376, %v375
      %v404 = vpack.c.b16 %v378, %v377
      %v405 = vpack.c.b16 %v380, %v379
      %v406 = vpack.c.b16 %v382, %v381
      %v407 = vpack.c.b16 %v384, %v383
      %v408 = vpack.c.b16 %v386, %v385
      %v409 = vpack.c.b16 %v388, %v387
      %v410 = vpack.c.b16 %v390, %v389
      %v411 = vpack.c.b16 %v392, %v391
      %v412 = vpack.c.b16 %v394, %v393
      %v413 = vpack.c.b16 %v396, %v395
      %v414 = vpack.c.b16 %v398, %v397
      %v447 = vunpack.c.l.b16 %v312
      %v448 = vunpack.c.l.b16 %v313
      %v449 = vunpack.c.l.b16 %v314
      %v450 = vunpack.c.l.b16 %v315
      %v451 = vunpack.c.l.b16 %v316
      %v452 = vunpack.c.l.b16 %v317
      %v453 = vunpack.c.l.b16 %v318
      %v454 = vunpack.c.l.b16 %v319
      %v455 = vunpack.c.l.b16 %v320
      %v456 = vunpack.c.l.b16 %v321
      %v457 = vunpack.c.l.b16 %v322
      %v458 = vunpack.c.l.b16 %v323
      %v459 = vunpack.c.l.b16 %v324
      %v460 = vunpack.c.l.b16 %v325
      %v461 = vunpack.c.l.b16 %v326
      %v462 = vunpack.c.l.b16 %v327
      %v463 = vpack.c.b16 %v448, %v447
      %v464 = vpack.c.b16 %v450, %v449
      %v465 = vpack.c.b16 %v452, %v451
      %v466 = vpack.c.b16 %v454, %v453
      %v467 = vpack.c.b16 %v456, %v455
      %v468 = vpack.c.b16 %v458, %v457
      %v469 = vpack.c.b16 %v460, %v459
      %v470 = vpack.c.b16 %v462, %v461
      %479 = vmatprep.subr.bf16.mxu0 0
      %480 = vmatpush1.bf16.msra.mxu0 %v463
      %481 = vmatprep.subr.bf16.mxu0 0
      %482 = vmatpush1.bf16.msra.mxu0 %v464
      %483 = vmatprep.subr.bf16.mxu0 0
      %484 = vmatpush1.bf16.msra.mxu0 %v465
      %485 = vmatprep.subr.bf16.mxu0 0
      %486 = vmatpush1.bf16.msra.mxu0 %v466
      %487 = vmatprep.subr.bf16.mxu0 0
      %488 = vmatpush1.bf16.msra.mxu0 %v467
      %489 = vmatprep.subr.bf16.mxu0 0
      %490 = vmatpush1.bf16.msra.mxu0 %v468
      %491 = vmatprep.subr.bf16.mxu0 0
      %492 = vmatpush1.bf16.msra.mxu0 %v469
      %493 = vmatprep.subr.bf16.mxu0 0
      %494 = vmatpush1.bf16.msra.mxu0 %v470
      %495 = vmatprep.subr.bf16.mxu0 0
      %496 = vmatpush1.bf16.msra.mxu0 0
      %497 = vmatprep.subr.bf16.mxu0 0
      %498 = vmatpush1.bf16.msra.mxu0 0
      %499 = vmatprep.subr.bf16.mxu0 0
      %500 = vmatpush1.bf16.msra.mxu0 0
      %501 = vmatprep.subr.bf16.mxu0 0
      %502 = vmatpush1.bf16.msra.mxu0 0
      %503 = vmatprep.subr.bf16.mxu0 0
      %504 = vmatpush1.bf16.msra.mxu0 0
      %505 = vmatprep.subr.bf16.mxu0 0
      %506 = vmatpush1.bf16.msra.mxu0 0
      %507 = vmatprep.subr.bf16.mxu0 0
      %508 = vmatpush1.bf16.msra.mxu0 0
      %509 = vmatprep.subr.bf16.mxu0 0
      %510 = vmatpush1.bf16.msra.mxu0 0
      %511 = vmatprep.mubr.bf16.mxu0 0
      %512 = vmatmul.mubr.bf16.gmra.mrb[0].mxu0 %v399
      %v513 = vpop.f32.mrb[0].mxu0
      %v514 = vadd.f32 %v333, %v513
      %v515 = vpop.f32.mrb[0].mxu0
      %v516 = vpop.f32.mrb[0].mxu0
      %v517 = vadd.f32 %v333, %v516
      %v518 = vpop.f32.mrb[0].mxu0
      %519 = vmatprep.mubr.bf16.mxu0 0
      %520 = vmatmul.mubr.bf16.gmra.mrb[0].mxu0 %v400
      %v521 = vpop.f32.mrb[0].mxu0
      %v522 = vadd.f32 %v333, %v521
      %v523 = vpop.f32.mrb[0].mxu0
      %v524 = vpop.f32.mrb[0].mxu0
      %v525 = vadd.f32 %v333, %v524
      %v526 = vpop.f32.mrb[0].mxu0
      %527 = vmatprep.mubr.bf16.mxu0 0
      %528 = vmatmul.mubr.bf16.gmra.mrb[0].mxu0 %v401
      %v529 = vpop.f32.mrb[0].mxu0
      %v530 = vadd.f32 %v333, %v529
      %v531 = vpop.f32.mrb[0].mxu0
      %v532 = vpop.f32.mrb[0].mxu0
      %v533 = vadd.f32 %v333, %v532
      %v534 = vpop.f32.mrb[0].mxu0
      %535 = vmatprep.mubr.bf16.mxu0 0
      %536 = vmatmul.mubr.bf16.gmra.mrb[0].mxu0 %v402
      %v537 = vpop.f32.mrb[0].mxu0
      %v538 = vadd.f32 %v333, %v537
      %v539 = vpop.f32.mrb[0].mxu0
      %v540 = vpop.f32.mrb[0].mxu0
      %v541 = vadd.f32 %v333, %v540
      %v542 = vpop.f32.mrb[0].mxu0
      %543 = vmatprep.mubr.bf16.mxu0 0
      %544 = vmatmul.mubr.bf16.gmra.mrb[0].mxu0 %v403
      %v545 = vpop.f32.mrb[0].mxu0
      %v546 = vadd.f32 %v333, %v545
      %v547 = vpop.f32.mrb[0].mxu0
      %v548 = vpop.f32.mrb[0].mxu0
      %v549 = vadd.f32 %v333, %v548
      %v550 = vpop.f32.mrb[0].mxu0
      %551 = vmatprep.mubr.bf16.mxu0 0
      %552 = vmatmul.mubr.bf16.gmra.mrb[0].mxu0 %v404
      %v553 = vpop.f32.mrb[0].mxu0
      %v554 = vadd.f32 %v333, %v553
      %v555 = vpop.f32.mrb[0].mxu0
      %v556 = vpop.f32.mrb[0].mxu0
      %v557 = vadd.f32 %v333, %v556
      %v558 = vpop.f32.mrb[0].mxu0
      %559 = vmatprep.mubr.bf16.mxu0 0
      %560 = vmatmul.mubr.bf16.gmra.mrb[0].mxu0 %v405
      %v561 = vpop.f32.mrb[0].mxu0
      %v562 = vadd.f32 %v333, %v561
      %v563 = vpop.f32.mrb[0].mxu0
      %v564 = vpop.f32.mrb[0].mxu0
      %v565 = vadd.f32 %v333, %v564
      %v566 = vpop.f32.mrb[0].mxu0
      %567 = vmatprep.mubr.bf16.mxu0 0
      %568 = vmatmul.mubr.bf16.gmra.mrb[0].mxu0 %v406
      %v569 = vpop.f32.mrb[0].mxu0
      %v570 = vadd.f32 %v333, %v569
      %v571 = vpop.f32.mrb[0].mxu0
      %v572 = vpop.f32.mrb[0].mxu0
      %v573 = vadd.f32 %v333, %v572
      %v574 = vpop.f32.mrb[0].mxu0
      %575 = vmatprep.mubr.bf16.mxu0 0
      %576 = vmatmul.mubr.bf16.gmra.mrb[0].mxu0 %v407
      %v577 = vpop.f32.mrb[0].mxu0
      %v578 = vadd.f32 %v333, %v577
      %v579 = vpop.f32.mrb[0].mxu0
      %v580 = vpop.f32.mrb[0].mxu0
      %v581 = vadd.f32 %v333, %v580
      %v582 = vpop.f32.mrb[0].mxu0
      %583 = vmatprep.mubr.bf16.mxu0 0
      %584 = vmatmul.mubr.bf16.gmra.mrb[0].mxu0 %v408
      %v585 = vpop.f32.mrb[0].mxu0
      %v586 = vadd.f32 %v333, %v585
      %v587 = vpop.f32.mrb[0].mxu0
      %v588 = vpop.f32.mrb[0].mxu0
      %v589 = vadd.f32 %v333, %v588
      %v590 = vpop.f32.mrb[0].mxu0
      %591 = vmatprep.mubr.bf16.mxu0 0
      %592 = vmatmul.mubr.bf16.gmra.mrb[0].mxu0 %v409
      %v593 = vpop.f32.mrb[0].mxu0
      %v594 = vadd.f32 %v333, %v593
      %v595 = vpop.f32.mrb[0].mxu0
      %v596 = vpop.f32.mrb[0].mxu0
      %v597 = vadd.f32 %v333, %v596
      %v598 = vpop.f32.mrb[0].mxu0
      %599 = vmatprep.mubr.bf16.mxu0 0
      %600 = vmatmul.mubr.bf16.gmra.mrb[0].mxu0 %v410
      %v601 = vpop.f32.mrb[0].mxu0
      %v602 = vadd.f32 %v333, %v601
      %v603 = vpop.f32.mrb[0].mxu0
      %v604 = vpop.f32.mrb[0].mxu0
      %v605 = vadd.f32 %v333, %v604
      %v606 = vpop.f32.mrb[0].mxu0
      %607 = vmatprep.mubr.bf16.mxu0 0
      %608 = vmatmul.mubr.bf16.gmra.mrb[0].mxu0 %v411
      %v609 = vpop.f32.mrb[0].mxu0
      %v610 = vadd.f32 %v333, %v609
      %v611 = vpop.f32.mrb[0].mxu0
      %v612 = vpop.f32.mrb[0].mxu0
      %v613 = vadd.f32 %v333, %v612
      %v614 = vpop.f32.mrb[0].mxu0
      %615 = vmatprep.mubr.bf16.mxu0 0
      %616 = vmatmul.mubr.bf16.gmra.mrb[0].mxu0 %v412
      %v617 = vpop.f32.mrb[0].mxu0
      %v618 = vadd.f32 %v333, %v617
      %v619 = vpop.f32.mrb[0].mxu0
      %v620 = vpop.f32.mrb[0].mxu0
      %v621 = vadd.f32 %v333, %v620
      %v622 = vpop.f32.mrb[0].mxu0
      %623 = vmatprep.mubr.bf16.mxu0 0
      %624 = vmatmul.mubr.bf16.gmra.mrb[0].mxu0 %v413
      %v625 = vpop.f32.mrb[0].mxu0
      %v626 = vadd.f32 %v333, %v625
      %v627 = vpop.f32.mrb[0].mxu0
      %v628 = vpop.f32.mrb[0].mxu0
      %v629 = vadd.f32 %v333, %v628
      %v630 = vpop.f32.mrb[0].mxu0
      %631 = vmatprep.mubr.bf16.mxu0 0
      %632 = vmatmul.mubr.bf16.gmra.mrb[0].mxu0 %v414
      %v633 = vpop.f32.mrb[0].mxu0
      %v634 = vadd.f32 %v333, %v633
      %v635 = vpop.f32.mrb[0].mxu0
      %v636 = vpop.f32.mrb[0].mxu0
      %v637 = vadd.f32 %v333, %v636
      %v638 = vpop.f32.mrb[0].mxu0
      %639 = vdwg.mxu0
      %v640 = vmax.f32 %v514, 0.0
      %v641 = vmax.f32 %v517, 0.0
      %v642 = vmax.f32 %v522, 0.0
      %v643 = vmax.f32 %v525, 0.0
      %v644 = vmax.f32 %v530, 0.0
      %v645 = vmax.f32 %v533, 0.0
      %v646 = vmax.f32 %v538, 0.0
      %v647 = vmax.f32 %v541, 0.0
      %v648 = vmax.f32 %v546, 0.0
      %v649 = vmax.f32 %v549, 0.0
      %v650 = vmax.f32 %v554, 0.0
      %v651 = vmax.f32 %v557, 0.0
      %v652 = vmax.f32 %v562, 0.0
      %v653 = vmax.f32 %v565, 0.0
      %v654 = vmax.f32 %v570, 0.0
      %v655 = vmax.f32 %v573, 0.0
      %v656 = vmax.f32 %v578, 0.0
      %v657 = vmax.f32 %v581, 0.0
      %v658 = vmax.f32 %v586, 0.0
      %v659 = vmax.f32 %v589, 0.0
      %v660 = vmax.f32 %v594, 0.0
      %v661 = vmax.f32 %v597, 0.0
      %v662 = vmax.f32 %v602, 0.0
      %v663 = vmax.f32 %v605, 0.0
      %v664 = vmax.f32 %v610, 0.0
      %v665 = vmax.f32 %v613, 0.0
      %v666 = vmax.f32 %v618, 0.0
      %v667 = vmax.f32 %v621, 0.0
      %v668 = vmax.f32 %v626, 0.0
      %v669 = vmax.f32 %v629, 0.0
      %v670 = vmax.f32 %v634, 0.0
      %v671 = vmax.f32 %v637, 0.0
      %v672 = vpack.c.bf16 %v641, %v640
      %v673 = vpack.c.bf16 %v643, %v642
      %v674 = vpack.c.bf16 %v645, %v644
      %v675 = vpack.c.bf16 %v647, %v646
      %v676 = vpack.c.bf16 %v649, %v648
      %v677 = vpack.c.bf16 %v651, %v650
      %v678 = vpack.c.bf16 %v653, %v652
      %v679 = vpack.c.bf16 %v655, %v654
      %v680 = vpack.c.bf16 %v657, %v656
      %v681 = vpack.c.bf16 %v659, %v658
      %v682 = vpack.c.bf16 %v661, %v660
      %v683 = vpack.c.bf16 %v663, %v662
      %v684 = vpack.c.bf16 %v665, %v664
      %v685 = vpack.c.bf16 %v667, %v666
      %v686 = vpack.c.bf16 %v669, %v668
      %v687 = vpack.c.bf16 %v671, %v670
      %v688 = vld [vmem:[%s3] sm:$0xf]
      %v689 = vld [vmem:[%s3 + $0x4] sm:$0xf]
      %v690 = vld [vmem:[%s3 + $0x8] sm:$0xf]
      %v691 = vld [vmem:[%s3 + $0xc] sm:$0xf]
      %v692 = vld [vmem:[%s3 + $0x10] sm:$0xf]
      %v693 = vld [vmem:[%s3 + $0x14] sm:$0xf]
      %v694 = vld [vmem:[%s3 + $0x18] sm:$0xf]
      %v695 = vld [vmem:[%s3 + $0x1c] sm:$0xf]
      %v696 = vld [vmem:[%s3 + $0x20] sm:$0xf]
      %v697 = vld [vmem:[%s3 + $0x24] sm:$0xf]
      %v698 = vld [vmem:[%s3 + $0x28] sm:$0xf]
      %v699 = vld [vmem:[%s3 + $0x2c] sm:$0xf]
      %v700 = vld [vmem:[%s3 + $0x30] sm:$0xf]
      %v701 = vld [vmem:[%s3 + $0x34] sm:$0xf]
      %v702 = vld [vmem:[%s3 + $0x38] sm:$0xf]
      %v703 = vld [vmem:[%s3 + $0x3c] sm:$0xf]
      %v704 = vld [vmem:[%s4] sm:$0x1]
      %v706 = vlaneseq
      %v707 = vshrl.u32 %v706, 7
      %v708 = vsub.s32 0, %v707
      %v709 = vrot.slane %v704, %v708
      %v727 = vunpack.c.l.b16 %v688
      %v728 = vunpack.c.l.b16 %v689
      %v729 = vunpack.c.l.b16 %v690
      %v730 = vunpack.c.l.b16 %v691
      %v731 = vunpack.c.l.b16 %v692
      %v732 = vunpack.c.l.b16 %v693
      %v733 = vunpack.c.l.b16 %v694
      %v734 = vunpack.c.l.b16 %v695
      %v735 = vunpack.c.l.b16 %v696
      %v736 = vunpack.c.l.b16 %v697
      %v737 = vunpack.c.l.b16 %v698
      %v738 = vunpack.c.l.b16 %v699
      %v739 = vunpack.c.l.b16 %v700
      %v740 = vunpack.c.l.b16 %v701
      %v741 = vunpack.c.l.b16 %v702
      %v742 = vunpack.c.l.b16 %v703
      %v743 = vpack.c.b16 %v728, %v727
      %v744 = vpack.c.b16 %v730, %v729
      %v745 = vpack.c.b16 %v732, %v731
      %v746 = vpack.c.b16 %v734, %v733
      %v747 = vpack.c.b16 %v736, %v735
      %v748 = vpack.c.b16 %v738, %v737
      %v749 = vpack.c.b16 %v740, %v739
      %v750 = vpack.c.b16 %v742, %v741
      %759 = vmatprep.subr.bf16.mxu0 0
      %760 = vmatpush1.bf16.msra.mxu0 %v743
      %761 = vmatprep.subr.bf16.mxu0 0
      %762 = vmatpush1.bf16.msra.mxu0 %v744
      %763 = vmatprep.subr.bf16.mxu0 0
      %764 = vmatpush1.bf16.msra.mxu0 %v745
      %765 = vmatprep.subr.bf16.mxu0 0
      %766 = vmatpush1.bf16.msra.mxu0 %v746
      %767 = vmatprep.subr.bf16.mxu0 0
      %768 = vmatpush1.bf16.msra.mxu0 %v747
      %769 = vmatprep.subr.bf16.mxu0 0
      %770 = vmatpush1.bf16.msra.mxu0 %v748
      %771 = vmatprep.subr.bf16.mxu0 0
      %772 = vmatpush1.bf16.msra.mxu0 %v749
      %773 = vmatprep.subr.bf16.mxu0 0
      %774 = vmatpush1.bf16.msra.mxu0 %v750
      %775 = vmatprep.subr.bf16.mxu0 0
      %776 = vmatpush1.bf16.msra.mxu0 0
      %777 = vmatprep.subr.bf16.mxu0 0
      %778 = vmatpush1.bf16.msra.mxu0 0
      %779 = vmatprep.subr.bf16.mxu0 0
      %780 = vmatpush1.bf16.msra.mxu0 0
      %781 = vmatprep.subr.bf16.mxu0 0
      %782 = vmatpush1.bf16.msra.mxu0 0
      %783 = vmatprep.subr.bf16.mxu0 0
      %784 = vmatpush1.bf16.msra.mxu0 0
      %785 = vmatprep.subr.bf16.mxu0 0
      %786 = vmatpush1.bf16.msra.mxu0 0
      %787 = vmatprep.subr.bf16.mxu0 0
      %788 = vmatpush1.bf16.msra.mxu0 0
      %789 = vmatprep.subr.bf16.mxu0 0
      %790 = vmatpush1.bf16.msra.mxu0 0
      %791 = vmatprep.mubr.bf16.mxu0 0
      %792 = vmatmul.mubr.bf16.gmra.mrb[0].mxu0 %v672
      %v793 = vpop.f32.mrb[0].mxu0
      %v794 = vadd.f32 %v709, %v793
      %v795 = vpop.f32.mrb[0].mxu0
      %v796 = vpop.f32.mrb[0].mxu0
      %v797 = vadd.f32 %v709, %v796
      %v798 = vpop.f32.mrb[0].mxu0
      %799 = vmatprep.mubr.bf16.mxu0 0
      %800 = vmatmul.mubr.bf16.gmra.mrb[0].mxu0 %v673
      %v801 = vpop.f32.mrb[0].mxu0
      %v802 = vadd.f32 %v709, %v801
      %v803 = vpop.f32.mrb[0].mxu0
      %v804 = vpop.f32.mrb[0].mxu0
      %v805 = vadd.f32 %v709, %v804
      %v806 = vpop.f32.mrb[0].mxu0
      %807 = vmatprep.mubr.bf16.mxu0 0
      %808 = vmatmul.mubr.bf16.gmra.mrb[0].mxu0 %v674
      %v809 = vpop.f32.mrb[0].mxu0
      %v810 = vadd.f32 %v709, %v809
      %v811 = vpop.f32.mrb[0].mxu0
      %v812 = vpop.f32.mrb[0].mxu0
      %v813 = vadd.f32 %v709, %v812
      %v814 = vpop.f32.mrb[0].mxu0
      %815 = vmatprep.mubr.bf16.mxu0 0
      %816 = vmatmul.mubr.bf16.gmra.mrb[0].mxu0 %v675
      %v817 = vpop.f32.mrb[0].mxu0
      %v818 = vadd.f32 %v709, %v817
      %v819 = vpop.f32.mrb[0].mxu0
      %v820 = vpop.f32.mrb[0].mxu0
      %v821 = vadd.f32 %v709, %v820
      %v822 = vpop.f32.mrb[0].mxu0
      %823 = vmatprep.mubr.bf16.mxu0 0
      %824 = vmatmul.mubr.bf16.gmra.mrb[0].mxu0 %v676
      %v825 = vpop.f32.mrb[0].mxu0
      %v826 = vadd.f32 %v709, %v825
      %v827 = vpop.f32.mrb[0].mxu0
      %v828 = vpop.f32.mrb[0].mxu0
      %v829 = vadd.f32 %v709, %v828
      %v830 = vpop.f32.mrb[0].mxu0
      %831 = vmatprep.mubr.bf16.mxu0 0
      %832 = vmatmul.mubr.bf16.gmra.mrb[0].mxu0 %v677
      %v833 = vpop.f32.mrb[0].mxu0
      %v834 = vadd.f32 %v709, %v833
      %v835 = vpop.f32.mrb[0].mxu0
      %v836 = vpop.f32.mrb[0].mxu0
      %v837 = vadd.f32 %v709, %v836
      %v838 = vpop.f32.mrb[0].mxu0
      %839 = vmatprep.mubr.bf16.mxu0 0
      %840 = vmatmul.mubr.bf16.gmra.mrb[0].mxu0 %v678
      %v841 = vpop.f32.mrb[0].mxu0
      %v842 = vadd.f32 %v709, %v841
      %v843 = vpop.f32.mrb[0].mxu0
      %v844 = vpop.f32.mrb[0].mxu0
      %v845 = vadd.f32 %v709, %v844
      %v846 = vpop.f32.mrb[0].mxu0
      %847 = vmatprep.mubr.bf16.mxu0 0
      %848 = vmatmul.mubr.bf16.gmra.mrb[0].mxu0 %v679
      %v849 = vpop.f32.mrb[0].mxu0
      %v850 = vadd.f32 %v709, %v849
      %v851 = vpop.f32.mrb[0].mxu0
      %v852 = vpop.f32.mrb[0].mxu0
      %v853 = vadd.f32 %v709, %v852
      %v854 = vpop.f32.mrb[0].mxu0
      %855 = vmatprep.mubr.bf16.mxu0 0
      %856 = vmatmul.mubr.bf16.gmra.mrb[0].mxu0 %v680
      %v857 = vpop.f32.mrb[0].mxu0
      %v858 = vadd.f32 %v709, %v857
      %v859 = vpop.f32.mrb[0].mxu0
      %v860 = vpop.f32.mrb[0].mxu0
      %v861 = vadd.f32 %v709, %v860
      %v862 = vpop.f32.mrb[0].mxu0
      %863 = vmatprep.mubr.bf16.mxu0 0
      %864 = vmatmul.mubr.bf16.gmra.mrb[0].mxu0 %v681
      %v865 = vpop.f32.mrb[0].mxu0
      %v866 = vadd.f32 %v709, %v865
      %v867 = vpop.f32.mrb[0].mxu0
      %v868 = vpop.f32.mrb[0].mxu0
      %v869 = vadd.f32 %v709, %v868
      %v870 = vpop.f32.mrb[0].mxu0
      %871 = vmatprep.mubr.bf16.mxu0 0
      %872 = vmatmul.mubr.bf16.gmra.mrb[0].mxu0 %v682
      %v873 = vpop.f32.mrb[0].mxu0
      %v874 = vadd.f32 %v709, %v873
      %v875 = vpop.f32.mrb[0].mxu0
      %v876 = vpop.f32.mrb[0].mxu0
      %v877 = vadd.f32 %v709, %v876
      %v878 = vpop.f32.mrb[0].mxu0
      %879 = vmatprep.mubr.bf16.mxu0 0
      %880 = vmatmul.mubr.bf16.gmra.mrb[0].mxu0 %v683
      %v881 = vpop.f32.mrb[0].mxu0
      %v882 = vadd.f32 %v709, %v881
      %v883 = vpop.f32.mrb[0].mxu0
      %v884 = vpop.f32.mrb[0].mxu0
      %v885 = vadd.f32 %v709, %v884
      %v886 = vpop.f32.mrb[0].mxu0
      %887 = vmatprep.mubr.bf16.mxu0 0
      %888 = vmatmul.mubr.bf16.gmra.mrb[0].mxu0 %v684
      %v889 = vpop.f32.mrb[0].mxu0
      %v890 = vadd.f32 %v709, %v889
      %v891 = vpop.f32.mrb[0].mxu0
      %v892 = vpop.f32.mrb[0].mxu0
      %v893 = vadd.f32 %v709, %v892
      %v894 = vpop.f32.mrb[0].mxu0
      %895 = vmatprep.mubr.bf16.mxu0 0
      %896 = vmatmul.mubr.bf16.gmra.mrb[0].mxu0 %v685
      %v897 = vpop.f32.mrb[0].mxu0
      %v898 = vadd.f32 %v709, %v897
      %v899 = vpop.f32.mrb[0].mxu0
      %v900 = vpop.f32.mrb[0].mxu0
      %v901 = vadd.f32 %v709, %v900
      %v902 = vpop.f32.mrb[0].mxu0
      %903 = vmatprep.mubr.bf16.mxu0 0
      %904 = vmatmul.mubr.bf16.gmra.mrb[0].mxu0 %v686
      %v905 = vpop.f32.mrb[0].mxu0
      %v906 = vadd.f32 %v709, %v905
      %v907 = vpop.f32.mrb[0].mxu0
      %v908 = vpop.f32.mrb[0].mxu0
      %v909 = vadd.f32 %v709, %v908
      %v910 = vpop.f32.mrb[0].mxu0
      %911 = vmatprep.mubr.bf16.mxu0 0
      %912 = vmatmul.mubr.bf16.gmra.mrb[0].mxu0 %v687
      %v913 = vpop.f32.mrb[0].mxu0
      %v914 = vadd.f32 %v709, %v913
      %v915 = vpop.f32.mrb[0].mxu0
      %v916 = vpop.f32.mrb[0].mxu0
      %v917 = vadd.f32 %v709, %v916
      %v918 = vpop.f32.mrb[0].mxu0
      %919 = vdwg.mxu0
      %v920 = vpack.c.bf16 %v797, %v794
      %v921 = vpack.c.bf16 %v805, %v802
      %v922 = vpack.c.bf16 %v813, %v810
      %v923 = vpack.c.bf16 %v821, %v818
      %v924 = vpack.c.bf16 %v829, %v826
      %v925 = vpack.c.bf16 %v837, %v834
      %v926 = vpack.c.bf16 %v845, %v842
      %v927 = vpack.c.bf16 %v853, %v850
      %v928 = vpack.c.bf16 %v861, %v858
      %v929 = vpack.c.bf16 %v869, %v866
      %v930 = vpack.c.bf16 %v877, %v874
      %v931 = vpack.c.bf16 %v885, %v882
      %v932 = vpack.c.bf16 %v893, %v890
      %v933 = vpack.c.bf16 %v901, %v898
      %v934 = vpack.c.bf16 %v909, %v906
      %v935 = vpack.c.bf16 %v917, %v914
      %v952 = vunpack.c.l.b16 %v920
      %v953 = vunpack.c.h.b16 %v920
      %v954 = vunpack.c.l.b16 %v921
      %v955 = vunpack.c.h.b16 %v921
      %v956 = vunpack.c.l.b16 %v922
      %v957 = vunpack.c.h.b16 %v922
      %v958 = vunpack.c.l.b16 %v923
      %v959 = vunpack.c.h.b16 %v923
      %v960 = vunpack.c.l.b16 %v924
      %v961 = vunpack.c.h.b16 %v924
      %v962 = vunpack.c.l.b16 %v925
      %v963 = vunpack.c.h.b16 %v925
      %v964 = vunpack.c.l.b16 %v926
      %v965 = vunpack.c.h.b16 %v926
      %v966 = vunpack.c.l.b16 %v927
      %v967 = vunpack.c.h.b16 %v927
      %v968 = vunpack.c.l.b16 %v928
      %v969 = vunpack.c.h.b16 %v928
      %v970 = vunpack.c.l.b16 %v929
      %v971 = vunpack.c.h.b16 %v929
      %v972 = vunpack.c.l.b16 %v930
      %v973 = vunpack.c.h.b16 %v930
      %v974 = vunpack.c.l.b16 %v931
      %v975 = vunpack.c.h.b16 %v931
      %v976 = vunpack.c.l.b16 %v932
      %v977 = vunpack.c.h.b16 %v932
      %v978 = vunpack.c.l.b16 %v933
      %v979 = vunpack.c.h.b16 %v933
      %v980 = vunpack.c.l.b16 %v934
      %v981 = vunpack.c.h.b16 %v934
      %v982 = vunpack.c.l.b16 %v935
      %v983 = vunpack.c.h.b16 %v935
      %v984 = vpack.c.b16 %v952, %v952
      %v985 = vpack.c.b16 %v953, %v953
      %v986 = vpack.c.b16 %v954, %v954
      %v987 = vpack.c.b16 %v955, %v955
      %v988 = vpack.c.b16 %v956, %v956
      %v989 = vpack.c.b16 %v957, %v957
      %v990 = vpack.c.b16 %v958, %v958
      %v991 = vpack.c.b16 %v959, %v959
      %v992 = vpack.c.b16 %v960, %v960
      %v993 = vpack.c.b16 %v961, %v961
      %v994 = vpack.c.b16 %v962, %v962
      %v995 = vpack.c.b16 %v963, %v963
      %v996 = vpack.c.b16 %v964, %v964
      %v997 = vpack.c.b16 %v965, %v965
      %v998 = vpack.c.b16 %v966, %v966
      %v999 = vpack.c.b16 %v967, %v967
      %v1000 = vpack.c.b16 %v968, %v968
      %v1001 = vpack.c.b16 %v969, %v969
      %v1002 = vpack.c.b16 %v970, %v970
      %v1003 = vpack.c.b16 %v971, %v971
      %v1004 = vpack.c.b16 %v972, %v972
      %v1005 = vpack.c.b16 %v973, %v973
      %v1006 = vpack.c.b16 %v974, %v974
      %v1007 = vpack.c.b16 %v975, %v975
      %v1008 = vpack.c.b16 %v976, %v976
      %v1009 = vpack.c.b16 %v977, %v977
      %v1010 = vpack.c.b16 %v978, %v978
      %v1011 = vpack.c.b16 %v979, %v979
      %v1012 = vpack.c.b16 %v980, %v980
      %v1013 = vpack.c.b16 %v981, %v981
      %v1014 = vpack.c.b16 %v982, %v982
      %v1015 = vpack.c.b16 %v983, %v983
      %1048 = vst [vmem:[%s278] sm:$0xf] %v984
      %1049 = vst [vmem:[%s278 + $0x8] sm:$0xf] %v985
      %1050 = vst [vmem:[%s278 + $0x10] sm:$0xf] %v986
      %1051 = vst [vmem:[%s278 + $0x18] sm:$0xf] %v987
      %1052 = vst [vmem:[%s278 + $0x20] sm:$0xf] %v988
      %1053 = vst [vmem:[%s278 + $0x28] sm:$0xf] %v989
      %1054 = vst [vmem:[%s278 + $0x30] sm:$0xf] %v990
      %1055 = vst [vmem:[%s278 + $0x38] sm:$0xf] %v991
      %1056 = vst [vmem:[%s278 + $0x40] sm:$0xf] %v992
      %1057 = vst [vmem:[%s278 + $0x48] sm:$0xf] %v993
      %1058 = vst [vmem:[%s278 + $0x50] sm:$0xf] %v994
      %1059 = vst [vmem:[%s278 + $0x58] sm:$0xf] %v995
      %1060 = vst [vmem:[%s278 + $0x60] sm:$0xf] %v996
      %1061 = vst [vmem:[%s278 + $0x68] sm:$0xf] %v997
      %1062 = vst [vmem:[%s278 + $0x70] sm:$0xf] %v998
      %1063 = vst [vmem:[%s278 + $0x78] sm:$0xf] %v999
      %1064 = vst [vmem:[%s278 + $0x80] sm:$0xf] %v1000
      %1065 = vst [vmem:[%s278 + $0x88] sm:$0xf] %v1001
      %1066 = vst [vmem:[%s278 + $0x90] sm:$0xf] %v1002
      %1067 = vst [vmem:[%s278 + $0x98] sm:$0xf] %v1003
      %1068 = vst [vmem:[%s278 + $0xa0] sm:$0xf] %v1004
      %1069 = vst [vmem:[%s278 + $0xa8] sm:$0xf] %v1005
      %1070 = vst [vmem:[%s278 + $0xb0] sm:$0xf] %v1006
      %1071 = vst [vmem:[%s278 + $0xb8] sm:$0xf] %v1007
      %1072 = vst [vmem:[%s278 + $0xc0] sm:$0xf] %v1008
      %1073 = vst [vmem:[%s278 + $0xc8] sm:$0xf] %v1009
      %1074 = vst [vmem:[%s278 + $0xd0] sm:$0xf] %v1010
      %1075 = vst [vmem:[%s278 + $0xd8] sm:$0xf] %v1011
      %1076 = vst [vmem:[%s278 + $0xe0] sm:$0xf] %v1012
      %1077 = vst [vmem:[%s278 + $0xe8] sm:$0xf] %v1013
      %1078 = vst [vmem:[%s278 + $0xf0] sm:$0xf] %v1014
      %1079 = vst [vmem:[%s278 + $0xf8] sm:$0xf] %v1015
      %1080 = vst [vmem:[#allocation2] sm:$0xf] 0
      %1081 = vst [vmem:[#allocation2 + $0x4] sm:$0xf] 0
      %1082 = vst [vmem:[#allocation2 + $0x8] sm:$0x1] 0
      %s1083 = scalar_lea.vmem [#allocation2], 204
      %1084 = vst [vmem:[%s1083] sm:$0xf] 0
      %1085 = vst [vmem:[%s1083 + $0x4] sm:$0xf] 0
      %1086 = vst [vmem:[%s1083 + $0x8] sm:$0x1] 0
      %vm1087 = vcmask 1040384
      %vm1088 = vsmask.f32 256
      %vm1089 = vmand %vm1087, %vm1088
      %v1090 = vld [vmem:[#allocation2] sm:$0x1]
      %v1091 = vsel %vm1089, 0, %v1090
      %1092 = vst [vmem:[#allocation2] sm:$0x1] %v1091
      %v1093 = vld [vmem:[#allocation2 + $0xc] sm:$0x1]
      %v1094 = vsel %vm1089, 0, %v1093
      %1095 = vst [vmem:[#allocation2 + $0xc] sm:$0x1] %v1094
      %v1096 = vld [vmem:[#allocation2 + $0x18] sm:$0x1]
      %v1097 = vsel %vm1089, 0, %v1096
      %1098 = vst [vmem:[#allocation2 + $0x18] sm:$0x1] %v1097
      %v1099 = vld [vmem:[#allocation2 + $0x24] sm:$0x1]
      %v1100 = vsel %vm1089, 0, %v1099
      %1101 = vst [vmem:[#allocation2 + $0x24] sm:$0x1] %v1100
      %v1102 = vld [vmem:[#allocation2 + $0x30] sm:$0x1]
      %v1103 = vsel %vm1089, 0, %v1102
      %1104 = vst [vmem:[#allocation2 + $0x30] sm:$0x1] %v1103
      %v1105 = vld [vmem:[#allocation2 + $0x3c] sm:$0x1]
      %v1106 = vsel %vm1089, 0, %v1105
      %1107 = vst [vmem:[#allocation2 + $0x3c] sm:$0x1] %v1106
      %v1108 = vld [vmem:[#allocation2 + $0x48] sm:$0x1]
      %v1109 = vsel %vm1089, 0, %v1108
      %1110 = vst [vmem:[#allocation2 + $0x48] sm:$0x1] %v1109
      %v1111 = vld [vmem:[#allocation2 + $0x54] sm:$0x1]
      %v1112 = vsel %vm1089, 0, %v1111
      %1113 = vst [vmem:[#allocation2 + $0x54] sm:$0x1] %v1112
      %v1114 = vld [vmem:[#allocation2 + $0x60] sm:$0x1]
      %v1115 = vsel %vm1089, 0, %v1114
      %1116 = vst [vmem:[#allocation2 + $0x60] sm:$0x1] %v1115
      %v1117 = vld [vmem:[#allocation2 + $0x6c] sm:$0x1]
      %v1118 = vsel %vm1089, 0, %v1117
      %1119 = vst [vmem:[#allocation2 + $0x6c] sm:$0x1] %v1118
      %v1120 = vld [vmem:[#allocation2 + $0x78] sm:$0x1]
      %v1121 = vsel %vm1089, 0, %v1120
      %1122 = vst [vmem:[#allocation2 + $0x78] sm:$0x1] %v1121
      %v1123 = vld [vmem:[#allocation2 + $0x84] sm:$0x1]
      %v1124 = vsel %vm1089, 0, %v1123
      %1125 = vst [vmem:[#allocation2 + $0x84] sm:$0x1] %v1124
      %v1126 = vld [vmem:[#allocation2 + $0x90] sm:$0x1]
      %v1127 = vsel %vm1089, 0, %v1126
      %1128 = vst [vmem:[#allocation2 + $0x90] sm:$0x1] %v1127
      %v1129 = vld [vmem:[#allocation2 + $0x9c] sm:$0x1]
      %v1130 = vsel %vm1089, 0, %v1129
      %1131 = vst [vmem:[#allocation2 + $0x9c] sm:$0x1] %v1130
      %v1132 = vld [vmem:[#allocation2 + $0xa8] sm:$0x1]
      %v1133 = vsel %vm1089, 0, %v1132
      %1134 = vst [vmem:[#allocation2 + $0xa8] sm:$0x1] %v1133
      %v1135 = vld [vmem:[#allocation2 + $0xb4] sm:$0x1]
      %v1136 = vsel %vm1089, 0, %v1135
      %1137 = vst [vmem:[#allocation2 + $0xb4] sm:$0x1] %v1136
      %v1138 = vld [vmem:[#allocation2 + $0xc0] sm:$0x1]
      %v1139 = vsel %vm1089, 0, %v1138
      %1140 = vst [vmem:[#allocation2 + $0xc0] sm:$0x1] %v1139
      %v1141 = vld [vmem:[#allocation2 + $0xcc] sm:$0x1]
      %v1142 = vsel %vm1089, 0, %v1141
      %1143 = vst [vmem:[#allocation2 + $0xcc] sm:$0x1] %v1142
      %vm1144 = vsmask.f32 7938
      %vm1145 = vmand %vm1087, %vm1144
      %v1146 = vld [vmem:[#allocation2 + $0x8] sm:$0x1]
      %v1147 = vsel %vm1145, 0, %v1146
      %1148 = vst [vmem:[#allocation2 + $0x8] sm:$0x1] %v1147
      %v1149 = vld [vmem:[#allocation2 + $0x14] sm:$0x1]
      %v1150 = vsel %vm1145, 0, %v1149
      %1151 = vst [vmem:[#allocation2 + $0x14] sm:$0x1] %v1150
      %v1152 = vld [vmem:[#allocation2 + $0x20] sm:$0x1]
      %v1153 = vsel %vm1145, 0, %v1152
      %1154 = vst [vmem:[#allocation2 + $0x20] sm:$0x1] %v1153
      %v1155 = vld [vmem:[#allocation2 + $0x2c] sm:$0x1]
      %v1156 = vsel %vm1145, 0, %v1155
      %1157 = vst [vmem:[#allocation2 + $0x2c] sm:$0x1] %v1156
      %v1158 = vld [vmem:[#allocation2 + $0x38] sm:$0x1]
      %v1159 = vsel %vm1145, 0, %v1158
      %1160 = vst [vmem:[#allocation2 + $0x38] sm:$0x1] %v1159
      %v1161 = vld [vmem:[#allocation2 + $0x44] sm:$0x1]
      %v1162 = vsel %vm1145, 0, %v1161
      %1163 = vst [vmem:[#allocation2 + $0x44] sm:$0x1] %v1162
      %v1164 = vld [vmem:[#allocation2 + $0x50] sm:$0x1]
      %v1165 = vsel %vm1145, 0, %v1164
      %1166 = vst [vmem:[#allocation2 + $0x50] sm:$0x1] %v1165
      %v1167 = vld [vmem:[#allocation2 + $0x5c] sm:$0x1]
      %v1168 = vsel %vm1145, 0, %v1167
      %1169 = vst [vmem:[#allocation2 + $0x5c] sm:$0x1] %v1168
      %v1170 = vld [vmem:[#allocation2 + $0x68] sm:$0x1]
      %v1171 = vsel %vm1145, 0, %v1170
      %1172 = vst [vmem:[#allocation2 + $0x68] sm:$0x1] %v1171
      %v1173 = vld [vmem:[#allocation2 + $0x74] sm:$0x1]
      %v1174 = vsel %vm1145, 0, %v1173
      %1175 = vst [vmem:[#allocation2 + $0x74] sm:$0x1] %v1174
      %v1176 = vld [vmem:[#allocation2 + $0x80] sm:$0x1]
      %v1177 = vsel %vm1145, 0, %v1176
      %1178 = vst [vmem:[#allocation2 + $0x80] sm:$0x1] %v1177
      %v1179 = vld [vmem:[#allocation2 + $0x8c] sm:$0x1]
      %v1180 = vsel %vm1145, 0, %v1179
      %1181 = vst [vmem:[#allocation2 + $0x8c] sm:$0x1] %v1180
      %v1182 = vld [vmem:[#allocation2 + $0x98] sm:$0x1]
      %v1183 = vsel %vm1145, 0, %v1182
      %1184 = vst [vmem:[#allocation2 + $0x98] sm:$0x1] %v1183
      %v1185 = vld [vmem:[#allocation2 + $0xa4] sm:$0x1]
      %v1186 = vsel %vm1145, 0, %v1185
      %1187 = vst [vmem:[#allocation2 + $0xa4] sm:$0x1] %v1186
      %v1188 = vld [vmem:[#allocation2 + $0xb0] sm:$0x1]
      %v1189 = vsel %vm1145, 0, %v1188
      %1190 = vst [vmem:[#allocation2 + $0xb0] sm:$0x1] %v1189
      %v1191 = vld [vmem:[#allocation2 + $0xbc] sm:$0x1]
      %v1192 = vsel %vm1145, 0, %v1191
      %1193 = vst [vmem:[#allocation2 + $0xbc] sm:$0x1] %v1192
      %v1194 = vld [vmem:[#allocation2 + $0xc8] sm:$0x1]
      %v1195 = vsel %vm1145, 0, %v1194
      %1196 = vst [vmem:[#allocation2 + $0xc8] sm:$0x1] %v1195
      %v1197 = vld [vmem:[#allocation2 + $0xd4] sm:$0x1]
      %v1198 = vsel %vm1145, 0, %v1197
      %1199 = vst [vmem:[#allocation2 + $0xd4] sm:$0x1] %v1198
      %v1216 = vunpack.c.l.b16 %v672
      %v1217 = vunpack.c.h.b16 %v672
      %v1218 = vunpack.c.l.b16 %v673
      %v1219 = vunpack.c.h.b16 %v673
      %v1220 = vunpack.c.l.b16 %v674
      %v1221 = vunpack.c.h.b16 %v674
      %v1222 = vunpack.c.l.b16 %v675
      %v1223 = vunpack.c.h.b16 %v675
      %v1224 = vunpack.c.l.b16 %v676
      %v1225 = vunpack.c.h.b16 %v676
      %v1226 = vunpack.c.l.b16 %v677
      %v1227 = vunpack.c.h.b16 %v677
      %v1228 = vunpack.c.l.b16 %v678
      %v1229 = vunpack.c.h.b16 %v678
      %v1230 = vunpack.c.l.b16 %v679
      %v1231 = vunpack.c.h.b16 %v679
      %v1232 = vunpack.c.l.b16 %v680
      %v1233 = vunpack.c.h.b16 %v680
      %v1234 = vunpack.c.l.b16 %v681
      %v1235 = vunpack.c.h.b16 %v681
      %v1236 = vunpack.c.l.b16 %v682
      %v1237 = vunpack.c.h.b16 %v682
      %v1238 = vunpack.c.l.b16 %v683
      %v1239 = vunpack.c.h.b16 %v683
      %v1240 = vunpack.c.l.b16 %v684
      %v1241 = vunpack.c.h.b16 %v684
      %v1242 = vunpack.c.l.b16 %v685
      %v1243 = vunpack.c.h.b16 %v685
      %v1244 = vunpack.c.l.b16 %v686
      %v1245 = vunpack.c.h.b16 %v686
      %v1246 = vunpack.c.l.b16 %v687
      %v1247 = vunpack.c.h.b16 %v687
      %v1248 = vpack.c.b16 %v1216, %v1216
      %v1249 = vpack.c.b16 %v1217, %v1217
      %v1250 = vpack.c.b16 %v1218, %v1218
      %v1251 = vpack.c.b16 %v1219, %v1219
      %v1252 = vpack.c.b16 %v1220, %v1220
      %v1253 = vpack.c.b16 %v1221, %v1221
      %v1254 = vpack.c.b16 %v1222, %v1222
      %v1255 = vpack.c.b16 %v1223, %v1223
      %v1256 = vpack.c.b16 %v1224, %v1224
      %v1257 = vpack.c.b16 %v1225, %v1225
      %v1258 = vpack.c.b16 %v1226, %v1226
      %v1259 = vpack.c.b16 %v1227, %v1227
      %v1260 = vpack.c.b16 %v1228, %v1228
      %v1261 = vpack.c.b16 %v1229, %v1229
      %v1262 = vpack.c.b16 %v1230, %v1230
      %v1263 = vpack.c.b16 %v1231, %v1231
      %v1264 = vpack.c.b16 %v1232, %v1232
      %v1265 = vpack.c.b16 %v1233, %v1233
      %v1266 = vpack.c.b16 %v1234, %v1234
      %v1267 = vpack.c.b16 %v1235, %v1235
      %v1268 = vpack.c.b16 %v1236, %v1236
      %v1269 = vpack.c.b16 %v1237, %v1237
      %v1270 = vpack.c.b16 %v1238, %v1238
      %v1271 = vpack.c.b16 %v1239, %v1239
      %v1272 = vpack.c.b16 %v1240, %v1240
      %v1273 = vpack.c.b16 %v1241, %v1241
      %v1274 = vpack.c.b16 %v1242, %v1242
      %v1275 = vpack.c.b16 %v1243, %v1243
      %v1276 = vpack.c.b16 %v1244, %v1244
      %v1277 = vpack.c.b16 %v1245, %v1245
      %v1278 = vpack.c.b16 %v1246, %v1246
      %v1279 = vpack.c.b16 %v1247, %v1247
      %vm1280 = vsmask.f32 4368
      %vm1281 = vmor %vm1088, %vm1280
      %v1283 = vshrl.u32 %v1248, 16
      %v1285 = vrot.slane %v1283, 7
      %v1286 = vshll.u32 %v1248, 16
      %v1288 = vor.u32 %v1285, %v1286
      %v1289 = vrot.slane %v1285, 4
      %v1291 = vshrl.u32 %v1249, 16
      %v1293 = vrot.slane %v1291, 7
      %v1294 = vshll.u32 %v1249, 16
      %v1296 = vor.u32 %v1293, %v1294
      %v1297 = vsel %vm1281, %v1289, %v1296
      %v1298 = vrot.slane %v1293, 4
      %v1300 = vshrl.u32 %v1250, 16
      %v1302 = vrot.slane %v1300, 7
      %v1303 = vshll.u32 %v1250, 16
      %v1305 = vor.u32 %v1302, %v1303
      %v1306 = vrot.slane %v1302, 4
      %v1308 = vshrl.u32 %v1251, 16
      %v1310 = vrot.slane %v1308, 7
      %v1311 = vshll.u32 %v1251, 16
      %v1313 = vor.u32 %v1310, %v1311
      %v1314 = vsel %vm1281, %v1306, %v1313
      %v1315 = vrot.slane %v1310, 4
      %v1317 = vshrl.u32 %v1252, 16
      %v1319 = vrot.slane %v1317, 7
      %v1320 = vshll.u32 %v1252, 16
      %v1322 = vor.u32 %v1319, %v1320
      %v1323 = vrot.slane %v1319, 4
      %v1325 = vshrl.u32 %v1253, 16
      %v1327 = vrot.slane %v1325, 7
      %v1328 = vshll.u32 %v1253, 16
      %v1330 = vor.u32 %v1327, %v1328
      %v1331 = vsel %vm1281, %v1323, %v1330
      %v1332 = vrot.slane %v1327, 4
      %v1334 = vshrl.u32 %v1254, 16
      %v1336 = vrot.slane %v1334, 7
      %v1337 = vshll.u32 %v1254, 16
      %v1339 = vor.u32 %v1336, %v1337
      %v1340 = vrot.slane %v1336, 4
      %v1342 = vshrl.u32 %v1255, 16
      %v1344 = vrot.slane %v1342, 7
      %v1345 = vshll.u32 %v1255, 16
      %v1347 = vor.u32 %v1344, %v1345
      %v1348 = vsel %vm1281, %v1340, %v1347
      %v1349 = vrot.slane %v1344, 4
      %v1351 = vshrl.u32 %v1256, 16
      %v1353 = vrot.slane %v1351, 7
      %v1354 = vshll.u32 %v1256, 16
      %v1356 = vor.u32 %v1353, %v1354
      %v1357 = vrot.slane %v1353, 4
      %v1359 = vshrl.u32 %v1257, 16
      %v1361 = vrot.slane %v1359, 7
      %v1362 = vshll.u32 %v1257, 16
      %v1364 = vor.u32 %v1361, %v1362
      %v1365 = vsel %vm1281, %v1357, %v1364
      %v1366 = vrot.slane %v1361, 4
      %v1368 = vshrl.u32 %v1258, 16
      %v1370 = vrot.slane %v1368, 7
      %v1371 = vshll.u32 %v1258, 16
      %v1373 = vor.u32 %v1370, %v1371
      %v1374 = vrot.slane %v1370, 4
      %v1376 = vshrl.u32 %v1259, 16
      %v1378 = vrot.slane %v1376, 7
      %v1379 = vshll.u32 %v1259, 16
      %v1381 = vor.u32 %v1378, %v1379
      %v1382 = vsel %vm1281, %v1374, %v1381
      %v1383 = vrot.slane %v1378, 4
      %v1385 = vshrl.u32 %v1260, 16
      %v1387 = vrot.slane %v1385, 7
      %v1388 = vshll.u32 %v1260, 16
      %v1390 = vor.u32 %v1387, %v1388
      %v1391 = vrot.slane %v1387, 4
      %v1393 = vshrl.u32 %v1261, 16
      %v1395 = vrot.slane %v1393, 7
      %v1396 = vshll.u32 %v1261, 16
      %v1398 = vor.u32 %v1395, %v1396
      %v1399 = vsel %vm1281, %v1391, %v1398
      %v1400 = vrot.slane %v1395, 4
      %v1402 = vshrl.u32 %v1262, 16
      %v1404 = vrot.slane %v1402, 7
      %v1405 = vshll.u32 %v1262, 16
      %v1407 = vor.u32 %v1404, %v1405
      %v1408 = vrot.slane %v1404, 4
      %v1410 = vshrl.u32 %v1263, 16
      %v1412 = vrot.slane %v1410, 7
      %v1413 = vshll.u32 %v1263, 16
      %v1415 = vor.u32 %v1412, %v1413
      %v1416 = vsel %vm1281, %v1408, %v1415
      %v1417 = vrot.slane %v1412, 4
      %v1419 = vshrl.u32 %v1264, 16
      %v1421 = vrot.slane %v1419, 7
      %v1422 = vshll.u32 %v1264, 16
      %v1424 = vor.u32 %v1421, %v1422
      %v1425 = vrot.slane %v1421, 4
      %v1427 = vshrl.u32 %v1265, 16
      %v1429 = vrot.slane %v1427, 7
      %v1430 = vshll.u32 %v1265, 16
      %v1432 = vor.u32 %v1429, %v1430
      %v1433 = vsel %vm1281, %v1425, %v1432
      %v1434 = vrot.slane %v1429, 4
      %v1436 = vshrl.u32 %v1266, 16
      %v1438 = vrot.slane %v1436, 7
      %v1439 = vshll.u32 %v1266, 16
      %v1441 = vor.u32 %v1438, %v1439
      %v1442 = vrot.slane %v1438, 4
      %v1444 = vshrl.u32 %v1267, 16
      %v1446 = vrot.slane %v1444, 7
      %v1447 = vshll.u32 %v1267, 16
      %v1449 = vor.u32 %v1446, %v1447
      %v1450 = vsel %vm1281, %v1442, %v1449
      %v1451 = vrot.slane %v1446, 4
      %v1453 = vshrl.u32 %v1268, 16
      %v1455 = vrot.slane %v1453, 7
      %v1456 = vshll.u32 %v1268, 16
      %v1458 = vor.u32 %v1455, %v1456
      %v1459 = vrot.slane %v1455, 4
      %v1461 = vshrl.u32 %v1269, 16
      %v1463 = vrot.slane %v1461, 7
      %v1464 = vshll.u32 %v1269, 16
      %v1466 = vor.u32 %v1463, %v1464
      %v1467 = vsel %vm1281, %v1459, %v1466
      %v1468 = vrot.slane %v1463, 4
      %v1470 = vshrl.u32 %v1270, 16
      %v1472 = vrot.slane %v1470, 7
      %v1473 = vshll.u32 %v1270, 16
      %v1475 = vor.u32 %v1472, %v1473
      %v1476 = vrot.slane %v1472, 4
      %v1478 = vshrl.u32 %v1271, 16
      %v1480 = vrot.slane %v1478, 7
      %v1481 = vshll.u32 %v1271, 16
      %v1483 = vor.u32 %v1480, %v1481
      %v1484 = vsel %vm1281, %v1476, %v1483
      %v1485 = vrot.slane %v1480, 4
      %v1487 = vshrl.u32 %v1272, 16
      %v1489 = vrot.slane %v1487, 7
      %v1490 = vshll.u32 %v1272, 16
      %v1492 = vor.u32 %v1489, %v1490
      %v1493 = vrot.slane %v1489, 4
      %v1495 = vshrl.u32 %v1273, 16
      %v1497 = vrot.slane %v1495, 7
      %v1498 = vshll.u32 %v1273, 16
      %v1500 = vor.u32 %v1497, %v1498
      %v1501 = vsel %vm1281, %v1493, %v1500
      %v1502 = vrot.slane %v1497, 4
      %v1504 = vshrl.u32 %v1274, 16
      %v1506 = vrot.slane %v1504, 7
      %v1507 = vshll.u32 %v1274, 16
      %v1509 = vor.u32 %v1506, %v1507
      %v1510 = vrot.slane %v1506, 4
      %v1512 = vshrl.u32 %v1275, 16
      %v1514 = vrot.slane %v1512, 7
      %v1515 = vshll.u32 %v1275, 16
      %v1517 = vor.u32 %v1514, %v1515
      %v1518 = vsel %vm1281, %v1510, %v1517
      %v1519 = vrot.slane %v1514, 4
      %v1521 = vshrl.u32 %v1276, 16
      %v1523 = vrot.slane %v1521, 7
      %v1524 = vshll.u32 %v1276, 16
      %v1526 = vor.u32 %v1523, %v1524
      %v1527 = vrot.slane %v1523, 4
      %v1529 = vshrl.u32 %v1277, 16
      %v1531 = vrot.slane %v1529, 7
      %v1532 = vshll.u32 %v1277, 16
      %v1534 = vor.u32 %v1531, %v1532
      %v1535 = vsel %vm1281, %v1527, %v1534
      %v1536 = vrot.slane %v1531, 4
      %v1538 = vshrl.u32 %v1278, 16
      %v1540 = vrot.slane %v1538, 7
      %v1541 = vshll.u32 %v1278, 16
      %v1543 = vor.u32 %v1540, %v1541
      %v1544 = vrot.slane %v1540, 4
      %v1546 = vshrl.u32 %v1279, 16
      %v1548 = vrot.slane %v1546, 7
      %v1549 = vshll.u32 %v1279, 16
      %v1551 = vor.u32 %v1548, %v1549
      %v1552 = vsel %vm1281, %v1544, %v1551
      %v1553 = vrot.slane %v1548, 4
      %s1602 = scalar_lea.vmem [#allocation2], 12
      %vm1603 = vcmask 1043456
      %vm1604 = vmand %vm1603, %vm1144
      %v1605 = vld [vmem:[%s1602] sm:$0xf]
      %v1606 = vsel %vm1604, %v1288, %v1605
      %1607 = vst [vmem:[%s1602] sm:$0xf] %v1606
      %1608 = vst [vmem:[%s1602 + $0x4] sm:$0xf] %v1297
      %v1609 = vld [vmem:[%s1602 + $0x8] sm:$0x1]
      %v1610 = vsel %vm1089, %v1298, %v1609
      %1611 = vst [vmem:[%s1602 + $0x8] sm:$0x1] %v1610
      %v1612 = vld [vmem:[%s1602 + $0xc] sm:$0xf]
      %v1613 = vsel %vm1604, %v1305, %v1612
      %1614 = vst [vmem:[%s1602 + $0xc] sm:$0xf] %v1613
      %1615 = vst [vmem:[%s1602 + $0x10] sm:$0xf] %v1314
      %v1616 = vld [vmem:[%s1602 + $0x14] sm:$0x1]
      %v1617 = vsel %vm1089, %v1315, %v1616
      %1618 = vst [vmem:[%s1602 + $0x14] sm:$0x1] %v1617
      %v1619 = vld [vmem:[%s1602 + $0x18] sm:$0xf]
      %v1620 = vsel %vm1604, %v1322, %v1619
      %1621 = vst [vmem:[%s1602 + $0x18] sm:$0xf] %v1620
      %1622 = vst [vmem:[%s1602 + $0x1c] sm:$0xf] %v1331
      %v1623 = vld [vmem:[%s1602 + $0x20] sm:$0x1]
      %v1624 = vsel %vm1089, %v1332, %v1623
      %1625 = vst [vmem:[%s1602 + $0x20] sm:$0x1] %v1624
      %v1626 = vld [vmem:[%s1602 + $0x24] sm:$0xf]
      %v1627 = vsel %vm1604, %v1339, %v1626
      %1628 = vst [vmem:[%s1602 + $0x24] sm:$0xf] %v1627
      %1629 = vst [vmem:[%s1602 + $0x28] sm:$0xf] %v1348
      %v1630 = vld [vmem:[%s1602 + $0x2c] sm:$0x1]
      %v1631 = vsel %vm1089, %v1349, %v1630
      %1632 = vst [vmem:[%s1602 + $0x2c] sm:$0x1] %v1631
      %v1633 = vld [vmem:[%s1602 + $0x30] sm:$0xf]
      %v1634 = vsel %vm1604, %v1356, %v1633
      %1635 = vst [vmem:[%s1602 + $0x30] sm:$0xf] %v1634
      %1636 = vst [vmem:[%s1602 + $0x34] sm:$0xf] %v1365
      %v1637 = vld [vmem:[%s1602 + $0x38] sm:$0x1]
      %v1638 = vsel %vm1089, %v1366, %v1637
      %1639 = vst [vmem:[%s1602 + $0x38] sm:$0x1] %v1638
      %v1640 = vld [vmem:[%s1602 + $0x3c] sm:$0xf]
      %v1641 = vsel %vm1604, %v1373, %v1640
      %1642 = vst [vmem:[%s1602 + $0x3c] sm:$0xf] %v1641
      %1643 = vst [vmem:[%s1602 + $0x40] sm:$0xf] %v1382
      %v1644 = vld [vmem:[%s1602 + $0x44] sm:$0x1]
      %v1645 = vsel %vm1089, %v1383, %v1644
      %1646 = vst [vmem:[%s1602 + $0x44] sm:$0x1] %v1645
      %v1647 = vld [vmem:[%s1602 + $0x48] sm:$0xf]
      %v1648 = vsel %vm1604, %v1390, %v1647
      %1649 = vst [vmem:[%s1602 + $0x48] sm:$0xf] %v1648
      %1650 = vst [vmem:[%s1602 + $0x4c] sm:$0xf] %v1399
      %v1651 = vld [vmem:[%s1602 + $0x50] sm:$0x1]
      %v1652 = vsel %vm1089, %v1400, %v1651
      %1653 = vst [vmem:[%s1602 + $0x50] sm:$0x1] %v1652
      %v1654 = vld [vmem:[%s1602 + $0x54] sm:$0xf]
      %v1655 = vsel %vm1604, %v1407, %v1654
      %1656 = vst [vmem:[%s1602 + $0x54] sm:$0xf] %v1655
      %1657 = vst [vmem:[%s1602 + $0x58] sm:$0xf] %v1416
      %v1658 = vld [vmem:[%s1602 + $0x5c] sm:$0x1]
      %v1659 = vsel %vm1089, %v1417, %v1658
      %1660 = vst [vmem:[%s1602 + $0x5c] sm:$0x1] %v1659
      %v1661 = vld [vmem:[%s1602 + $0x60] sm:$0xf]
      %v1662 = vsel %vm1604, %v1424, %v1661
      %1663 = vst [vmem:[%s1602 + $0x60] sm:$0xf] %v1662
      %1664 = vst [vmem:[%s1602 + $0x64] sm:$0xf] %v1433
      %v1665 = vld [vmem:[%s1602 + $0x68] sm:$0x1]
      %v1666 = vsel %vm1089, %v1434, %v1665
      %1667 = vst [vmem:[%s1602 + $0x68] sm:$0x1] %v1666
      %v1668 = vld [vmem:[%s1602 + $0x6c] sm:$0xf]
      %v1669 = vsel %vm1604, %v1441, %v1668
      %1670 = vst [vmem:[%s1602 + $0x6c] sm:$0xf] %v1669
      %1671 = vst [vmem:[%s1602 + $0x70] sm:$0xf] %v1450
      %v1672 = vld [vmem:[%s1602 + $0x74] sm:$0x1]
      %v1673 = vsel %vm1089, %v1451, %v1672
      %1674 = vst [vmem:[%s1602 + $0x74] sm:$0x1] %v1673
      %v1675 = vld [vmem:[%s1602 + $0x78] sm:$0xf]
      %v1676 = vsel %vm1604, %v1458, %v1675
      %1677 = vst [vmem:[%s1602 + $0x78] sm:$0xf] %v1676
      %1678 = vst [vmem:[%s1602 + $0x7c] sm:$0xf] %v1467
      %v1679 = vld [vmem:[%s1602 + $0x80] sm:$0x1]
      %v1680 = vsel %vm1089, %v1468, %v1679
      %1681 = vst [vmem:[%s1602 + $0x80] sm:$0x1] %v1680
      %v1682 = vld [vmem:[%s1602 + $0x84] sm:$0xf]
      %v1683 = vsel %vm1604, %v1475, %v1682
      %1684 = vst [vmem:[%s1602 + $0x84] sm:$0xf] %v1683
      %1685 = vst [vmem:[%s1602 + $0x88] sm:$0xf] %v1484
      %v1686 = vld [vmem:[%s1602 + $0x8c] sm:$0x1]
      %v1687 = vsel %vm1089, %v1485, %v1686
      %1688 = vst [vmem:[%s1602 + $0x8c] sm:$0x1] %v1687
      %v1689 = vld [vmem:[%s1602 + $0x90] sm:$0xf]
      %v1690 = vsel %vm1604, %v1492, %v1689
      %1691 = vst [vmem:[%s1602 + $0x90] sm:$0xf] %v1690
      %1692 = vst [vmem:[%s1602 + $0x94] sm:$0xf] %v1501
      %v1693 = vld [vmem:[%s1602 + $0x98] sm:$0x1]
      %v1694 = vsel %vm1089, %v1502, %v1693
      %1695 = vst [vmem:[%s1602 + $0x98] sm:$0x1] %v1694
      %v1696 = vld [vmem:[%s1602 + $0x9c] sm:$0xf]
      %v1697 = vsel %vm1604, %v1509, %v1696
      %1698 = vst [vmem:[%s1602 + $0x9c] sm:$0xf] %v1697
      %1699 = vst [vmem:[%s1602 + $0xa0] sm:$0xf] %v1518
      %v1700 = vld [vmem:[%s1602 + $0xa4] sm:$0x1]
      %v1701 = vsel %vm1089, %v1519, %v1700
      %1702 = vst [vmem:[%s1602 + $0xa4] sm:$0x1] %v1701
      %v1703 = vld [vmem:[%s1602 + $0xa8] sm:$0xf]
      %v1704 = vsel %vm1604, %v1526, %v1703
      %1705 = vst [vmem:[%s1602 + $0xa8] sm:$0xf] %v1704
      %1706 = vst [vmem:[%s1602 + $0xac] sm:$0xf] %v1535
      %v1707 = vld [vmem:[%s1602 + $0xb0] sm:$0x1]
      %v1708 = vsel %vm1089, %v1536, %v1707
      %1709 = vst [vmem:[%s1602 + $0xb0] sm:$0x1] %v1708
      %v1710 = vld [vmem:[%s1602 + $0xb4] sm:$0xf]
      %v1711 = vsel %vm1604, %v1543, %v1710
      %1712 = vst [vmem:[%s1602 + $0xb4] sm:$0xf] %v1711
      %1713 = vst [vmem:[%s1602 + $0xb8] sm:$0xf] %v1552
      %v1714 = vld [vmem:[%s1602 + $0xbc] sm:$0x1]
      %v1715 = vsel %vm1089, %v1553, %v1714
      %1716 = vst [vmem:[%s1602 + $0xbc] sm:$0x1] %v1715
      %v1717 = vld [vmem:[#allocation2] sm:$0xf]
      %v1718 = vld [vmem:[#allocation2 + $0x4] sm:$0xf]
      %v1719 = vld [vmem:[#allocation2 + $0xc] sm:$0xf]
      %v1720 = vld [vmem:[#allocation2 + $0x10] sm:$0xf]
      %v1721 = vld [vmem:[#allocation2 + $0x18] sm:$0xf]
      %v1722 = vld [vmem:[#allocation2 + $0x1c] sm:$0xf]
      %v1723 = vld [vmem:[#allocation2 + $0x24] sm:$0xf]
      %v1724 = vld [vmem:[#allocation2 + $0x28] sm:$0xf]
      %v1725 = vld [vmem:[#allocation2 + $0x30] sm:$0xf]
      %v1726 = vld [vmem:[#allocation2 + $0x34] sm:$0xf]
      %v1727 = vld [vmem:[#allocation2 + $0x3c] sm:$0xf]
      %v1728 = vld [vmem:[#allocation2 + $0x40] sm:$0xf]
      %v1729 = vld [vmem:[#allocation2 + $0x48] sm:$0xf]
      %v1730 = vld [vmem:[#allocation2 + $0x4c] sm:$0xf]
      %v1731 = vld [vmem:[#allocation2 + $0x54] sm:$0xf]
      %v1732 = vld [vmem:[#allocation2 + $0x58] sm:$0xf]
      %v1733 = vld [vmem:[#allocation2 + $0x60] sm:$0xf]
      %v1734 = vld [vmem:[#allocation2 + $0x64] sm:$0xf]
      %v1735 = vld [vmem:[#allocation2 + $0x6c] sm:$0xf]
      %v1736 = vld [vmem:[#allocation2 + $0x70] sm:$0xf]
      %v1737 = vld [vmem:[#allocation2 + $0x78] sm:$0xf]
      %v1738 = vld [vmem:[#allocation2 + $0x7c] sm:$0xf]
      %v1739 = vld [vmem:[#allocation2 + $0x84] sm:$0xf]
      %v1740 = vld [vmem:[#allocation2 + $0x88] sm:$0xf]
      %v1741 = vld [vmem:[#allocation2 + $0x90] sm:$0xf]
      %v1742 = vld [vmem:[#allocation2 + $0x94] sm:$0xf]
      %v1743 = vld [vmem:[#allocation2 + $0x9c] sm:$0xf]
      %v1744 = vld [vmem:[#allocation2 + $0xa0] sm:$0xf]
      %v1745 = vld [vmem:[#allocation2 + $0xa8] sm:$0xf]
      %v1746 = vld [vmem:[#allocation2 + $0xac] sm:$0xf]
      %v1747 = vld [vmem:[#allocation2 + $0xb4] sm:$0xf]
      %v1748 = vld [vmem:[#allocation2 + $0xb8] sm:$0xf]
      %v1749 = vld [vmem:[#allocation2 + $0x8] sm:$0x1]
      %v1750 = vld [vmem:[#allocation2 + $0x14] sm:$0x1]
      %v1751 = vld [vmem:[#allocation2 + $0x20] sm:$0x1]
      %v1752 = vld [vmem:[#allocation2 + $0x2c] sm:$0x1]
      %v1753 = vld [vmem:[#allocation2 + $0x38] sm:$0x1]
      %v1754 = vld [vmem:[#allocation2 + $0x44] sm:$0x1]
      %v1755 = vld [vmem:[#allocation2 + $0x50] sm:$0x1]
      %v1756 = vld [vmem:[#allocation2 + $0x5c] sm:$0x1]
      %v1757 = vld [vmem:[#allocation2 + $0x68] sm:$0x1]
      %v1758 = vld [vmem:[#allocation2 + $0x74] sm:$0x1]
      %v1759 = vld [vmem:[#allocation2 + $0x80] sm:$0x1]
      %v1760 = vld [vmem:[#allocation2 + $0x8c] sm:$0x1]
      %v1761 = vld [vmem:[#allocation2 + $0x98] sm:$0x1]
      %v1762 = vld [vmem:[#allocation2 + $0xa4] sm:$0x1]
      %v1763 = vld [vmem:[#allocation2 + $0xb0] sm:$0x1]
      %v1764 = vld [vmem:[#allocation2 + $0xbc] sm:$0x1]
      %vm1765 = vsmask.f32 3328
      %vm1766 = vsmask.f32 7440
      %vm1767 = vmor %vm1765, %vm1766
      %v1769 = vshrl.u32 %v1717, 16
      %v1771 = vrot.slane %v1769, 4
      %v1772 = vshll.u32 %v1717, 16
      %v1774 = vrot.slane %v1772, 5
      %v1775 = vor.u32 %v1771, %v1774
      %v1776 = vrot.slane %v1775, 4
      %v1778 = vshll.u32 %v1718, 16
      %v1780 = vrot.slane %v1778, 5
      %v1781 = vsel %vm1767, %v1776, %v1780
      %v1782 = vshrl.u32 %v1718, 16
      %v1784 = vrot.slane %v1782, 4
      %v1785 = vor.u32 %v1784, %v1780
      %v1786 = vrot.slane %v1785, 4
      %v1788 = vshll.u32 %v1749, 16
      %v1790 = vrot.slane %v1788, 5
      %v1791 = vsel %vm1767, %v1786, %v1790
      %v1793 = vshrl.u32 %v1719, 16
      %v1795 = vrot.slane %v1793, 4
      %v1796 = vshll.u32 %v1719, 16
      %v1798 = vrot.slane %v1796, 5
      %v1799 = vor.u32 %v1795, %v1798
      %v1800 = vrot.slane %v1799, 4
      %v1802 = vshll.u32 %v1720, 16
      %v1804 = vrot.slane %v1802, 5
      %v1805 = vsel %vm1767, %v1800, %v1804
      %v1806 = vshrl.u32 %v1720, 16
      %v1808 = vrot.slane %v1806, 4
      %v1809 = vor.u32 %v1808, %v1804
      %v1810 = vrot.slane %v1809, 4
      %v1812 = vshll.u32 %v1750, 16
      %v1814 = vrot.slane %v1812, 5
      %v1815 = vsel %vm1767, %v1810, %v1814
      %v1817 = vshrl.u32 %v1721, 16
      %v1819 = vrot.slane %v1817, 4
      %v1820 = vshll.u32 %v1721, 16
      %v1822 = vrot.slane %v1820, 5
      %v1823 = vor.u32 %v1819, %v1822
      %v1824 = vrot.slane %v1823, 4
      %v1826 = vshll.u32 %v1722, 16
      %v1828 = vrot.slane %v1826, 5
      %v1829 = vsel %vm1767, %v1824, %v1828
      %v1830 = vshrl.u32 %v1722, 16
      %v1832 = vrot.slane %v1830, 4
      %v1833 = vor.u32 %v1832, %v1828
      %v1834 = vrot.slane %v1833, 4
      %v1836 = vshll.u32 %v1751, 16
      %v1838 = vrot.slane %v1836, 5
      %v1839 = vsel %vm1767, %v1834, %v1838
      %v1841 = vshrl.u32 %v1723, 16
      %v1843 = vrot.slane %v1841, 4
      %v1844 = vshll.u32 %v1723, 16
      %v1846 = vrot.slane %v1844, 5
      %v1847 = vor.u32 %v1843, %v1846
      %v1848 = vrot.slane %v1847, 4
      %v1850 = vshll.u32 %v1724, 16
      %v1852 = vrot.slane %v1850, 5
      %v1853 = vsel %vm1767, %v1848, %v1852
      %v1854 = vshrl.u32 %v1724, 16
      %v1856 = vrot.slane %v1854, 4
      %v1857 = vor.u32 %v1856, %v1852
      %v1858 = vrot.slane %v1857, 4
      %v1860 = vshll.u32 %v1752, 16
      %v1862 = vrot.slane %v1860, 5
      %v1863 = vsel %vm1767, %v1858, %v1862
      %v1865 = vshrl.u32 %v1725, 16
      %v1867 = vrot.slane %v1865, 4
      %v1868 = vshll.u32 %v1725, 16
      %v1870 = vrot.slane %v1868, 5
      %v1871 = vor.u32 %v1867, %v1870
      %v1872 = vrot.slane %v1871, 4
      %v1874 = vshll.u32 %v1726, 16
      %v1876 = vrot.slane %v1874, 5
      %v1877 = vsel %vm1767, %v1872, %v1876
      %v1878 = vshrl.u32 %v1726, 16
      %v1880 = vrot.slane %v1878, 4
      %v1881 = vor.u32 %v1880, %v1876
      %v1882 = vrot.slane %v1881, 4
      %v1884 = vshll.u32 %v1753, 16
      %v1886 = vrot.slane %v1884, 5
      %v1887 = vsel %vm1767, %v1882, %v1886
      %v1889 = vshrl.u32 %v1727, 16
      %v1891 = vrot.slane %v1889, 4
      %v1892 = vshll.u32 %v1727, 16
      %v1894 = vrot.slane %v1892, 5
      %v1895 = vor.u32 %v1891, %v1894
      %v1896 = vrot.slane %v1895, 4
      %v1898 = vshll.u32 %v1728, 16
      %v1900 = vrot.slane %v1898, 5
      %v1901 = vsel %vm1767, %v1896, %v1900
      %v1902 = vshrl.u32 %v1728, 16
      %v1904 = vrot.slane %v1902, 4
      %v1905 = vor.u32 %v1904, %v1900
      %v1906 = vrot.slane %v1905, 4
      %v1908 = vshll.u32 %v1754, 16
      %v1910 = vrot.slane %v1908, 5
      %v1911 = vsel %vm1767, %v1906, %v1910
      %v1913 = vshrl.u32 %v1729, 16
      %v1915 = vrot.slane %v1913, 4
      %v1916 = vshll.u32 %v1729, 16
      %v1918 = vrot.slane %v1916, 5
      %v1919 = vor.u32 %v1915, %v1918
      %v1920 = vrot.slane %v1919, 4
      %v1922 = vshll.u32 %v1730, 16
      %v1924 = vrot.slane %v1922, 5
      %v1925 = vsel %vm1767, %v1920, %v1924
      %v1926 = vshrl.u32 %v1730, 16
      %v1928 = vrot.slane %v1926, 4
      %v1929 = vor.u32 %v1928, %v1924
      %v1930 = vrot.slane %v1929, 4
      %v1932 = vshll.u32 %v1755, 16
      %v1934 = vrot.slane %v1932, 5
      %v1935 = vsel %vm1767, %v1930, %v1934
      %v1937 = vshrl.u32 %v1731, 16
      %v1939 = vrot.slane %v1937, 4
      %v1940 = vshll.u32 %v1731, 16
      %v1942 = vrot.slane %v1940, 5
      %v1943 = vor.u32 %v1939, %v1942
      %v1944 = vrot.slane %v1943, 4
      %v1946 = vshll.u32 %v1732, 16
      %v1948 = vrot.slane %v1946, 5
      %v1949 = vsel %vm1767, %v1944, %v1948
      %v1950 = vshrl.u32 %v1732, 16
      %v1952 = vrot.slane %v1950, 4
      %v1953 = vor.u32 %v1952, %v1948
      %v1954 = vrot.slane %v1953, 4
      %v1956 = vshll.u32 %v1756, 16
      %v1958 = vrot.slane %v1956, 5
      %v1959 = vsel %vm1767, %v1954, %v1958
      %v1961 = vshrl.u32 %v1733, 16
      %v1963 = vrot.slane %v1961, 4
      %v1964 = vshll.u32 %v1733, 16
      %v1966 = vrot.slane %v1964, 5
      %v1967 = vor.u32 %v1963, %v1966
      %v1968 = vrot.slane %v1967, 4
      %v1970 = vshll.u32 %v1734, 16
      %v1972 = vrot.slane %v1970, 5
      %v1973 = vsel %vm1767, %v1968, %v1972
      %v1974 = vshrl.u32 %v1734, 16
      %v1976 = vrot.slane %v1974, 4
      %v1977 = vor.u32 %v1976, %v1972
      %v1978 = vrot.slane %v1977, 4
      %v1980 = vshll.u32 %v1757, 16
      %v1982 = vrot.slane %v1980, 5
      %v1983 = vsel %vm1767, %v1978, %v1982
      %v1985 = vshrl.u32 %v1735, 16
      %v1987 = vrot.slane %v1985, 4
      %v1988 = vshll.u32 %v1735, 16
      %v1990 = vrot.slane %v1988, 5
      %v1991 = vor.u32 %v1987, %v1990
      %v1992 = vrot.slane %v1991, 4
      %v1994 = vshll.u32 %v1736, 16
      %v1996 = vrot.slane %v1994, 5
      %v1997 = vsel %vm1767, %v1992, %v1996
      %v1998 = vshrl.u32 %v1736, 16
      %v2000 = vrot.slane %v1998, 4
      %v2001 = vor.u32 %v2000, %v1996
      %v2002 = vrot.slane %v2001, 4
      %v2004 = vshll.u32 %v1758, 16
      %v2006 = vrot.slane %v2004, 5
      %v2007 = vsel %vm1767, %v2002, %v2006
      %v2009 = vshrl.u32 %v1737, 16
      %v2011 = vrot.slane %v2009, 4
      %v2012 = vshll.u32 %v1737, 16
      %v2014 = vrot.slane %v2012, 5
      %v2015 = vor.u32 %v2011, %v2014
      %v2016 = vrot.slane %v2015, 4
      %v2018 = vshll.u32 %v1738, 16
      %v2020 = vrot.slane %v2018, 5
      %v2021 = vsel %vm1767, %v2016, %v2020
      %v2022 = vshrl.u32 %v1738, 16
      %v2024 = vrot.slane %v2022, 4
      %v2025 = vor.u32 %v2024, %v2020
      %v2026 = vrot.slane %v2025, 4
      %v2028 = vshll.u32 %v1759, 16
      %v2030 = vrot.slane %v2028, 5
      %v2031 = vsel %vm1767, %v2026, %v2030
      %v2033 = vshrl.u32 %v1739, 16
      %v2035 = vrot.slane %v2033, 4
      %v2036 = vshll.u32 %v1739, 16
      %v2038 = vrot.slane %v2036, 5
      %v2039 = vor.u32 %v2035, %v2038
      %v2040 = vrot.slane %v2039, 4
      %v2042 = vshll.u32 %v1740, 16
      %v2044 = vrot.slane %v2042, 5
      %v2045 = vsel %vm1767, %v2040, %v2044
      %v2046 = vshrl.u32 %v1740, 16
      %v2048 = vrot.slane %v2046, 4
      %v2049 = vor.u32 %v2048, %v2044
      %v2050 = vrot.slane %v2049, 4
      %v2052 = vshll.u32 %v1760, 16
      %v2054 = vrot.slane %v2052, 5
      %v2055 = vsel %vm1767, %v2050, %v2054
      %v2057 = vshrl.u32 %v1741, 16
      %v2059 = vrot.slane %v2057, 4
      %v2060 = vshll.u32 %v1741, 16
      %v2062 = vrot.slane %v2060, 5
      %v2063 = vor.u32 %v2059, %v2062
      %v2064 = vrot.slane %v2063, 4
      %v2066 = vshll.u32 %v1742, 16
      %v2068 = vrot.slane %v2066, 5
      %v2069 = vsel %vm1767, %v2064, %v2068
      %v2070 = vshrl.u32 %v1742, 16
      %v2072 = vrot.slane %v2070, 4
      %v2073 = vor.u32 %v2072, %v2068
      %v2074 = vrot.slane %v2073, 4
      %v2076 = vshll.u32 %v1761, 16
      %v2078 = vrot.slane %v2076, 5
      %v2079 = vsel %vm1767, %v2074, %v2078
      %v2081 = vshrl.u32 %v1743, 16
      %v2083 = vrot.slane %v2081, 4
      %v2084 = vshll.u32 %v1743, 16
      %v2086 = vrot.slane %v2084, 5
      %v2087 = vor.u32 %v2083, %v2086
      %v2088 = vrot.slane %v2087, 4
      %v2090 = vshll.u32 %v1744, 16
      %v2092 = vrot.slane %v2090, 5
      %v2093 = vsel %vm1767, %v2088, %v2092
      %v2094 = vshrl.u32 %v1744, 16
      %v2096 = vrot.slane %v2094, 4
      %v2097 = vor.u32 %v2096, %v2092
      %v2098 = vrot.slane %v2097, 4
      %v2100 = vshll.u32 %v1762, 16
      %v2102 = vrot.slane %v2100, 5
      %v2103 = vsel %vm1767, %v2098, %v2102
      %v2105 = vshrl.u32 %v1745, 16
      %v2107 = vrot.slane %v2105, 4
      %v2108 = vshll.u32 %v1745, 16
      %v2110 = vrot.slane %v2108, 5
      %v2111 = vor.u32 %v2107, %v2110
      %v2112 = vrot.slane %v2111, 4
      %v2114 = vshll.u32 %v1746, 16
      %v2116 = vrot.slane %v2114, 5
      %v2117 = vsel %vm1767, %v2112, %v2116
      %v2118 = vshrl.u32 %v1746, 16
      %v2120 = vrot.slane %v2118, 4
      %v2121 = vor.u32 %v2120, %v2116
      %v2122 = vrot.slane %v2121, 4
      %v2124 = vshll.u32 %v1763, 16
      %v2126 = vrot.slane %v2124, 5
      %v2127 = vsel %vm1767, %v2122, %v2126
      %v2129 = vshrl.u32 %v1747, 16
      %v2131 = vrot.slane %v2129, 4
      %v2132 = vshll.u32 %v1747, 16
      %v2134 = vrot.slane %v2132, 5
      %v2135 = vor.u32 %v2131, %v2134
      %v2136 = vrot.slane %v2135, 4
      %v2138 = vshll.u32 %v1748, 16
      %v2140 = vrot.slane %v2138, 5
      %v2141 = vsel %vm1767, %v2136, %v2140
      %v2142 = vshrl.u32 %v1748, 16
      %v2144 = vrot.slane %v2142, 4
      %v2145 = vor.u32 %v2144, %v2140
      %v2146 = vrot.slane %v2145, 4
      %v2148 = vshll.u32 %v1764, 16
      %v2150 = vrot.slane %v2148, 5
      %v2151 = vsel %vm1767, %v2146, %v2150
      %v2152 = vld [vmem:[#allocation2] sm:$0xe]
      %v2153 = vld [vmem:[#allocation2 + $0xc] sm:$0xe]
      %v2154 = vld [vmem:[#allocation2 + $0x18] sm:$0xe]
      %v2155 = vld [vmem:[#allocation2 + $0x24] sm:$0xe]
      %v2156 = vld [vmem:[#allocation2 + $0x30] sm:$0xe]
      %v2157 = vld [vmem:[#allocation2 + $0x3c] sm:$0xe]
      %v2158 = vld [vmem:[#allocation2 + $0x48] sm:$0xe]
      %v2159 = vld [vmem:[#allocation2 + $0x54] sm:$0xe]
      %v2160 = vld [vmem:[#allocation2 + $0x60] sm:$0xe]
      %v2161 = vld [vmem:[#allocation2 + $0x6c] sm:$0xe]
      %v2162 = vld [vmem:[#allocation2 + $0x78] sm:$0xe]
      %v2163 = vld [vmem:[#allocation2 + $0x84] sm:$0xe]
      %v2164 = vld [vmem:[#allocation2 + $0x90] sm:$0xe]
      %v2165 = vld [vmem:[#allocation2 + $0x9c] sm:$0xe]
      %v2166 = vld [vmem:[#allocation2 + $0xa8] sm:$0xe]
      %v2167 = vld [vmem:[#allocation2 + $0xb4] sm:$0xe]
      %vm2216 = vcmask 1042432
      %vm2217 = vcmask 1046532
      %vm2218 = vmor %vm2216, %vm2217
      %v2219 = vrot.slane %v2152, 5
      %v2220 = vrot.slane %v2219, 4
      %v2221 = vrot.slane %v1718, 5
      %v2222 = vsel %vm2218, %v2220, %v2221
      %v2223 = vrot.slane %v2221, 4
      %v2224 = vrot.slane %v1749, 5
      %v2225 = vsel %vm2218, %v2223, %v2224
      %v2226 = vrot.slane %v2153, 5
      %v2227 = vrot.slane %v2226, 4
      %v2228 = vrot.slane %v1720, 5
      %v2229 = vsel %vm2218, %v2227, %v2228
      %v2230 = vrot.slane %v2228, 4
      %v2231 = vrot.slane %v1750, 5
      %v2232 = vsel %vm2218, %v2230, %v2231
      %v2233 = vrot.slane %v2154, 5
      %v2234 = vrot.slane %v2233, 4
      %v2235 = vrot.slane %v1722, 5
      %v2236 = vsel %vm2218, %v2234, %v2235
      %v2237 = vrot.slane %v2235, 4
      %v2238 = vrot.slane %v1751, 5
      %v2239 = vsel %vm2218, %v2237, %v2238
      %v2240 = vrot.slane %v2155, 5
      %v2241 = vrot.slane %v2240, 4
      %v2242 = vrot.slane %v1724, 5
      %v2243 = vsel %vm2218, %v2241, %v2242
      %v2244 = vrot.slane %v2242, 4
      %v2245 = vrot.slane %v1752, 5
      %v2246 = vsel %vm2218, %v2244, %v2245
      %v2247 = vrot.slane %v2156, 5
      %v2248 = vrot.slane %v2247, 4
      %v2249 = vrot.slane %v1726, 5
      %v2250 = vsel %vm2218, %v2248, %v2249
      %v2251 = vrot.slane %v2249, 4
      %v2252 = vrot.slane %v1753, 5
      %v2253 = vsel %vm2218, %v2251, %v2252
      %v2254 = vrot.slane %v2157, 5
      %v2255 = vrot.slane %v2254, 4
      %v2256 = vrot.slane %v1728, 5
      %v2257 = vsel %vm2218, %v2255, %v2256
      %v2258 = vrot.slane %v2256, 4
      %v2259 = vrot.slane %v1754, 5
      %v2260 = vsel %vm2218, %v2258, %v2259
      %v2261 = vrot.slane %v2158, 5
      %v2262 = vrot.slane %v2261, 4
      %v2263 = vrot.slane %v1730, 5
      %v2264 = vsel %vm2218, %v2262, %v2263
      %v2265 = vrot.slane %v2263, 4
      %v2266 = vrot.slane %v1755, 5
      %v2267 = vsel %vm2218, %v2265, %v2266
      %v2268 = vrot.slane %v2159, 5
      %v2269 = vrot.slane %v2268, 4
      %v2270 = vrot.slane %v1732, 5
      %v2271 = vsel %vm2218, %v2269, %v2270
      %v2272 = vrot.slane %v2270, 4
      %v2273 = vrot.slane %v1756, 5
      %v2274 = vsel %vm2218, %v2272, %v2273
      %v2275 = vrot.slane %v2160, 5
      %v2276 = vrot.slane %v2275, 4
      %v2277 = vrot.slane %v1734, 5
      %v2278 = vsel %vm2218, %v2276, %v2277
      %v2279 = vrot.slane %v2277, 4
      %v2280 = vrot.slane %v1757, 5
      %v2281 = vsel %vm2218, %v2279, %v2280
      %v2282 = vrot.slane %v2161, 5
      %v2283 = vrot.slane %v2282, 4
      %v2284 = vrot.slane %v1736, 5
      %v2285 = vsel %vm2218, %v2283, %v2284
      %v2286 = vrot.slane %v2284, 4
      %v2287 = vrot.slane %v1758, 5
      %v2288 = vsel %vm2218, %v2286, %v2287
      %v2289 = vrot.slane %v2162, 5
      %v2290 = vrot.slane %v2289, 4
      %v2291 = vrot.slane %v1738, 5
      %v2292 = vsel %vm2218, %v2290, %v2291
      %v2293 = vrot.slane %v2291, 4
      %v2294 = vrot.slane %v1759, 5
      %v2295 = vsel %vm2218, %v2293, %v2294
      %v2296 = vrot.slane %v2163, 5
      %v2297 = vrot.slane %v2296, 4
      %v2298 = vrot.slane %v1740, 5
      %v2299 = vsel %vm2218, %v2297, %v2298
      %v2300 = vrot.slane %v2298, 4
      %v2301 = vrot.slane %v1760, 5
      %v2302 = vsel %vm2218, %v2300, %v2301
      %v2303 = vrot.slane %v2164, 5
      %v2304 = vrot.slane %v2303, 4
      %v2305 = vrot.slane %v1742, 5
      %v2306 = vsel %vm2218, %v2304, %v2305
      %v2307 = vrot.slane %v2305, 4
      %v2308 = vrot.slane %v1761, 5
      %v2309 = vsel %vm2218, %v2307, %v2308
      %v2310 = vrot.slane %v2165, 5
      %v2311 = vrot.slane %v2310, 4
      %v2312 = vrot.slane %v1744, 5
      %v2313 = vsel %vm2218, %v2311, %v2312
      %v2314 = vrot.slane %v2312, 4
      %v2315 = vrot.slane %v1762, 5
      %v2316 = vsel %vm2218, %v2314, %v2315
      %v2317 = vrot.slane %v2166, 5
      %v2318 = vrot.slane %v2317, 4
      %v2319 = vrot.slane %v1746, 5
      %v2320 = vsel %vm2218, %v2318, %v2319
      %v2321 = vrot.slane %v2319, 4
      %v2322 = vrot.slane %v1763, 5
      %v2323 = vsel %vm2218, %v2321, %v2322
      %v2324 = vrot.slane %v2167, 5
      %v2325 = vrot.slane %v2324, 4
      %v2326 = vrot.slane %v1748, 5
      %v2327 = vsel %vm2218, %v2325, %v2326
      %v2328 = vrot.slane %v2326, 4
      %v2329 = vrot.slane %v1764, 5
      %v2330 = vsel %vm2218, %v2328, %v2329
      %v2347 = vunpack.c.l.b16 %v1717
      %v2348 = vunpack.c.l.b16 %v1718
      %v2349 = vunpack.c.l.b16 %v1719
      %v2350 = vunpack.c.l.b16 %v1720
      %v2351 = vunpack.c.l.b16 %v1721
      %v2352 = vunpack.c.l.b16 %v1722
      %v2353 = vunpack.c.l.b16 %v1723
      %v2354 = vunpack.c.l.b16 %v1724
      %v2355 = vunpack.c.l.b16 %v1725
      %v2356 = vunpack.c.l.b16 %v1726
      %v2357 = vunpack.c.l.b16 %v1727
      %v2358 = vunpack.c.l.b16 %v1728
      %v2359 = vunpack.c.l.b16 %v1729
      %v2360 = vunpack.c.l.b16 %v1730
      %v2361 = vunpack.c.l.b16 %v1731
      %v2362 = vunpack.c.l.b16 %v1732
      %v2363 = vunpack.c.l.b16 %v1733
      %v2364 = vunpack.c.l.b16 %v1734
      %v2365 = vunpack.c.l.b16 %v1735
      %v2366 = vunpack.c.l.b16 %v1736
      %v2367 = vunpack.c.l.b16 %v1737
      %v2368 = vunpack.c.l.b16 %v1738
      %v2369 = vunpack.c.l.b16 %v1739
      %v2370 = vunpack.c.l.b16 %v1740
      %v2371 = vunpack.c.l.b16 %v1741
      %v2372 = vunpack.c.l.b16 %v1742
      %v2373 = vunpack.c.l.b16 %v1743
      %v2374 = vunpack.c.l.b16 %v1744
      %v2375 = vunpack.c.l.b16 %v1745
      %v2376 = vunpack.c.l.b16 %v1746
      %v2377 = vunpack.c.l.b16 %v1747
      %v2378 = vunpack.c.l.b16 %v1748
      %v2379 = vpack.c.b16 %v2348, %v2347
      %v2380 = vpack.c.b16 %v2350, %v2349
      %v2381 = vpack.c.b16 %v2352, %v2351
      %v2382 = vpack.c.b16 %v2354, %v2353
      %v2383 = vpack.c.b16 %v2356, %v2355
      %v2384 = vpack.c.b16 %v2358, %v2357
      %v2385 = vpack.c.b16 %v2360, %v2359
      %v2386 = vpack.c.b16 %v2362, %v2361
      %v2387 = vpack.c.b16 %v2364, %v2363
      %v2388 = vpack.c.b16 %v2366, %v2365
      %v2389 = vpack.c.b16 %v2368, %v2367
      %v2390 = vpack.c.b16 %v2370, %v2369
      %v2391 = vpack.c.b16 %v2372, %v2371
      %v2392 = vpack.c.b16 %v2374, %v2373
      %v2393 = vpack.c.b16 %v2376, %v2375
      %v2394 = vpack.c.b16 %v2378, %v2377
      %v2411 = vunpack.c.l.b16 %v1781
      %v2412 = vunpack.c.l.b16 %v1791
      %v2413 = vunpack.c.l.b16 %v1805
      %v2414 = vunpack.c.l.b16 %v1815
      %v2415 = vunpack.c.l.b16 %v1829
      %v2416 = vunpack.c.l.b16 %v1839
      %v2417 = vunpack.c.l.b16 %v1853
      %v2418 = vunpack.c.l.b16 %v1863
      %v2419 = vunpack.c.l.b16 %v1877
      %v2420 = vunpack.c.l.b16 %v1887
      %v2421 = vunpack.c.l.b16 %v1901
      %v2422 = vunpack.c.l.b16 %v1911
      %v2423 = vunpack.c.l.b16 %v1925
      %v2424 = vunpack.c.l.b16 %v1935
      %v2425 = vunpack.c.l.b16 %v1949
      %v2426 = vunpack.c.l.b16 %v1959
      %v2427 = vunpack.c.l.b16 %v1973
      %v2428 = vunpack.c.l.b16 %v1983
      %v2429 = vunpack.c.l.b16 %v1997
      %v2430 = vunpack.c.l.b16 %v2007
      %v2431 = vunpack.c.l.b16 %v2021
      %v2432 = vunpack.c.l.b16 %v2031
      %v2433 = vunpack.c.l.b16 %v2045
      %v2434 = vunpack.c.l.b16 %v2055
      %v2435 = vunpack.c.l.b16 %v2069
      %v2436 = vunpack.c.l.b16 %v2079
      %v2437 = vunpack.c.l.b16 %v2093
      %v2438 = vunpack.c.l.b16 %v2103
      %v2439 = vunpack.c.l.b16 %v2117
      %v2440 = vunpack.c.l.b16 %v2127
      %v2441 = vunpack.c.l.b16 %v2141
      %v2442 = vunpack.c.l.b16 %v2151
      %v2443 = vpack.c.b16 %v2412, %v2411
      %v2444 = vpack.c.b16 %v2414, %v2413
      %v2445 = vpack.c.b16 %v2416, %v2415
      %v2446 = vpack.c.b16 %v2418, %v2417
      %v2447 = vpack.c.b16 %v2420, %v2419
      %v2448 = vpack.c.b16 %v2422, %v2421
      %v2449 = vpack.c.b16 %v2424, %v2423
      %v2450 = vpack.c.b16 %v2426, %v2425
      %v2451 = vpack.c.b16 %v2428, %v2427
      %v2452 = vpack.c.b16 %v2430, %v2429
      %v2453 = vpack.c.b16 %v2432, %v2431
      %v2454 = vpack.c.b16 %v2434, %v2433
      %v2455 = vpack.c.b16 %v2436, %v2435
      %v2456 = vpack.c.b16 %v2438, %v2437
      %v2457 = vpack.c.b16 %v2440, %v2439
      %v2458 = vpack.c.b16 %v2442, %v2441
      %v2475 = vunpack.c.l.b16 %v2222
      %v2476 = vunpack.c.l.b16 %v2225
      %v2477 = vunpack.c.l.b16 %v2229
      %v2478 = vunpack.c.l.b16 %v2232
      %v2479 = vunpack.c.l.b16 %v2236
      %v2480 = vunpack.c.l.b16 %v2239
      %v2481 = vunpack.c.l.b16 %v2243
      %v2482 = vunpack.c.l.b16 %v2246
      %v2483 = vunpack.c.l.b16 %v2250
      %v2484 = vunpack.c.l.b16 %v2253
      %v2485 = vunpack.c.l.b16 %v2257
      %v2486 = vunpack.c.l.b16 %v2260
      %v2487 = vunpack.c.l.b16 %v2264
      %v2488 = vunpack.c.l.b16 %v2267
      %v2489 = vunpack.c.l.b16 %v2271
      %v2490 = vunpack.c.l.b16 %v2274
      %v2491 = vunpack.c.l.b16 %v2278
      %v2492 = vunpack.c.l.b16 %v2281
      %v2493 = vunpack.c.l.b16 %v2285
      %v2494 = vunpack.c.l.b16 %v2288
      %v2495 = vunpack.c.l.b16 %v2292
      %v2496 = vunpack.c.l.b16 %v2295
      %v2497 = vunpack.c.l.b16 %v2299
      %v2498 = vunpack.c.l.b16 %v2302
      %v2499 = vunpack.c.l.b16 %v2306
      %v2500 = vunpack.c.l.b16 %v2309
      %v2501 = vunpack.c.l.b16 %v2313
      %v2502 = vunpack.c.l.b16 %v2316
      %v2503 = vunpack.c.l.b16 %v2320
      %v2504 = vunpack.c.l.b16 %v2323
      %v2505 = vunpack.c.l.b16 %v2327
      %v2506 = vunpack.c.l.b16 %v2330
      %v2507 = vpack.c.b16 %v2476, %v2475
      %v2508 = vpack.c.b16 %v2478, %v2477
      %v2509 = vpack.c.b16 %v2480, %v2479
      %v2510 = vpack.c.b16 %v2482, %v2481
      %v2511 = vpack.c.b16 %v2484, %v2483
      %v2512 = vpack.c.b16 %v2486, %v2485
      %v2513 = vpack.c.b16 %v2488, %v2487
      %v2514 = vpack.c.b16 %v2490, %v2489
      %v2515 = vpack.c.b16 %v2492, %v2491
      %v2516 = vpack.c.b16 %v2494, %v2493
      %v2517 = vpack.c.b16 %v2496, %v2495
      %v2518 = vpack.c.b16 %v2498, %v2497
      %v2519 = vpack.c.b16 %v2500, %v2499
      %v2520 = vpack.c.b16 %v2502, %v2501
      %v2521 = vpack.c.b16 %v2504, %v2503
      %v2522 = vpack.c.b16 %v2506, %v2505
      %v2539 = vld [vmem:[%s5] sm:$0xf]
      %v2540 = vld [vmem:[%s5 + $0x4] sm:$0xf]
      %v2541 = vld [vmem:[%s5 + $0x8] sm:$0xf]
      %v2542 = vld [vmem:[%s5 + $0xc] sm:$0xf]
      %v2543 = vld [vmem:[%s5 + $0x10] sm:$0xf]
      %v2544 = vld [vmem:[%s5 + $0x14] sm:$0xf]
      %v2545 = vld [vmem:[%s5 + $0x18] sm:$0xf]
      %v2546 = vld [vmem:[%s5 + $0x1c] sm:$0xf]
      %v2547 = vld [vmem:[%s5 + $0x20] sm:$0xf]
      %v2548 = vld [vmem:[%s5 + $0x24] sm:$0xf]
      %v2549 = vld [vmem:[%s5 + $0x28] sm:$0xf]
      %v2550 = vld [vmem:[%s5 + $0x2c] sm:$0xf]
      %v2551 = vld [vmem:[%s5 + $0x30] sm:$0xf]
      %v2552 = vld [vmem:[%s5 + $0x34] sm:$0xf]
      %v2553 = vld [vmem:[%s5 + $0x38] sm:$0xf]
      %v2554 = vld [vmem:[%s5 + $0x3c] sm:$0xf]
      %v2555 = vld [vmem:[%s5 + $0x40] sm:$0xf]
      %v2556 = vld [vmem:[%s5 + $0x44] sm:$0xf]
      %v2557 = vld [vmem:[%s5 + $0x48] sm:$0xf]
      %v2558 = vld [vmem:[%s5 + $0x4c] sm:$0xf]
      %v2559 = vld [vmem:[%s5 + $0x50] sm:$0xf]
      %v2560 = vld [vmem:[%s5 + $0x54] sm:$0xf]
      %v2561 = vld [vmem:[%s5 + $0x58] sm:$0xf]
      %v2562 = vld [vmem:[%s5 + $0x5c] sm:$0xf]
      %v2563 = vld [vmem:[%s5 + $0x60] sm:$0xf]
      %v2564 = vld [vmem:[%s5 + $0x64] sm:$0xf]
      %v2565 = vld [vmem:[%s5 + $0x68] sm:$0xf]
      %v2566 = vld [vmem:[%s5 + $0x6c] sm:$0xf]
      %v2567 = vld [vmem:[%s5 + $0x70] sm:$0xf]
      %v2568 = vld [vmem:[%s5 + $0x74] sm:$0xf]
      %v2569 = vld [vmem:[%s5 + $0x78] sm:$0xf]
      %v2570 = vld [vmem:[%s5 + $0x7c] sm:$0xf]
      %v2571 = vld [vmem:[%s5 + $0x80] sm:$0xf]
      %v2572 = vld [vmem:[%s5 + $0x84] sm:$0xf]
      %v2573 = vld [vmem:[%s5 + $0x88] sm:$0xf]
      %v2574 = vld [vmem:[%s5 + $0x8c] sm:$0xf]
      %v2575 = vld [vmem:[%s5 + $0x90] sm:$0xf]
      %v2576 = vld [vmem:[%s5 + $0x94] sm:$0xf]
      %v2577 = vld [vmem:[%s5 + $0x98] sm:$0xf]
      %v2578 = vld [vmem:[%s5 + $0x9c] sm:$0xf]
      %v2579 = vld [vmem:[%s5 + $0xa0] sm:$0xf]
      %v2580 = vld [vmem:[%s5 + $0xa4] sm:$0xf]
      %v2581 = vld [vmem:[%s5 + $0xa8] sm:$0xf]
      %v2582 = vld [vmem:[%s5 + $0xac] sm:$0xf]
      %v2583 = vld [vmem:[%s5 + $0xb0] sm:$0xf]
      %v2584 = vld [vmem:[%s5 + $0xb4] sm:$0xf]
      %v2585 = vld [vmem:[%s5 + $0xb8] sm:$0xf]
      %v2586 = vld [vmem:[%s5 + $0xbc] sm:$0xf]
      %v2587 = vld [vmem:[%s1602] sm:$0xf]
      %v2588 = vld [vmem:[%s1602 + $0x4] sm:$0xf]
      %v2589 = vld [vmem:[%s1602 + $0xc] sm:$0xf]
      %v2590 = vld [vmem:[%s1602 + $0x10] sm:$0xf]
      %v2591 = vld [vmem:[%s1602 + $0x18] sm:$0xf]
      %v2592 = vld [vmem:[%s1602 + $0x1c] sm:$0xf]
      %v2593 = vld [vmem:[%s1602 + $0x24] sm:$0xf]
      %v2594 = vld [vmem:[%s1602 + $0x28] sm:$0xf]
      %v2595 = vld [vmem:[%s1602 + $0x30] sm:$0xf]
      %v2596 = vld [vmem:[%s1602 + $0x34] sm:$0xf]
      %v2597 = vld [vmem:[%s1602 + $0x3c] sm:$0xf]
      %v2598 = vld [vmem:[%s1602 + $0x40] sm:$0xf]
      %v2599 = vld [vmem:[%s1602 + $0x48] sm:$0xf]
      %v2600 = vld [vmem:[%s1602 + $0x4c] sm:$0xf]
      %v2601 = vld [vmem:[%s1602 + $0x54] sm:$0xf]
      %v2602 = vld [vmem:[%s1602 + $0x58] sm:$0xf]
      %v2603 = vld [vmem:[%s1602 + $0x60] sm:$0xf]
      %v2604 = vld [vmem:[%s1602 + $0x64] sm:$0xf]
      %v2605 = vld [vmem:[%s1602 + $0x6c] sm:$0xf]
      %v2606 = vld [vmem:[%s1602 + $0x70] sm:$0xf]
      %v2607 = vld [vmem:[%s1602 + $0x78] sm:$0xf]
      %v2608 = vld [vmem:[%s1602 + $0x7c] sm:$0xf]
      %v2609 = vld [vmem:[%s1602 + $0x84] sm:$0xf]
      %v2610 = vld [vmem:[%s1602 + $0x88] sm:$0xf]
      %v2611 = vld [vmem:[%s1602 + $0x90] sm:$0xf]
      %v2612 = vld [vmem:[%s1602 + $0x94] sm:$0xf]
      %v2613 = vld [vmem:[%s1602 + $0x9c] sm:$0xf]
      %v2614 = vld [vmem:[%s1602 + $0xa0] sm:$0xf]
      %v2615 = vld [vmem:[%s1602 + $0xa8] sm:$0xf]
      %v2616 = vld [vmem:[%s1602 + $0xac] sm:$0xf]
      %v2617 = vld [vmem:[%s1602 + $0xb4] sm:$0xf]
      %v2618 = vld [vmem:[%s1602 + $0xb8] sm:$0xf]
      %v2619 = vld [vmem:[%s1602 + $0x8] sm:$0x1]
      %v2620 = vld [vmem:[%s1602 + $0x14] sm:$0x1]
      %v2621 = vld [vmem:[%s1602 + $0x20] sm:$0x1]
      %v2622 = vld [vmem:[%s1602 + $0x2c] sm:$0x1]
      %v2623 = vld [vmem:[%s1602 + $0x38] sm:$0x1]
      %v2624 = vld [vmem:[%s1602 + $0x44] sm:$0x1]
      %v2625 = vld [vmem:[%s1602 + $0x50] sm:$0x1]
      %v2626 = vld [vmem:[%s1602 + $0x5c] sm:$0x1]
      %v2627 = vld [vmem:[%s1602 + $0x68] sm:$0x1]
      %v2628 = vld [vmem:[%s1602 + $0x74] sm:$0x1]
      %v2629 = vld [vmem:[%s1602 + $0x80] sm:$0x1]
      %v2630 = vld [vmem:[%s1602 + $0x8c] sm:$0x1]
      %v2631 = vld [vmem:[%s1602 + $0x98] sm:$0x1]
      %v2632 = vld [vmem:[%s1602 + $0xa4] sm:$0x1]
      %v2633 = vld [vmem:[%s1602 + $0xb0] sm:$0x1]
      %v2634 = vld [vmem:[%s1602 + $0xbc] sm:$0x1]
      %v2636 = vshrl.u32 %v2587, 16
      %v2638 = vrot.slane %v2636, 4
      %v2639 = vshll.u32 %v2587, 16
      %v2641 = vrot.slane %v2639, 5
      %v2642 = vor.u32 %v2638, %v2641
      %v2643 = vrot.slane %v2642, 4
      %v2645 = vshll.u32 %v2588, 16
      %v2647 = vrot.slane %v2645, 5
      %v2648 = vsel %vm1767, %v2643, %v2647
      %v2649 = vshrl.u32 %v2588, 16
      %v2651 = vrot.slane %v2649, 4
      %v2652 = vor.u32 %v2651, %v2647
      %v2653 = vrot.slane %v2652, 4
      %v2655 = vshll.u32 %v2619, 16
      %v2657 = vrot.slane %v2655, 5
      %v2658 = vsel %vm1767, %v2653, %v2657
      %v2660 = vshrl.u32 %v2589, 16
      %v2662 = vrot.slane %v2660, 4
      %v2663 = vshll.u32 %v2589, 16
      %v2665 = vrot.slane %v2663, 5
      %v2666 = vor.u32 %v2662, %v2665
      %v2667 = vrot.slane %v2666, 4
      %v2669 = vshll.u32 %v2590, 16
      %v2671 = vrot.slane %v2669, 5
      %v2672 = vsel %vm1767, %v2667, %v2671
      %v2673 = vshrl.u32 %v2590, 16
      %v2675 = vrot.slane %v2673, 4
      %v2676 = vor.u32 %v2675, %v2671
      %v2677 = vrot.slane %v2676, 4
      %v2679 = vshll.u32 %v2620, 16
      %v2681 = vrot.slane %v2679, 5
      %v2682 = vsel %vm1767, %v2677, %v2681
      %v2684 = vshrl.u32 %v2591, 16
      %v2686 = vrot.slane %v2684, 4
      %v2687 = vshll.u32 %v2591, 16
      %v2689 = vrot.slane %v2687, 5
      %v2690 = vor.u32 %v2686, %v2689
      %v2691 = vrot.slane %v2690, 4
      %v2693 = vshll.u32 %v2592, 16
      %v2695 = vrot.slane %v2693, 5
      %v2696 = vsel %vm1767, %v2691, %v2695
      %v2697 = vshrl.u32 %v2592, 16
      %v2699 = vrot.slane %v2697, 4
      %v2700 = vor.u32 %v2699, %v2695
      %v2701 = vrot.slane %v2700, 4
      %v2703 = vshll.u32 %v2621, 16
      %v2705 = vrot.slane %v2703, 5
      %v2706 = vsel %vm1767, %v2701, %v2705
      %v2708 = vshrl.u32 %v2593, 16
      %v2710 = vrot.slane %v2708, 4
      %v2711 = vshll.u32 %v2593, 16
      %v2713 = vrot.slane %v2711, 5
      %v2714 = vor.u32 %v2710, %v2713
      %v2715 = vrot.slane %v2714, 4
      %v2717 = vshll.u32 %v2594, 16
      %v2719 = vrot.slane %v2717, 5
      %v2720 = vsel %vm1767, %v2715, %v2719
      %v2721 = vshrl.u32 %v2594, 16
      %v2723 = vrot.slane %v2721, 4
      %v2724 = vor.u32 %v2723, %v2719
      %v2725 = vrot.slane %v2724, 4
      %v2727 = vshll.u32 %v2622, 16
      %v2729 = vrot.slane %v2727, 5
      %v2730 = vsel %vm1767, %v2725, %v2729
      %v2732 = vshrl.u32 %v2595, 16
      %v2734 = vrot.slane %v2732, 4
      %v2735 = vshll.u32 %v2595, 16
      %v2737 = vrot.slane %v2735, 5
      %v2738 = vor.u32 %v2734, %v2737
      %v2739 = vrot.slane %v2738, 4
      %v2741 = vshll.u32 %v2596, 16
      %v2743 = vrot.slane %v2741, 5
      %v2744 = vsel %vm1767, %v2739, %v2743
      %v2745 = vshrl.u32 %v2596, 16
      %v2747 = vrot.slane %v2745, 4
      %v2748 = vor.u32 %v2747, %v2743
      %v2749 = vrot.slane %v2748, 4
      %v2751 = vshll.u32 %v2623, 16
      %v2753 = vrot.slane %v2751, 5
      %v2754 = vsel %vm1767, %v2749, %v2753
      %v2756 = vshrl.u32 %v2597, 16
      %v2758 = vrot.slane %v2756, 4
      %v2759 = vshll.u32 %v2597, 16
      %v2761 = vrot.slane %v2759, 5
      %v2762 = vor.u32 %v2758, %v2761
      %v2763 = vrot.slane %v2762, 4
      %v2765 = vshll.u32 %v2598, 16
      %v2767 = vrot.slane %v2765, 5
      %v2768 = vsel %vm1767, %v2763, %v2767
      %v2769 = vshrl.u32 %v2598, 16
      %v2771 = vrot.slane %v2769, 4
      %v2772 = vor.u32 %v2771, %v2767
      %v2773 = vrot.slane %v2772, 4
      %v2775 = vshll.u32 %v2624, 16
      %v2777 = vrot.slane %v2775, 5
      %v2778 = vsel %vm1767, %v2773, %v2777
      %v2780 = vshrl.u32 %v2599, 16
      %v2782 = vrot.slane %v2780, 4
      %v2783 = vshll.u32 %v2599, 16
      %v2785 = vrot.slane %v2783, 5
      %v2786 = vor.u32 %v2782, %v2785
      %v2787 = vrot.slane %v2786, 4
      %v2789 = vshll.u32 %v2600, 16
      %v2791 = vrot.slane %v2789, 5
      %v2792 = vsel %vm1767, %v2787, %v2791
      %v2793 = vshrl.u32 %v2600, 16
      %v2795 = vrot.slane %v2793, 4
      %v2796 = vor.u32 %v2795, %v2791
      %v2797 = vrot.slane %v2796, 4
      %v2799 = vshll.u32 %v2625, 16
      %v2801 = vrot.slane %v2799, 5
      %v2802 = vsel %vm1767, %v2797, %v2801
      %v2804 = vshrl.u32 %v2601, 16
      %v2806 = vrot.slane %v2804, 4
      %v2807 = vshll.u32 %v2601, 16
      %v2809 = vrot.slane %v2807, 5
      %v2810 = vor.u32 %v2806, %v2809
      %v2811 = vrot.slane %v2810, 4
      %v2813 = vshll.u32 %v2602, 16
      %v2815 = vrot.slane %v2813, 5
      %v2816 = vsel %vm1767, %v2811, %v2815
      %v2817 = vshrl.u32 %v2602, 16
      %v2819 = vrot.slane %v2817, 4
      %v2820 = vor.u32 %v2819, %v2815
      %v2821 = vrot.slane %v2820, 4
      %v2823 = vshll.u32 %v2626, 16
      %v2825 = vrot.slane %v2823, 5
      %v2826 = vsel %vm1767, %v2821, %v2825
      %v2828 = vshrl.u32 %v2603, 16
      %v2830 = vrot.slane %v2828, 4
      %v2831 = vshll.u32 %v2603, 16
      %v2833 = vrot.slane %v2831, 5
      %v2834 = vor.u32 %v2830, %v2833
      %v2835 = vrot.slane %v2834, 4
      %v2837 = vshll.u32 %v2604, 16
      %v2839 = vrot.slane %v2837, 5
      %v2840 = vsel %vm1767, %v2835, %v2839
      %v2841 = vshrl.u32 %v2604, 16
      %v2843 = vrot.slane %v2841, 4
      %v2844 = vor.u32 %v2843, %v2839
      %v2845 = vrot.slane %v2844, 4
      %v2847 = vshll.u32 %v2627, 16
      %v2849 = vrot.slane %v2847, 5
      %v2850 = vsel %vm1767, %v2845, %v2849
      %v2852 = vshrl.u32 %v2605, 16
      %v2854 = vrot.slane %v2852, 4
      %v2855 = vshll.u32 %v2605, 16
      %v2857 = vrot.slane %v2855, 5
      %v2858 = vor.u32 %v2854, %v2857
      %v2859 = vrot.slane %v2858, 4
      %v2861 = vshll.u32 %v2606, 16
      %v2863 = vrot.slane %v2861, 5
      %v2864 = vsel %vm1767, %v2859, %v2863
      %v2865 = vshrl.u32 %v2606, 16
      %v2867 = vrot.slane %v2865, 4
      %v2868 = vor.u32 %v2867, %v2863
      %v2869 = vrot.slane %v2868, 4
      %v2871 = vshll.u32 %v2628, 16
      %v2873 = vrot.slane %v2871, 5
      %v2874 = vsel %vm1767, %v2869, %v2873
      %v2876 = vshrl.u32 %v2607, 16
      %v2878 = vrot.slane %v2876, 4
      %v2879 = vshll.u32 %v2607, 16
      %v2881 = vrot.slane %v2879, 5
      %v2882 = vor.u32 %v2878, %v2881
      %v2883 = vrot.slane %v2882, 4
      %v2885 = vshll.u32 %v2608, 16
      %v2887 = vrot.slane %v2885, 5
      %v2888 = vsel %vm1767, %v2883, %v2887
      %v2889 = vshrl.u32 %v2608, 16
      %v2891 = vrot.slane %v2889, 4
      %v2892 = vor.u32 %v2891, %v2887
      %v2893 = vrot.slane %v2892, 4
      %v2895 = vshll.u32 %v2629, 16
      %v2897 = vrot.slane %v2895, 5
      %v2898 = vsel %vm1767, %v2893, %v2897
      %v2900 = vshrl.u32 %v2609, 16
      %v2902 = vrot.slane %v2900, 4
      %v2903 = vshll.u32 %v2609, 16
      %v2905 = vrot.slane %v2903, 5
      %v2906 = vor.u32 %v2902, %v2905
      %v2907 = vrot.slane %v2906, 4
      %v2909 = vshll.u32 %v2610, 16
      %v2911 = vrot.slane %v2909, 5
      %v2912 = vsel %vm1767, %v2907, %v2911
      %v2913 = vshrl.u32 %v2610, 16
      %v2915 = vrot.slane %v2913, 4
      %v2916 = vor.u32 %v2915, %v2911
      %v2917 = vrot.slane %v2916, 4
      %v2919 = vshll.u32 %v2630, 16
      %v2921 = vrot.slane %v2919, 5
      %v2922 = vsel %vm1767, %v2917, %v2921
      %v2924 = vshrl.u32 %v2611, 16
      %v2926 = vrot.slane %v2924, 4
      %v2927 = vshll.u32 %v2611, 16
      %v2929 = vrot.slane %v2927, 5
      %v2930 = vor.u32 %v2926, %v2929
      %v2931 = vrot.slane %v2930, 4
      %v2933 = vshll.u32 %v2612, 16
      %v2935 = vrot.slane %v2933, 5
      %v2936 = vsel %vm1767, %v2931, %v2935
      %v2937 = vshrl.u32 %v2612, 16
      %v2939 = vrot.slane %v2937, 4
      %v2940 = vor.u32 %v2939, %v2935
      %v2941 = vrot.slane %v2940, 4
      %v2943 = vshll.u32 %v2631, 16
      %v2945 = vrot.slane %v2943, 5
      %v2946 = vsel %vm1767, %v2941, %v2945
      %v2948 = vshrl.u32 %v2613, 16
      %v2950 = vrot.slane %v2948, 4
      %v2951 = vshll.u32 %v2613, 16
      %v2953 = vrot.slane %v2951, 5
      %v2954 = vor.u32 %v2950, %v2953
      %v2955 = vrot.slane %v2954, 4
      %v2957 = vshll.u32 %v2614, 16
      %v2959 = vrot.slane %v2957, 5
      %v2960 = vsel %vm1767, %v2955, %v2959
      %v2961 = vshrl.u32 %v2614, 16
      %v2963 = vrot.slane %v2961, 4
      %v2964 = vor.u32 %v2963, %v2959
      %v2965 = vrot.slane %v2964, 4
      %v2967 = vshll.u32 %v2632, 16
      %v2969 = vrot.slane %v2967, 5
      %v2970 = vsel %vm1767, %v2965, %v2969
      %v2972 = vshrl.u32 %v2615, 16
      %v2974 = vrot.slane %v2972, 4
      %v2975 = vshll.u32 %v2615, 16
      %v2977 = vrot.slane %v2975, 5
      %v2978 = vor.u32 %v2974, %v2977
      %v2979 = vrot.slane %v2978, 4
      %v2981 = vshll.u32 %v2616, 16
      %v2983 = vrot.slane %v2981, 5
      %v2984 = vsel %vm1767, %v2979, %v2983
      %v2985 = vshrl.u32 %v2616, 16
      %v2987 = vrot.slane %v2985, 4
      %v2988 = vor.u32 %v2987, %v2983
      %v2989 = vrot.slane %v2988, 4
      %v2991 = vshll.u32 %v2633, 16
      %v2993 = vrot.slane %v2991, 5
      %v2994 = vsel %vm1767, %v2989, %v2993
      %v2996 = vshrl.u32 %v2617, 16
      %v2998 = vrot.slane %v2996, 4
      %v2999 = vshll.u32 %v2617, 16
      %v3001 = vrot.slane %v2999, 5
      %v3002 = vor.u32 %v2998, %v3001
      %v3003 = vrot.slane %v3002, 4
      %v3005 = vshll.u32 %v2618, 16
      %v3007 = vrot.slane %v3005, 5
      %v3008 = vsel %vm1767, %v3003, %v3007
      %v3009 = vshrl.u32 %v2618, 16
      %v3011 = vrot.slane %v3009, 4
      %v3012 = vor.u32 %v3011, %v3007
      %v3013 = vrot.slane %v3012, 4
      %v3015 = vshll.u32 %v2634, 16
      %v3017 = vrot.slane %v3015, 5
      %v3018 = vsel %vm1767, %v3013, %v3017
      %v3019 = vld [vmem:[%s1602] sm:$0xe]
      %v3020 = vld [vmem:[%s1602 + $0xc] sm:$0xe]
      %v3021 = vld [vmem:[%s1602 + $0x18] sm:$0xe]
      %v3022 = vld [vmem:[%s1602 + $0x24] sm:$0xe]
      %v3023 = vld [vmem:[%s1602 + $0x30] sm:$0xe]
      %v3024 = vld [vmem:[%s1602 + $0x3c] sm:$0xe]
      %v3025 = vld [vmem:[%s1602 + $0x48] sm:$0xe]
      %v3026 = vld [vmem:[%s1602 + $0x54] sm:$0xe]
      %v3027 = vld [vmem:[%s1602 + $0x60] sm:$0xe]
      %v3028 = vld [vmem:[%s1602 + $0x6c] sm:$0xe]
      %v3029 = vld [vmem:[%s1602 + $0x78] sm:$0xe]
      %v3030 = vld [vmem:[%s1602 + $0x84] sm:$0xe]
      %v3031 = vld [vmem:[%s1602 + $0x90] sm:$0xe]
      %v3032 = vld [vmem:[%s1602 + $0x9c] sm:$0xe]
      %v3033 = vld [vmem:[%s1602 + $0xa8] sm:$0xe]
      %v3034 = vld [vmem:[%s1602 + $0xb4] sm:$0xe]
      %v3083 = vrot.slane %v3019, 5
      %v3084 = vrot.slane %v3083, 4
      %v3085 = vrot.slane %v2588, 5
      %v3086 = vsel %vm2218, %v3084, %v3085
      %v3087 = vrot.slane %v3085, 4
      %v3088 = vrot.slane %v2619, 5
      %v3089 = vsel %vm2218, %v3087, %v3088
      %v3090 = vrot.slane %v3020, 5
      %v3091 = vrot.slane %v3090, 4
      %v3092 = vrot.slane %v2590, 5
      %v3093 = vsel %vm2218, %v3091, %v3092
      %v3094 = vrot.slane %v3092, 4
      %v3095 = vrot.slane %v2620, 5
      %v3096 = vsel %vm2218, %v3094, %v3095
      %v3097 = vrot.slane %v3021, 5
      %v3098 = vrot.slane %v3097, 4
      %v3099 = vrot.slane %v2592, 5
      %v3100 = vsel %vm2218, %v3098, %v3099
      %v3101 = vrot.slane %v3099, 4
      %v3102 = vrot.slane %v2621, 5
      %v3103 = vsel %vm2218, %v3101, %v3102
      %v3104 = vrot.slane %v3022, 5
      %v3105 = vrot.slane %v3104, 4
      %v3106 = vrot.slane %v2594, 5
      %v3107 = vsel %vm2218, %v3105, %v3106
      %v3108 = vrot.slane %v3106, 4
      %v3109 = vrot.slane %v2622, 5
      %v3110 = vsel %vm2218, %v3108, %v3109
      %v3111 = vrot.slane %v3023, 5
      %v3112 = vrot.slane %v3111, 4
      %v3113 = vrot.slane %v2596, 5
      %v3114 = vsel %vm2218, %v3112, %v3113
      %v3115 = vrot.slane %v3113, 4
      %v3116 = vrot.slane %v2623, 5
      %v3117 = vsel %vm2218, %v3115, %v3116
      %v3118 = vrot.slane %v3024, 5
      %v3119 = vrot.slane %v3118, 4
      %v3120 = vrot.slane %v2598, 5
      %v3121 = vsel %vm2218, %v3119, %v3120
      %v3122 = vrot.slane %v3120, 4
      %v3123 = vrot.slane %v2624, 5
      %v3124 = vsel %vm2218, %v3122, %v3123
      %v3125 = vrot.slane %v3025, 5
      %v3126 = vrot.slane %v3125, 4
      %v3127 = vrot.slane %v2600, 5
      %v3128 = vsel %vm2218, %v3126, %v3127
      %v3129 = vrot.slane %v3127, 4
      %v3130 = vrot.slane %v2625, 5
      %v3131 = vsel %vm2218, %v3129, %v3130
      %v3132 = vrot.slane %v3026, 5
      %v3133 = vrot.slane %v3132, 4
      %v3134 = vrot.slane %v2602, 5
      %v3135 = vsel %vm2218, %v3133, %v3134
      %v3136 = vrot.slane %v3134, 4
      %v3137 = vrot.slane %v2626, 5
      %v3138 = vsel %vm2218, %v3136, %v3137
      %v3139 = vrot.slane %v3027, 5
      %v3140 = vrot.slane %v3139, 4
      %v3141 = vrot.slane %v2604, 5
      %v3142 = vsel %vm2218, %v3140, %v3141
      %v3143 = vrot.slane %v3141, 4
      %v3144 = vrot.slane %v2627, 5
      %v3145 = vsel %vm2218, %v3143, %v3144
      %v3146 = vrot.slane %v3028, 5
      %v3147 = vrot.slane %v3146, 4
      %v3148 = vrot.slane %v2606, 5
      %v3149 = vsel %vm2218, %v3147, %v3148
      %v3150 = vrot.slane %v3148, 4
      %v3151 = vrot.slane %v2628, 5
      %v3152 = vsel %vm2218, %v3150, %v3151
      %v3153 = vrot.slane %v3029, 5
      %v3154 = vrot.slane %v3153, 4
      %v3155 = vrot.slane %v2608, 5
      %v3156 = vsel %vm2218, %v3154, %v3155
      %v3157 = vrot.slane %v3155, 4
      %v3158 = vrot.slane %v2629, 5
      %v3159 = vsel %vm2218, %v3157, %v3158
      %v3160 = vrot.slane %v3030, 5
      %v3161 = vrot.slane %v3160, 4
      %v3162 = vrot.slane %v2610, 5
      %v3163 = vsel %vm2218, %v3161, %v3162
      %v3164 = vrot.slane %v3162, 4
      %v3165 = vrot.slane %v2630, 5
      %v3166 = vsel %vm2218, %v3164, %v3165
      %v3167 = vrot.slane %v3031, 5
      %v3168 = vrot.slane %v3167, 4
      %v3169 = vrot.slane %v2612, 5
      %v3170 = vsel %vm2218, %v3168, %v3169
      %v3171 = vrot.slane %v3169, 4
      %v3172 = vrot.slane %v2631, 5
      %v3173 = vsel %vm2218, %v3171, %v3172
      %v3174 = vrot.slane %v3032, 5
      %v3175 = vrot.slane %v3174, 4
      %v3176 = vrot.slane %v2614, 5
      %v3177 = vsel %vm2218, %v3175, %v3176
      %v3178 = vrot.slane %v3176, 4
      %v3179 = vrot.slane %v2632, 5
      %v3180 = vsel %vm2218, %v3178, %v3179
      %v3181 = vrot.slane %v3033, 5
      %v3182 = vrot.slane %v3181, 4
      %v3183 = vrot.slane %v2616, 5
      %v3184 = vsel %vm2218, %v3182, %v3183
      %v3185 = vrot.slane %v3183, 4
      %v3186 = vrot.slane %v2633, 5
      %v3187 = vsel %vm2218, %v3185, %v3186
      %v3188 = vrot.slane %v3034, 5
      %v3189 = vrot.slane %v3188, 4
      %v3190 = vrot.slane %v2618, 5
      %v3191 = vsel %vm2218, %v3189, %v3190
      %v3192 = vrot.slane %v3190, 4
      %v3193 = vrot.slane %v2634, 5
      %v3194 = vsel %vm2218, %v3192, %v3193
      %v3211 = vunpack.c.l.b16 %v2587
      %v3212 = vunpack.c.l.b16 %v2588
      %v3213 = vunpack.c.l.b16 %v2589
      %v3214 = vunpack.c.l.b16 %v2590
      %v3215 = vunpack.c.l.b16 %v2591
      %v3216 = vunpack.c.l.b16 %v2592
      %v3217 = vunpack.c.l.b16 %v2593
      %v3218 = vunpack.c.l.b16 %v2594
      %v3219 = vunpack.c.l.b16 %v2595
      %v3220 = vunpack.c.l.b16 %v2596
      %v3221 = vunpack.c.l.b16 %v2597
      %v3222 = vunpack.c.l.b16 %v2598
      %v3223 = vunpack.c.l.b16 %v2599
      %v3224 = vunpack.c.l.b16 %v2600
      %v3225 = vunpack.c.l.b16 %v2601
      %v3226 = vunpack.c.l.b16 %v2602
      %v3227 = vunpack.c.l.b16 %v2603
      %v3228 = vunpack.c.l.b16 %v2604
      %v3229 = vunpack.c.l.b16 %v2605
      %v3230 = vunpack.c.l.b16 %v2606
      %v3231 = vunpack.c.l.b16 %v2607
      %v3232 = vunpack.c.l.b16 %v2608
      %v3233 = vunpack.c.l.b16 %v2609
      %v3234 = vunpack.c.l.b16 %v2610
      %v3235 = vunpack.c.l.b16 %v2611
      %v3236 = vunpack.c.l.b16 %v2612
      %v3237 = vunpack.c.l.b16 %v2613
      %v3238 = vunpack.c.l.b16 %v2614
      %v3239 = vunpack.c.l.b16 %v2615
      %v3240 = vunpack.c.l.b16 %v2616
      %v3241 = vunpack.c.l.b16 %v2617
      %v3242 = vunpack.c.l.b16 %v2618
      %v3243 = vpack.c.b16 %v3212, %v3211
      %v3244 = vpack.c.b16 %v3214, %v3213
      %v3245 = vpack.c.b16 %v3216, %v3215
      %v3246 = vpack.c.b16 %v3218, %v3217
      %v3247 = vpack.c.b16 %v3220, %v3219
      %v3248 = vpack.c.b16 %v3222, %v3221
      %v3249 = vpack.c.b16 %v3224, %v3223
      %v3250 = vpack.c.b16 %v3226, %v3225
      %v3251 = vpack.c.b16 %v3228, %v3227
      %v3252 = vpack.c.b16 %v3230, %v3229
      %v3253 = vpack.c.b16 %v3232, %v3231
      %v3254 = vpack.c.b16 %v3234, %v3233
      %v3255 = vpack.c.b16 %v3236, %v3235
      %v3256 = vpack.c.b16 %v3238, %v3237
      %v3257 = vpack.c.b16 %v3240, %v3239
      %v3258 = vpack.c.b16 %v3242, %v3241
      %v3275 = vunpack.c.l.b16 %v2648
      %v3276 = vunpack.c.l.b16 %v2658
      %v3277 = vunpack.c.l.b16 %v2672
      %v3278 = vunpack.c.l.b16 %v2682
      %v3279 = vunpack.c.l.b16 %v2696
      %v3280 = vunpack.c.l.b16 %v2706
      %v3281 = vunpack.c.l.b16 %v2720
      %v3282 = vunpack.c.l.b16 %v2730
      %v3283 = vunpack.c.l.b16 %v2744
      %v3284 = vunpack.c.l.b16 %v2754
      %v3285 = vunpack.c.l.b16 %v2768
      %v3286 = vunpack.c.l.b16 %v2778
      %v3287 = vunpack.c.l.b16 %v2792
      %v3288 = vunpack.c.l.b16 %v2802
      %v3289 = vunpack.c.l.b16 %v2816
      %v3290 = vunpack.c.l.b16 %v2826
      %v3291 = vunpack.c.l.b16 %v2840
      %v3292 = vunpack.c.l.b16 %v2850
      %v3293 = vunpack.c.l.b16 %v2864
      %v3294 = vunpack.c.l.b16 %v2874
      %v3295 = vunpack.c.l.b16 %v2888
      %v3296 = vunpack.c.l.b16 %v2898
      %v3297 = vunpack.c.l.b16 %v2912
      %v3298 = vunpack.c.l.b16 %v2922
      %v3299 = vunpack.c.l.b16 %v2936
      %v3300 = vunpack.c.l.b16 %v2946
      %v3301 = vunpack.c.l.b16 %v2960
      %v3302 = vunpack.c.l.b16 %v2970
      %v3303 = vunpack.c.l.b16 %v2984
      %v3304 = vunpack.c.l.b16 %v2994
      %v3305 = vunpack.c.l.b16 %v3008
      %v3306 = vunpack.c.l.b16 %v3018
      %v3307 = vpack.c.b16 %v3276, %v3275
      %v3308 = vpack.c.b16 %v3278, %v3277
      %v3309 = vpack.c.b16 %v3280, %v3279
      %v3310 = vpack.c.b16 %v3282, %v3281
      %v3311 = vpack.c.b16 %v3284, %v3283
      %v3312 = vpack.c.b16 %v3286, %v3285
      %v3313 = vpack.c.b16 %v3288, %v3287
      %v3314 = vpack.c.b16 %v3290, %v3289
      %v3315 = vpack.c.b16 %v3292, %v3291
      %v3316 = vpack.c.b16 %v3294, %v3293
      %v3317 = vpack.c.b16 %v3296, %v3295
      %v3318 = vpack.c.b16 %v3298, %v3297
      %v3319 = vpack.c.b16 %v3300, %v3299
      %v3320 = vpack.c.b16 %v3302, %v3301
      %v3321 = vpack.c.b16 %v3304, %v3303
      %v3322 = vpack.c.b16 %v3306, %v3305
      %v3339 = vunpack.c.l.b16 %v3086
      %v3340 = vunpack.c.l.b16 %v3089
      %v3341 = vunpack.c.l.b16 %v3093
      %v3342 = vunpack.c.l.b16 %v3096
      %v3343 = vunpack.c.l.b16 %v3100
      %v3344 = vunpack.c.l.b16 %v3103
      %v3345 = vunpack.c.l.b16 %v3107
      %v3346 = vunpack.c.l.b16 %v3110
      %v3347 = vunpack.c.l.b16 %v3114
      %v3348 = vunpack.c.l.b16 %v3117
      %v3349 = vunpack.c.l.b16 %v3121
      %v3350 = vunpack.c.l.b16 %v3124
      %v3351 = vunpack.c.l.b16 %v3128
      %v3352 = vunpack.c.l.b16 %v3131
      %v3353 = vunpack.c.l.b16 %v3135
      %v3354 = vunpack.c.l.b16 %v3138
      %v3355 = vunpack.c.l.b16 %v3142
      %v3356 = vunpack.c.l.b16 %v3145
      %v3357 = vunpack.c.l.b16 %v3149
      %v3358 = vunpack.c.l.b16 %v3152
      %v3359 = vunpack.c.l.b16 %v3156
      %v3360 = vunpack.c.l.b16 %v3159
      %v3361 = vunpack.c.l.b16 %v3163
      %v3362 = vunpack.c.l.b16 %v3166
      %v3363 = vunpack.c.l.b16 %v3170
      %v3364 = vunpack.c.l.b16 %v3173
      %v3365 = vunpack.c.l.b16 %v3177
      %v3366 = vunpack.c.l.b16 %v3180
      %v3367 = vunpack.c.l.b16 %v3184
      %v3368 = vunpack.c.l.b16 %v3187
      %v3369 = vunpack.c.l.b16 %v3191
      %v3370 = vunpack.c.l.b16 %v3194
      %v3371 = vpack.c.b16 %v3340, %v3339
      %v3372 = vpack.c.b16 %v3342, %v3341
      %v3373 = vpack.c.b16 %v3344, %v3343
      %v3374 = vpack.c.b16 %v3346, %v3345
      %v3375 = vpack.c.b16 %v3348, %v3347
      %v3376 = vpack.c.b16 %v3350, %v3349
      %v3377 = vpack.c.b16 %v3352, %v3351
      %v3378 = vpack.c.b16 %v3354, %v3353
      %v3379 = vpack.c.b16 %v3356, %v3355
      %v3380 = vpack.c.b16 %v3358, %v3357
      %v3381 = vpack.c.b16 %v3360, %v3359
      %v3382 = vpack.c.b16 %v3362, %v3361
      %v3383 = vpack.c.b16 %v3364, %v3363
      %v3384 = vpack.c.b16 %v3366, %v3365
      %v3385 = vpack.c.b16 %v3368, %v3367
      %v3386 = vpack.c.b16 %v3370, %v3369
      %v3403 = vld [vmem:[%s5 + $0xc0] sm:$0xf]
      %v3404 = vld [vmem:[%s5 + $0xc4] sm:$0xf]
      %v3405 = vld [vmem:[%s5 + $0xc8] sm:$0xf]
      %v3406 = vld [vmem:[%s5 + $0xcc] sm:$0xf]
      %v3407 = vld [vmem:[%s5 + $0xd0] sm:$0xf]
      %v3408 = vld [vmem:[%s5 + $0xd4] sm:$0xf]
      %v3409 = vld [vmem:[%s5 + $0xd8] sm:$0xf]
      %v3410 = vld [vmem:[%s5 + $0xdc] sm:$0xf]
      %v3411 = vld [vmem:[%s5 + $0xe0] sm:$0xf]
      %v3412 = vld [vmem:[%s5 + $0xe4] sm:$0xf]
      %v3413 = vld [vmem:[%s5 + $0xe8] sm:$0xf]
      %v3414 = vld [vmem:[%s5 + $0xec] sm:$0xf]
      %v3415 = vld [vmem:[%s5 + $0xf0] sm:$0xf]
      %v3416 = vld [vmem:[%s5 + $0xf4] sm:$0xf]
      %v3417 = vld [vmem:[%s5 + $0xf8] sm:$0xf]
      %v3418 = vld [vmem:[%s5 + $0xfc] sm:$0xf]
      %v3419 = vld [vmem:[%s5 + $0x100] sm:$0xf]
      %v3420 = vld [vmem:[%s5 + $0x104] sm:$0xf]
      %v3421 = vld [vmem:[%s5 + $0x108] sm:$0xf]
      %v3422 = vld [vmem:[%s5 + $0x10c] sm:$0xf]
      %v3423 = vld [vmem:[%s5 + $0x110] sm:$0xf]
      %v3424 = vld [vmem:[%s5 + $0x114] sm:$0xf]
      %v3425 = vld [vmem:[%s5 + $0x118] sm:$0xf]
      %v3426 = vld [vmem:[%s5 + $0x11c] sm:$0xf]
      %v3427 = vld [vmem:[%s5 + $0x120] sm:$0xf]
      %v3428 = vld [vmem:[%s5 + $0x124] sm:$0xf]
      %v3429 = vld [vmem:[%s5 + $0x128] sm:$0xf]
      %v3430 = vld [vmem:[%s5 + $0x12c] sm:$0xf]
      %v3431 = vld [vmem:[%s5 + $0x130] sm:$0xf]
      %v3432 = vld [vmem:[%s5 + $0x134] sm:$0xf]
      %v3433 = vld [vmem:[%s5 + $0x138] sm:$0xf]
      %v3434 = vld [vmem:[%s5 + $0x13c] sm:$0xf]
      %v3435 = vld [vmem:[%s5 + $0x140] sm:$0xf]
      %v3436 = vld [vmem:[%s5 + $0x144] sm:$0xf]
      %v3437 = vld [vmem:[%s5 + $0x148] sm:$0xf]
      %v3438 = vld [vmem:[%s5 + $0x14c] sm:$0xf]
      %v3439 = vld [vmem:[%s5 + $0x150] sm:$0xf]
      %v3440 = vld [vmem:[%s5 + $0x154] sm:$0xf]
      %v3441 = vld [vmem:[%s5 + $0x158] sm:$0xf]
      %v3442 = vld [vmem:[%s5 + $0x15c] sm:$0xf]
      %v3443 = vld [vmem:[%s5 + $0x160] sm:$0xf]
      %v3444 = vld [vmem:[%s5 + $0x164] sm:$0xf]
      %v3445 = vld [vmem:[%s5 + $0x168] sm:$0xf]
      %v3446 = vld [vmem:[%s5 + $0x16c] sm:$0xf]
      %v3447 = vld [vmem:[%s5 + $0x170] sm:$0xf]
      %v3448 = vld [vmem:[%s5 + $0x174] sm:$0xf]
      %v3449 = vld [vmem:[%s5 + $0x178] sm:$0xf]
      %v3450 = vld [vmem:[%s5 + $0x17c] sm:$0xf]
      %v3499 = vunpack.c.l.b16 %v3403
      %v3500 = vunpack.c.l.b16 %v3404
      %v3501 = vunpack.c.l.b16 %v3405
      %v3502 = vunpack.c.l.b16 %v3406
      %v3503 = vunpack.c.l.b16 %v3407
      %v3504 = vunpack.c.l.b16 %v3408
      %v3505 = vunpack.c.l.b16 %v3409
      %v3506 = vunpack.c.l.b16 %v3410
      %v3507 = vunpack.c.l.b16 %v3411
      %v3508 = vunpack.c.l.b16 %v3412
      %v3509 = vunpack.c.l.b16 %v3413
      %v3510 = vunpack.c.l.b16 %v3414
      %v3511 = vunpack.c.l.b16 %v3415
      %v3512 = vunpack.c.l.b16 %v3416
      %v3513 = vunpack.c.l.b16 %v3417
      %v3514 = vunpack.c.l.b16 %v3418
      %v3515 = vunpack.c.l.b16 %v3419
      %v3516 = vunpack.c.l.b16 %v3420
      %v3517 = vunpack.c.l.b16 %v3421
      %v3518 = vunpack.c.l.b16 %v3422
      %v3519 = vunpack.c.l.b16 %v3423
      %v3520 = vunpack.c.l.b16 %v3424
      %v3521 = vunpack.c.l.b16 %v3425
      %v3522 = vunpack.c.l.b16 %v3426
      %v3523 = vunpack.c.l.b16 %v3427
      %v3524 = vunpack.c.l.b16 %v3428
      %v3525 = vunpack.c.l.b16 %v3429
      %v3526 = vunpack.c.l.b16 %v3430
      %v3527 = vunpack.c.l.b16 %v3431
      %v3528 = vunpack.c.l.b16 %v3432
      %v3529 = vunpack.c.l.b16 %v3433
      %v3530 = vunpack.c.l.b16 %v3434
      %v3531 = vunpack.c.l.b16 %v3435
      %v3532 = vunpack.c.l.b16 %v3436
      %v3533 = vunpack.c.l.b16 %v3437
      %v3534 = vunpack.c.l.b16 %v3438
      %v3535 = vunpack.c.l.b16 %v3439
      %v3536 = vunpack.c.l.b16 %v3440
      %v3537 = vunpack.c.l.b16 %v3441
      %v3538 = vunpack.c.l.b16 %v3442
      %v3539 = vunpack.c.l.b16 %v3443
      %v3540 = vunpack.c.l.b16 %v3444
      %v3541 = vunpack.c.l.b16 %v3445
      %v3542 = vunpack.c.l.b16 %v3446
      %v3543 = vunpack.c.l.b16 %v3447
      %v3544 = vunpack.c.l.b16 %v3448
      %v3545 = vunpack.c.l.b16 %v3449
      %v3546 = vunpack.c.l.b16 %v3450
      %v3547 = vpack.c.b16 %v3500, %v3499
      %v3548 = vpack.c.b16 %v3502, %v3501
      %v3549 = vpack.c.b16 %v3504, %v3503
      %v3550 = vpack.c.b16 %v3506, %v3505
      %v3551 = vpack.c.b16 %v3508, %v3507
      %v3552 = vpack.c.b16 %v3510, %v3509
      %v3553 = vpack.c.b16 %v3512, %v3511
      %v3554 = vpack.c.b16 %v3514, %v3513
      %v3555 = vpack.c.b16 %v3516, %v3515
      %v3556 = vpack.c.b16 %v3518, %v3517
      %v3557 = vpack.c.b16 %v3520, %v3519
      %v3558 = vpack.c.b16 %v3522, %v3521
      %v3559 = vpack.c.b16 %v3524, %v3523
      %v3560 = vpack.c.b16 %v3526, %v3525
      %v3561 = vpack.c.b16 %v3528, %v3527
      %v3562 = vpack.c.b16 %v3530, %v3529
      %v3563 = vpack.c.b16 %v3532, %v3531
      %v3564 = vpack.c.b16 %v3534, %v3533
      %v3565 = vpack.c.b16 %v3536, %v3535
      %v3566 = vpack.c.b16 %v3538, %v3537
      %v3567 = vpack.c.b16 %v3540, %v3539
      %v3568 = vpack.c.b16 %v3542, %v3541
      %v3569 = vpack.c.b16 %v3544, %v3543
      %v3570 = vpack.c.b16 %v3546, %v3545
      %3595 = vmatprep.subr.bf16.mxu0 0
      %3596 = vmatpush1.bf16.msra.mxu0 %v3547
      %3597 = vmatprep.subr.bf16.mxu0 0
      %3598 = vmatpush1.bf16.msra.mxu0 %v3548
      %3599 = vmatprep.subr.bf16.mxu0 0
      %3600 = vmatpush1.bf16.msra.mxu0 %v3549
      %3601 = vmatprep.subr.bf16.mxu0 0
      %3602 = vmatpush1.bf16.msra.mxu0 %v3550
      %3603 = vmatprep.subr.bf16.mxu0 0
      %3604 = vmatpush1.bf16.msra.mxu0 %v3551
      %3605 = vmatprep.subr.bf16.mxu0 0
      %3606 = vmatpush1.bf16.msra.mxu0 %v3552
      %3607 = vmatprep.subr.bf16.mxu0 0
      %3608 = vmatpush1.bf16.msra.mxu0 %v3553
      %3609 = vmatprep.subr.bf16.mxu0 0
      %3610 = vmatpush1.bf16.msra.mxu0 %v3554
      %3611 = vmatprep.subr.bf16.mxu0 0
      %3612 = vmatpush1.bf16.msra.mxu0 %v3555
      %3613 = vmatprep.subr.bf16.mxu0 0
      %3614 = vmatpush1.bf16.msra.mxu0 %v3556
      %3615 = vmatprep.subr.bf16.mxu0 0
      %3616 = vmatpush1.bf16.msra.mxu0 %v3557
      %3617 = vmatprep.subr.bf16.mxu0 0
      %3618 = vmatpush1.bf16.msra.mxu0 %v3558
      %3619 = vmatprep.subr.bf16.mxu0 0
      %3620 = vmatpush1.bf16.msra.mxu0 %v3559
      %3621 = vmatprep.subr.bf16.mxu0 0
      %3622 = vmatpush1.bf16.msra.mxu0 %v3560
      %3623 = vmatprep.subr.bf16.mxu0 0
      %3624 = vmatpush1.bf16.msra.mxu0 %v3561
      %3625 = vmatprep.subr.bf16.mxu0 0
      %3626 = vmatpush1.bf16.msra.mxu0 %v3562
      %3627 = vmatprep.mubr.bf16.mxu0 %v3307
      %3628 = vmatmul.mubr.bf16.gmra.mrb[0].mxu0 %v3243
      %v3629 = vpop.f32.mrb[0].mxu0
      %v3630 = vadd.f32 0.0, %v3629
      %v3631 = vpop.f32.mrb[0].mxu0
      %v3632 = vpop.f32.mrb[0].mxu0
      %v3633 = vadd.f32 0.0, %v3632
      %v3634 = vpop.f32.mrb[0].mxu0
      %3635 = vmatprep.mubr.bf16.mxu0 %v3308
      %3636 = vmatmul.mubr.bf16.gmra.mrb[0].mxu0 %v3244
      %v3637 = vpop.f32.mrb[0].mxu0
      %v3638 = vadd.f32 0.0, %v3637
      %v3639 = vpop.f32.mrb[0].mxu0
      %v3640 = vpop.f32.mrb[0].mxu0
      %v3641 = vadd.f32 0.0, %v3640
      %v3642 = vpop.f32.mrb[0].mxu0
      %3643 = vmatprep.mubr.bf16.mxu0 %v3309
      %3644 = vmatmul.mubr.bf16.gmra.mrb[0].mxu0 %v3245
      %v3645 = vpop.f32.mrb[0].mxu0
      %v3646 = vadd.f32 0.0, %v3645
      %v3647 = vpop.f32.mrb[0].mxu0
      %v3648 = vpop.f32.mrb[0].mxu0
      %v3649 = vadd.f32 0.0, %v3648
      %v3650 = vpop.f32.mrb[0].mxu0
      %3651 = vmatprep.mubr.bf16.mxu0 %v3310
      %3652 = vmatmul.mubr.bf16.gmra.mrb[0].mxu0 %v3246
      %v3653 = vpop.f32.mrb[0].mxu0
      %v3654 = vadd.f32 0.0, %v3653
      %v3655 = vpop.f32.mrb[0].mxu0
      %v3656 = vpop.f32.mrb[0].mxu0
      %v3657 = vadd.f32 0.0, %v3656
      %v3658 = vpop.f32.mrb[0].mxu0
      %3659 = vmatprep.mubr.bf16.mxu0 %v3311
      %3660 = vmatmul.mubr.bf16.gmra.mrb[0].mxu0 %v3247
      %v3661 = vpop.f32.mrb[0].mxu0
      %v3662 = vadd.f32 0.0, %v3661
      %v3663 = vpop.f32.mrb[0].mxu0
      %v3664 = vpop.f32.mrb[0].mxu0
      %v3665 = vadd.f32 0.0, %v3664
      %v3666 = vpop.f32.mrb[0].mxu0
      %3667 = vmatprep.mubr.bf16.mxu0 %v3312
      %3668 = vmatmul.mubr.bf16.gmra.mrb[0].mxu0 %v3248
      %v3669 = vpop.f32.mrb[0].mxu0
      %v3670 = vadd.f32 0.0, %v3669
      %v3671 = vpop.f32.mrb[0].mxu0
      %v3672 = vpop.f32.mrb[0].mxu0
      %v3673 = vadd.f32 0.0, %v3672
      %v3674 = vpop.f32.mrb[0].mxu0
      %3675 = vmatprep.mubr.bf16.mxu0 %v3313
      %3676 = vmatmul.mubr.bf16.gmra.mrb[0].mxu0 %v3249
      %v3677 = vpop.f32.mrb[0].mxu0
      %v3678 = vadd.f32 0.0, %v3677
      %v3679 = vpop.f32.mrb[0].mxu0
      %v3680 = vpop.f32.mrb[0].mxu0
      %v3681 = vadd.f32 0.0, %v3680
      %v3682 = vpop.f32.mrb[0].mxu0
      %3683 = vmatprep.mubr.bf16.mxu0 %v3314
      %3684 = vmatmul.mubr.bf16.gmra.mrb[0].mxu0 %v3250
      %v3685 = vpop.f32.mrb[0].mxu0
      %v3686 = vadd.f32 0.0, %v3685
      %v3687 = vpop.f32.mrb[0].mxu0
      %v3688 = vpop.f32.mrb[0].mxu0
      %v3689 = vadd.f32 0.0, %v3688
      %v3690 = vpop.f32.mrb[0].mxu0
      %3691 = vmatprep.mubr.bf16.mxu0 %v3315
      %3692 = vmatmul.mubr.bf16.gmra.mrb[0].mxu0 %v3251
      %v3693 = vpop.f32.mrb[0].mxu0
      %v3694 = vadd.f32 0.0, %v3693
      %v3695 = vpop.f32.mrb[0].mxu0
      %v3696 = vpop.f32.mrb[0].mxu0
      %v3697 = vadd.f32 0.0, %v3696
      %v3698 = vpop.f32.mrb[0].mxu0
      %3699 = vmatprep.mubr.bf16.mxu0 %v3316
      %3700 = vmatmul.mubr.bf16.gmra.mrb[0].mxu0 %v3252
      %v3701 = vpop.f32.mrb[0].mxu0
      %v3702 = vadd.f32 0.0, %v3701
      %v3703 = vpop.f32.mrb[0].mxu0
      %v3704 = vpop.f32.mrb[0].mxu0
      %v3705 = vadd.f32 0.0, %v3704
      %v3706 = vpop.f32.mrb[0].mxu0
      %3707 = vmatprep.mubr.bf16.mxu0 %v3317
      %3708 = vmatmul.mubr.bf16.gmra.mrb[0].mxu0 %v3253
      %v3709 = vpop.f32.mrb[0].mxu0
      %v3710 = vadd.f32 0.0, %v3709
      %v3711 = vpop.f32.mrb[0].mxu0
      %v3712 = vpop.f32.mrb[0].mxu0
      %v3713 = vadd.f32 0.0, %v3712
      %v3714 = vpop.f32.mrb[0].mxu0
      %3715 = vmatprep.mubr.bf16.mxu0 %v3318
      %3716 = vmatmul.mubr.bf16.gmra.mrb[0].mxu0 %v3254
      %v3717 = vpop.f32.mrb[0].mxu0
      %v3718 = vadd.f32 0.0, %v3717
      %v3719 = vpop.f32.mrb[0].mxu0
      %v3720 = vpop.f32.mrb[0].mxu0
      %v3721 = vadd.f32 0.0, %v3720
      %v3722 = vpop.f32.mrb[0].mxu0
      %3723 = vmatprep.mubr.bf16.mxu0 %v3319
      %3724 = vmatmul.mubr.bf16.gmra.mrb[0].mxu0 %v3255
      %v3725 = vpop.f32.mrb[0].mxu0
      %v3726 = vadd.f32 0.0, %v3725
      %v3727 = vpop.f32.mrb[0].mxu0
      %v3728 = vpop.f32.mrb[0].mxu0
      %v3729 = vadd.f32 0.0, %v3728
      %v3730 = vpop.f32.mrb[0].mxu0
      %3731 = vmatprep.mubr.bf16.mxu0 %v3320
      %3732 = vmatmul.mubr.bf16.gmra.mrb[0].mxu0 %v3256
      %v3733 = vpop.f32.mrb[0].mxu0
      %v3734 = vadd.f32 0.0, %v3733
      %v3735 = vpop.f32.mrb[0].mxu0
      %v3736 = vpop.f32.mrb[0].mxu0
      %v3737 = vadd.f32 0.0, %v3736
      %v3738 = vpop.f32.mrb[0].mxu0
      %3739 = vmatprep.mubr.bf16.mxu0 %v3321
      %3740 = vmatmul.mubr.bf16.gmra.mrb[0].mxu0 %v3257
      %v3741 = vpop.f32.mrb[0].mxu0
      %v3742 = vadd.f32 0.0, %v3741
      %v3743 = vpop.f32.mrb[0].mxu0
      %v3744 = vpop.f32.mrb[0].mxu0
      %v3745 = vadd.f32 0.0, %v3744
      %v3746 = vpop.f32.mrb[0].mxu0
      %3747 = vmatprep.mubr.bf16.mxu0 %v3322
      %3748 = vmatmul.mubr.bf16.gmra.mrb[0].mxu0 %v3258
      %v3749 = vpop.f32.mrb[0].mxu0
      %v3750 = vadd.f32 0.0, %v3749
      %v3751 = vpop.f32.mrb[0].mxu0
      %v3752 = vpop.f32.mrb[0].mxu0
      %v3753 = vadd.f32 0.0, %v3752
      %v3754 = vpop.f32.mrb[0].mxu0
      %3755 = vdwg.mxu0
      %3756 = vmatprep.subr.bf16.mxu0 0
      %3757 = vmatpush1.bf16.msra.mxu0 %v3563
      %3758 = vmatprep.subr.bf16.mxu0 0
      %3759 = vmatpush1.bf16.msra.mxu0 %v3564
      %3760 = vmatprep.subr.bf16.mxu0 0
      %3761 = vmatpush1.bf16.msra.mxu0 %v3565
      %3762 = vmatprep.subr.bf16.mxu0 0
      %3763 = vmatpush1.bf16.msra.mxu0 %v3566
      %3764 = vmatprep.subr.bf16.mxu0 0
      %3765 = vmatpush1.bf16.msra.mxu0 %v3567
      %3766 = vmatprep.subr.bf16.mxu0 0
      %3767 = vmatpush1.bf16.msra.mxu0 %v3568
      %3768 = vmatprep.subr.bf16.mxu0 0
      %3769 = vmatpush1.bf16.msra.mxu0 %v3569
      %3770 = vmatprep.subr.bf16.mxu0 0
      %3771 = vmatpush1.bf16.msra.mxu0 %v3570
      %3772 = vmatprep.subr.bf16.mxu0 0
      %3773 = vmatpush1.bf16.msra.mxu0 0
      %3774 = vmatprep.subr.bf16.mxu0 0
      %3775 = vmatpush1.bf16.msra.mxu0 0
      %3776 = vmatprep.subr.bf16.mxu0 0
      %3777 = vmatpush1.bf16.msra.mxu0 0
      %3778 = vmatprep.subr.bf16.mxu0 0
      %3779 = vmatpush1.bf16.msra.mxu0 0
      %3780 = vmatprep.subr.bf16.mxu0 0
      %3781 = vmatpush1.bf16.msra.mxu0 0
      %3782 = vmatprep.subr.bf16.mxu0 0
      %3783 = vmatpush1.bf16.msra.mxu0 0
      %3784 = vmatprep.subr.bf16.mxu0 0
      %3785 = vmatpush1.bf16.msra.mxu0 0
      %3786 = vmatprep.subr.bf16.mxu0 0
      %3787 = vmatpush1.bf16.msra.mxu0 0
      %3788 = vmatprep.mubr.bf16.mxu0 0
      %3789 = vmatmul.mubr.bf16.gmra.mrb[0].mxu0 %v3371
      %v3790 = vpop.f32.mrb[0].mxu0
      %v3791 = vadd.f32 %v3630, %v3790
      %v3792 = vpop.f32.mrb[0].mxu0
      %v3793 = vpop.f32.mrb[0].mxu0
      %v3794 = vadd.f32 %v3633, %v3793
      %v3795 = vpop.f32.mrb[0].mxu0
      %3796 = vmatprep.mubr.bf16.mxu0 0
      %3797 = vmatmul.mubr.bf16.gmra.mrb[0].mxu0 %v3372
      %v3798 = vpop.f32.mrb[0].mxu0
      %v3799 = vadd.f32 %v3638, %v3798
      %v3800 = vpop.f32.mrb[0].mxu0
      %v3801 = vpop.f32.mrb[0].mxu0
      %v3802 = vadd.f32 %v3641, %v3801
      %v3803 = vpop.f32.mrb[0].mxu0
      %3804 = vmatprep.mubr.bf16.mxu0 0
      %3805 = vmatmul.mubr.bf16.gmra.mrb[0].mxu0 %v3373
      %v3806 = vpop.f32.mrb[0].mxu0
      %v3807 = vadd.f32 %v3646, %v3806
      %v3808 = vpop.f32.mrb[0].mxu0
      %v3809 = vpop.f32.mrb[0].mxu0
      %v3810 = vadd.f32 %v3649, %v3809
      %v3811 = vpop.f32.mrb[0].mxu0
      %3812 = vmatprep.mubr.bf16.mxu0 0
      %3813 = vmatmul.mubr.bf16.gmra.mrb[0].mxu0 %v3374
      %v3814 = vpop.f32.mrb[0].mxu0
      %v3815 = vadd.f32 %v3654, %v3814
      %v3816 = vpop.f32.mrb[0].mxu0
      %v3817 = vpop.f32.mrb[0].mxu0
      %v3818 = vadd.f32 %v3657, %v3817
      %v3819 = vpop.f32.mrb[0].mxu0
      %3820 = vmatprep.mubr.bf16.mxu0 0
      %3821 = vmatmul.mubr.bf16.gmra.mrb[0].mxu0 %v3375
      %v3822 = vpop.f32.mrb[0].mxu0
      %v3823 = vadd.f32 %v3662, %v3822
      %v3824 = vpop.f32.mrb[0].mxu0
      %v3825 = vpop.f32.mrb[0].mxu0
      %v3826 = vadd.f32 %v3665, %v3825
      %v3827 = vpop.f32.mrb[0].mxu0
      %3828 = vmatprep.mubr.bf16.mxu0 0
      %3829 = vmatmul.mubr.bf16.gmra.mrb[0].mxu0 %v3376
      %v3830 = vpop.f32.mrb[0].mxu0
      %v3831 = vadd.f32 %v3670, %v3830
      %v3832 = vpop.f32.mrb[0].mxu0
      %v3833 = vpop.f32.mrb[0].mxu0
      %v3834 = vadd.f32 %v3673, %v3833
      %v3835 = vpop.f32.mrb[0].mxu0
      %3836 = vmatprep.mubr.bf16.mxu0 0
      %3837 = vmatmul.mubr.bf16.gmra.mrb[0].mxu0 %v3377
      %v3838 = vpop.f32.mrb[0].mxu0
      %v3839 = vadd.f32 %v3678, %v3838
      %v3840 = vpop.f32.mrb[0].mxu0
      %v3841 = vpop.f32.mrb[0].mxu0
      %v3842 = vadd.f32 %v3681, %v3841
      %v3843 = vpop.f32.mrb[0].mxu0
      %3844 = vmatprep.mubr.bf16.mxu0 0
      %3845 = vmatmul.mubr.bf16.gmra.mrb[0].mxu0 %v3378
      %v3846 = vpop.f32.mrb[0].mxu0
      %v3847 = vadd.f32 %v3686, %v3846
      %v3848 = vpop.f32.mrb[0].mxu0
      %v3849 = vpop.f32.mrb[0].mxu0
      %v3850 = vadd.f32 %v3689, %v3849
      %v3851 = vpop.f32.mrb[0].mxu0
      %3852 = vmatprep.mubr.bf16.mxu0 0
      %3853 = vmatmul.mubr.bf16.gmra.mrb[0].mxu0 %v3379
      %v3854 = vpop.f32.mrb[0].mxu0
      %v3855 = vadd.f32 %v3694, %v3854
      %v3856 = vpop.f32.mrb[0].mxu0
      %v3857 = vpop.f32.mrb[0].mxu0
      %v3858 = vadd.f32 %v3697, %v3857
      %v3859 = vpop.f32.mrb[0].mxu0
      %3860 = vmatprep.mubr.bf16.mxu0 0
      %3861 = vmatmul.mubr.bf16.gmra.mrb[0].mxu0 %v3380
      %v3862 = vpop.f32.mrb[0].mxu0
      %v3863 = vadd.f32 %v3702, %v3862
      %v3864 = vpop.f32.mrb[0].mxu0
      %v3865 = vpop.f32.mrb[0].mxu0
      %v3866 = vadd.f32 %v3705, %v3865
      %v3867 = vpop.f32.mrb[0].mxu0
      %3868 = vmatprep.mubr.bf16.mxu0 0
      %3869 = vmatmul.mubr.bf16.gmra.mrb[0].mxu0 %v3381
      %v3870 = vpop.f32.mrb[0].mxu0
      %v3871 = vadd.f32 %v3710, %v3870
      %v3872 = vpop.f32.mrb[0].mxu0
      %v3873 = vpop.f32.mrb[0].mxu0
      %v3874 = vadd.f32 %v3713, %v3873
      %v3875 = vpop.f32.mrb[0].mxu0
      %3876 = vmatprep.mubr.bf16.mxu0 0
      %3877 = vmatmul.mubr.bf16.gmra.mrb[0].mxu0 %v3382
      %v3878 = vpop.f32.mrb[0].mxu0
      %v3879 = vadd.f32 %v3718, %v3878
      %v3880 = vpop.f32.mrb[0].mxu0
      %v3881 = vpop.f32.mrb[0].mxu0
      %v3882 = vadd.f32 %v3721, %v3881
      %v3883 = vpop.f32.mrb[0].mxu0
      %3884 = vmatprep.mubr.bf16.mxu0 0
      %3885 = vmatmul.mubr.bf16.gmra.mrb[0].mxu0 %v3383
      %v3886 = vpop.f32.mrb[0].mxu0
      %v3887 = vadd.f32 %v3726, %v3886
      %v3888 = vpop.f32.mrb[0].mxu0
      %v3889 = vpop.f32.mrb[0].mxu0
      %v3890 = vadd.f32 %v3729, %v3889
      %v3891 = vpop.f32.mrb[0].mxu0
      %3892 = vmatprep.mubr.bf16.mxu0 0
      %3893 = vmatmul.mubr.bf16.gmra.mrb[0].mxu0 %v3384
      %v3894 = vpop.f32.mrb[0].mxu0
      %v3895 = vadd.f32 %v3734, %v3894
      %v3896 = vpop.f32.mrb[0].mxu0
      %v3897 = vpop.f32.mrb[0].mxu0
      %v3898 = vadd.f32 %v3737, %v3897
      %v3899 = vpop.f32.mrb[0].mxu0
      %3900 = vmatprep.mubr.bf16.mxu0 0
      %3901 = vmatmul.mubr.bf16.gmra.mrb[0].mxu0 %v3385
      %v3902 = vpop.f32.mrb[0].mxu0
      %v3903 = vadd.f32 %v3742, %v3902
      %v3904 = vpop.f32.mrb[0].mxu0
      %v3905 = vpop.f32.mrb[0].mxu0
      %v3906 = vadd.f32 %v3745, %v3905
      %v3907 = vpop.f32.mrb[0].mxu0
      %3908 = vmatprep.mubr.bf16.mxu0 0
      %3909 = vmatmul.mubr.bf16.gmra.mrb[0].mxu0 %v3386
      %v3910 = vpop.f32.mrb[0].mxu0
      %v3911 = vadd.f32 %v3750, %v3910
      %v3912 = vpop.f32.mrb[0].mxu0
      %v3913 = vpop.f32.mrb[0].mxu0
      %v3914 = vadd.f32 %v3753, %v3913
      %v3915 = vpop.f32.mrb[0].mxu0
      %3916 = vdwg.mxu0
      %v3965 = vunpack.c.l.b16 %v2539
      %v3966 = vunpack.c.l.b16 %v2540
      %v3967 = vunpack.c.l.b16 %v2541
      %v3968 = vunpack.c.l.b16 %v2542
      %v3969 = vunpack.c.l.b16 %v2543
      %v3970 = vunpack.c.l.b16 %v2544
      %v3971 = vunpack.c.l.b16 %v2545
      %v3972 = vunpack.c.l.b16 %v2546
      %v3973 = vunpack.c.l.b16 %v2547
      %v3974 = vunpack.c.l.b16 %v2548
      %v3975 = vunpack.c.l.b16 %v2549
      %v3976 = vunpack.c.l.b16 %v2550
      %v3977 = vunpack.c.l.b16 %v2551
      %v3978 = vunpack.c.l.b16 %v2552
      %v3979 = vunpack.c.l.b16 %v2553
      %v3980 = vunpack.c.l.b16 %v2554
      %v3981 = vunpack.c.l.b16 %v2555
      %v3982 = vunpack.c.l.b16 %v2556
      %v3983 = vunpack.c.l.b16 %v2557
      %v3984 = vunpack.c.l.b16 %v2558
      %v3985 = vunpack.c.l.b16 %v2559
      %v3986 = vunpack.c.l.b16 %v2560
      %v3987 = vunpack.c.l.b16 %v2561
      %v3988 = vunpack.c.l.b16 %v2562
      %v3989 = vunpack.c.l.b16 %v2563
      %v3990 = vunpack.c.l.b16 %v2564
      %v3991 = vunpack.c.l.b16 %v2565
      %v3992 = vunpack.c.l.b16 %v2566
      %v3993 = vunpack.c.l.b16 %v2567
      %v3994 = vunpack.c.l.b16 %v2568
      %v3995 = vunpack.c.l.b16 %v2569
      %v3996 = vunpack.c.l.b16 %v2570
      %v3997 = vunpack.c.l.b16 %v2571
      %v3998 = vunpack.c.l.b16 %v2572
      %v3999 = vunpack.c.l.b16 %v2573
      %v4000 = vunpack.c.l.b16 %v2574
      %v4001 = vunpack.c.l.b16 %v2575
      %v4002 = vunpack.c.l.b16 %v2576
      %v4003 = vunpack.c.l.b16 %v2577
      %v4004 = vunpack.c.l.b16 %v2578
      %v4005 = vunpack.c.l.b16 %v2579
      %v4006 = vunpack.c.l.b16 %v2580
      %v4007 = vunpack.c.l.b16 %v2581
      %v4008 = vunpack.c.l.b16 %v2582
      %v4009 = vunpack.c.l.b16 %v2583
      %v4010 = vunpack.c.l.b16 %v2584
      %v4011 = vunpack.c.l.b16 %v2585
      %v4012 = vunpack.c.l.b16 %v2586
      %v4013 = vpack.c.b16 %v3966, %v3965
      %v4014 = vpack.c.b16 %v3968, %v3967
      %v4015 = vpack.c.b16 %v3970, %v3969
      %v4016 = vpack.c.b16 %v3972, %v3971
      %v4017 = vpack.c.b16 %v3974, %v3973
      %v4018 = vpack.c.b16 %v3976, %v3975
      %v4019 = vpack.c.b16 %v3978, %v3977
      %v4020 = vpack.c.b16 %v3980, %v3979
      %v4021 = vpack.c.b16 %v3982, %v3981
      %v4022 = vpack.c.b16 %v3984, %v3983
      %v4023 = vpack.c.b16 %v3986, %v3985
      %v4024 = vpack.c.b16 %v3988, %v3987
      %v4025 = vpack.c.b16 %v3990, %v3989
      %v4026 = vpack.c.b16 %v3992, %v3991
      %v4027 = vpack.c.b16 %v3994, %v3993
      %v4028 = vpack.c.b16 %v3996, %v3995
      %v4029 = vpack.c.b16 %v3998, %v3997
      %v4030 = vpack.c.b16 %v4000, %v3999
      %v4031 = vpack.c.b16 %v4002, %v4001
      %v4032 = vpack.c.b16 %v4004, %v4003
      %v4033 = vpack.c.b16 %v4006, %v4005
      %v4034 = vpack.c.b16 %v4008, %v4007
      %v4035 = vpack.c.b16 %v4010, %v4009
      %v4036 = vpack.c.b16 %v4012, %v4011
      %4061 = vmatprep.subr.bf16.mxu0 0
      %4062 = vmatpush1.bf16.msra.mxu0 %v4013
      %4063 = vmatprep.subr.bf16.mxu0 0
      %4064 = vmatpush1.bf16.msra.mxu0 %v4014
      %4065 = vmatprep.subr.bf16.mxu0 0
      %4066 = vmatpush1.bf16.msra.mxu0 %v4015
      %4067 = vmatprep.subr.bf16.mxu0 0
      %4068 = vmatpush1.bf16.msra.mxu0 %v4016
      %4069 = vmatprep.subr.bf16.mxu0 0
      %4070 = vmatpush1.bf16.msra.mxu0 %v4017
      %4071 = vmatprep.subr.bf16.mxu0 0
      %4072 = vmatpush1.bf16.msra.mxu0 %v4018
      %4073 = vmatprep.subr.bf16.mxu0 0
      %4074 = vmatpush1.bf16.msra.mxu0 %v4019
      %4075 = vmatprep.subr.bf16.mxu0 0
      %4076 = vmatpush1.bf16.msra.mxu0 %v4020
      %4077 = vmatprep.subr.bf16.mxu0 0
      %4078 = vmatpush1.bf16.msra.mxu0 %v4021
      %4079 = vmatprep.subr.bf16.mxu0 0
      %4080 = vmatpush1.bf16.msra.mxu0 %v4022
      %4081 = vmatprep.subr.bf16.mxu0 0
      %4082 = vmatpush1.bf16.msra.mxu0 %v4023
      %4083 = vmatprep.subr.bf16.mxu0 0
      %4084 = vmatpush1.bf16.msra.mxu0 %v4024
      %4085 = vmatprep.subr.bf16.mxu0 0
      %4086 = vmatpush1.bf16.msra.mxu0 %v4025
      %4087 = vmatprep.subr.bf16.mxu0 0
      %4088 = vmatpush1.bf16.msra.mxu0 %v4026
      %4089 = vmatprep.subr.bf16.mxu0 0
      %4090 = vmatpush1.bf16.msra.mxu0 %v4027
      %4091 = vmatprep.subr.bf16.mxu0 0
      %4092 = vmatpush1.bf16.msra.mxu0 %v4028
      %4093 = vmatprep.mubr.bf16.mxu0 %v2443
      %4094 = vmatmul.mubr.bf16.gmra.mrb[0].mxu0 %v2379
      %v4095 = vpop.f32.mrb[0].mxu0
      %v4096 = vadd.f32 %v3791, %v4095
      %v4097 = vpop.f32.mrb[0].mxu0
      %v4098 = vpop.f32.mrb[0].mxu0
      %v4099 = vadd.f32 %v3794, %v4098
      %v4100 = vpop.f32.mrb[0].mxu0
      %4101 = vmatprep.mubr.bf16.mxu0 %v2444
      %4102 = vmatmul.mubr.bf16.gmra.mrb[0].mxu0 %v2380
      %v4103 = vpop.f32.mrb[0].mxu0
      %v4104 = vadd.f32 %v3799, %v4103
      %v4105 = vpop.f32.mrb[0].mxu0
      %v4106 = vpop.f32.mrb[0].mxu0
      %v4107 = vadd.f32 %v3802, %v4106
      %v4108 = vpop.f32.mrb[0].mxu0
      %4109 = vmatprep.mubr.bf16.mxu0 %v2445
      %4110 = vmatmul.mubr.bf16.gmra.mrb[0].mxu0 %v2381
      %v4111 = vpop.f32.mrb[0].mxu0
      %v4112 = vadd.f32 %v3807, %v4111
      %v4113 = vpop.f32.mrb[0].mxu0
      %v4114 = vpop.f32.mrb[0].mxu0
      %v4115 = vadd.f32 %v3810, %v4114
      %v4116 = vpop.f32.mrb[0].mxu0
      %4117 = vmatprep.mubr.bf16.mxu0 %v2446
      %4118 = vmatmul.mubr.bf16.gmra.mrb[0].mxu0 %v2382
      %v4119 = vpop.f32.mrb[0].mxu0
      %v4120 = vadd.f32 %v3815, %v4119
      %v4121 = vpop.f32.mrb[0].mxu0
      %v4122 = vpop.f32.mrb[0].mxu0
      %v4123 = vadd.f32 %v3818, %v4122
      %v4124 = vpop.f32.mrb[0].mxu0
      %4125 = vmatprep.mubr.bf16.mxu0 %v2447
      %4126 = vmatmul.mubr.bf16.gmra.mrb[0].mxu0 %v2383
      %v4127 = vpop.f32.mrb[0].mxu0
      %v4128 = vadd.f32 %v3823, %v4127
      %v4129 = vpop.f32.mrb[0].mxu0
      %v4130 = vpop.f32.mrb[0].mxu0
      %v4131 = vadd.f32 %v3826, %v4130
      %v4132 = vpop.f32.mrb[0].mxu0
      %4133 = vmatprep.mubr.bf16.mxu0 %v2448
      %4134 = vmatmul.mubr.bf16.gmra.mrb[0].mxu0 %v2384
      %v4135 = vpop.f32.mrb[0].mxu0
      %v4136 = vadd.f32 %v3831, %v4135
      %v4137 = vpop.f32.mrb[0].mxu0
      %v4138 = vpop.f32.mrb[0].mxu0
      %v4139 = vadd.f32 %v3834, %v4138
      %v4140 = vpop.f32.mrb[0].mxu0
      %4141 = vmatprep.mubr.bf16.mxu0 %v2449
      %4142 = vmatmul.mubr.bf16.gmra.mrb[0].mxu0 %v2385
      %v4143 = vpop.f32.mrb[0].mxu0
      %v4144 = vadd.f32 %v3839, %v4143
      %v4145 = vpop.f32.mrb[0].mxu0
      %v4146 = vpop.f32.mrb[0].mxu0
      %v4147 = vadd.f32 %v3842, %v4146
      %v4148 = vpop.f32.mrb[0].mxu0
      %4149 = vmatprep.mubr.bf16.mxu0 %v2450
      %4150 = vmatmul.mubr.bf16.gmra.mrb[0].mxu0 %v2386
      %v4151 = vpop.f32.mrb[0].mxu0
      %v4152 = vadd.f32 %v3847, %v4151
      %v4153 = vpop.f32.mrb[0].mxu0
      %v4154 = vpop.f32.mrb[0].mxu0
      %v4155 = vadd.f32 %v3850, %v4154
      %v4156 = vpop.f32.mrb[0].mxu0
      %4157 = vmatprep.mubr.bf16.mxu0 %v2451
      %4158 = vmatmul.mubr.bf16.gmra.mrb[0].mxu0 %v2387
      %v4159 = vpop.f32.mrb[0].mxu0
      %v4160 = vadd.f32 %v3855, %v4159
      %v4161 = vpop.f32.mrb[0].mxu0
      %v4162 = vpop.f32.mrb[0].mxu0
      %v4163 = vadd.f32 %v3858, %v4162
      %v4164 = vpop.f32.mrb[0].mxu0
      %4165 = vmatprep.mubr.bf16.mxu0 %v2452
      %4166 = vmatmul.mubr.bf16.gmra.mrb[0].mxu0 %v2388
      %v4167 = vpop.f32.mrb[0].mxu0
      %v4168 = vadd.f32 %v3863, %v4167
      %v4169 = vpop.f32.mrb[0].mxu0
      %v4170 = vpop.f32.mrb[0].mxu0
      %v4171 = vadd.f32 %v3866, %v4170
      %v4172 = vpop.f32.mrb[0].mxu0
      %4173 = vmatprep.mubr.bf16.mxu0 %v2453
      %4174 = vmatmul.mubr.bf16.gmra.mrb[0].mxu0 %v2389
      %v4175 = vpop.f32.mrb[0].mxu0
      %v4176 = vadd.f32 %v3871, %v4175
      %v4177 = vpop.f32.mrb[0].mxu0
      %v4178 = vpop.f32.mrb[0].mxu0
      %v4179 = vadd.f32 %v3874, %v4178
      %v4180 = vpop.f32.mrb[0].mxu0
      %4181 = vmatprep.mubr.bf16.mxu0 %v2454
      %4182 = vmatmul.mubr.bf16.gmra.mrb[0].mxu0 %v2390
      %v4183 = vpop.f32.mrb[0].mxu0
      %v4184 = vadd.f32 %v3879, %v4183
      %v4185 = vpop.f32.mrb[0].mxu0
      %v4186 = vpop.f32.mrb[0].mxu0
      %v4187 = vadd.f32 %v3882, %v4186
      %v4188 = vpop.f32.mrb[0].mxu0
      %4189 = vmatprep.mubr.bf16.mxu0 %v2455
      %4190 = vmatmul.mubr.bf16.gmra.mrb[0].mxu0 %v2391
      %v4191 = vpop.f32.mrb[0].mxu0
      %v4192 = vadd.f32 %v3887, %v4191
      %v4193 = vpop.f32.mrb[0].mxu0
      %v4194 = vpop.f32.mrb[0].mxu0
      %v4195 = vadd.f32 %v3890, %v4194
      %v4196 = vpop.f32.mrb[0].mxu0
      %4197 = vmatprep.mubr.bf16.mxu0 %v2456
      %4198 = vmatmul.mubr.bf16.gmra.mrb[0].mxu0 %v2392
      %v4199 = vpop.f32.mrb[0].mxu0
      %v4200 = vadd.f32 %v3895, %v4199
      %v4201 = vpop.f32.mrb[0].mxu0
      %v4202 = vpop.f32.mrb[0].mxu0
      %v4203 = vadd.f32 %v3898, %v4202
      %v4204 = vpop.f32.mrb[0].mxu0
      %4205 = vmatprep.mubr.bf16.mxu0 %v2457
      %4206 = vmatmul.mubr.bf16.gmra.mrb[0].mxu0 %v2393
      %v4207 = vpop.f32.mrb[0].mxu0
      %v4208 = vadd.f32 %v3903, %v4207
      %v4209 = vpop.f32.mrb[0].mxu0
      %v4210 = vpop.f32.mrb[0].mxu0
      %v4211 = vadd.f32 %v3906, %v4210
      %v4212 = vpop.f32.mrb[0].mxu0
      %4213 = vmatprep.mubr.bf16.mxu0 %v2458
      %4214 = vmatmul.mubr.bf16.gmra.mrb[0].mxu0 %v2394
      %v4215 = vpop.f32.mrb[0].mxu0
      %v4216 = vadd.f32 %v3911, %v4215
      %v4217 = vpop.f32.mrb[0].mxu0
      %v4218 = vpop.f32.mrb[0].mxu0
      %v4219 = vadd.f32 %v3914, %v4218
      %v4220 = vpop.f32.mrb[0].mxu0
      %4221 = vdwg.mxu0
      %4222 = vmatprep.subr.bf16.mxu0 0
      %4223 = vmatpush1.bf16.msra.mxu0 %v4029
      %4224 = vmatprep.subr.bf16.mxu0 0
      %4225 = vmatpush1.bf16.msra.mxu0 %v4030
      %4226 = vmatprep.subr.bf16.mxu0 0
      %4227 = vmatpush1.bf16.msra.mxu0 %v4031
      %4228 = vmatprep.subr.bf16.mxu0 0
      %4229 = vmatpush1.bf16.msra.mxu0 %v4032
      %4230 = vmatprep.subr.bf16.mxu0 0
      %4231 = vmatpush1.bf16.msra.mxu0 %v4033
      %4232 = vmatprep.subr.bf16.mxu0 0
      %4233 = vmatpush1.bf16.msra.mxu0 %v4034
      %4234 = vmatprep.subr.bf16.mxu0 0
      %4235 = vmatpush1.bf16.msra.mxu0 %v4035
      %4236 = vmatprep.subr.bf16.mxu0 0
      %4237 = vmatpush1.bf16.msra.mxu0 %v4036
      %4238 = vmatprep.subr.bf16.mxu0 0
      %4239 = vmatpush1.bf16.msra.mxu0 0
      %4240 = vmatprep.subr.bf16.mxu0 0
      %4241 = vmatpush1.bf16.msra.mxu0 0
      %4242 = vmatprep.subr.bf16.mxu0 0
      %4243 = vmatpush1.bf16.msra.mxu0 0
      %4244 = vmatprep.subr.bf16.mxu0 0
      %4245 = vmatpush1.bf16.msra.mxu0 0
      %4246 = vmatprep.subr.bf16.mxu0 0
      %4247 = vmatpush1.bf16.msra.mxu0 0
      %4248 = vmatprep.subr.bf16.mxu0 0
      %4249 = vmatpush1.bf16.msra.mxu0 0
      %4250 = vmatprep.subr.bf16.mxu0 0
      %4251 = vmatpush1.bf16.msra.mxu0 0
      %4252 = vmatprep.subr.bf16.mxu0 0
      %4253 = vmatpush1.bf16.msra.mxu0 0
      %4254 = vmatprep.mubr.bf16.mxu0 0
      %4255 = vmatmul.mubr.bf16.gmra.mrb[0].mxu0 %v2507
      %v4256 = vpop.f32.mrb[0].mxu0
      %v4257 = vadd.f32 %v4096, %v4256
      %v4258 = vpop.f32.mrb[0].mxu0
      %v4259 = vpop.f32.mrb[0].mxu0
      %v4260 = vadd.f32 %v4099, %v4259
      %v4261 = vpop.f32.mrb[0].mxu0
      %4262 = vmatprep.mubr.bf16.mxu0 0
      %4263 = vmatmul.mubr.bf16.gmra.mrb[0].mxu0 %v2508
      %v4264 = vpop.f32.mrb[0].mxu0
      %v4265 = vadd.f32 %v4104, %v4264
      %v4266 = vpop.f32.mrb[0].mxu0
      %v4267 = vpop.f32.mrb[0].mxu0
      %v4268 = vadd.f32 %v4107, %v4267
      %v4269 = vpop.f32.mrb[0].mxu0
      %4270 = vmatprep.mubr.bf16.mxu0 0
      %4271 = vmatmul.mubr.bf16.gmra.mrb[0].mxu0 %v2509
      %v4272 = vpop.f32.mrb[0].mxu0
      %v4273 = vadd.f32 %v4112, %v4272
      %v4274 = vpop.f32.mrb[0].mxu0
      %v4275 = vpop.f32.mrb[0].mxu0
      %v4276 = vadd.f32 %v4115, %v4275
      %v4277 = vpop.f32.mrb[0].mxu0
      %4278 = vmatprep.mubr.bf16.mxu0 0
      %4279 = vmatmul.mubr.bf16.gmra.mrb[0].mxu0 %v2510
      %v4280 = vpop.f32.mrb[0].mxu0
      %v4281 = vadd.f32 %v4120, %v4280
      %v4282 = vpop.f32.mrb[0].mxu0
      %v4283 = vpop.f32.mrb[0].mxu0
      %v4284 = vadd.f32 %v4123, %v4283
      %v4285 = vpop.f32.mrb[0].mxu0
      %4286 = vmatprep.mubr.bf16.mxu0 0
      %4287 = vmatmul.mubr.bf16.gmra.mrb[0].mxu0 %v2511
      %v4288 = vpop.f32.mrb[0].mxu0
      %v4289 = vadd.f32 %v4128, %v4288
      %v4290 = vpop.f32.mrb[0].mxu0
      %v4291 = vpop.f32.mrb[0].mxu0
      %v4292 = vadd.f32 %v4131, %v4291
      %v4293 = vpop.f32.mrb[0].mxu0
      %4294 = vmatprep.mubr.bf16.mxu0 0
      %4295 = vmatmul.mubr.bf16.gmra.mrb[0].mxu0 %v2512
      %v4296 = vpop.f32.mrb[0].mxu0
      %v4297 = vadd.f32 %v4136, %v4296
      %v4298 = vpop.f32.mrb[0].mxu0
      %v4299 = vpop.f32.mrb[0].mxu0
      %v4300 = vadd.f32 %v4139, %v4299
      %v4301 = vpop.f32.mrb[0].mxu0
      %4302 = vmatprep.mubr.bf16.mxu0 0
      %4303 = vmatmul.mubr.bf16.gmra.mrb[0].mxu0 %v2513
      %v4304 = vpop.f32.mrb[0].mxu0
      %v4305 = vadd.f32 %v4144, %v4304
      %v4306 = vpop.f32.mrb[0].mxu0
      %v4307 = vpop.f32.mrb[0].mxu0
      %v4308 = vadd.f32 %v4147, %v4307
      %v4309 = vpop.f32.mrb[0].mxu0
      %4310 = vmatprep.mubr.bf16.mxu0 0
      %4311 = vmatmul.mubr.bf16.gmra.mrb[0].mxu0 %v2514
      %v4312 = vpop.f32.mrb[0].mxu0
      %v4313 = vadd.f32 %v4152, %v4312
      %v4314 = vpop.f32.mrb[0].mxu0
      %v4315 = vpop.f32.mrb[0].mxu0
      %v4316 = vadd.f32 %v4155, %v4315
      %v4317 = vpop.f32.mrb[0].mxu0
      %4318 = vmatprep.mubr.bf16.mxu0 0
      %4319 = vmatmul.mubr.bf16.gmra.mrb[0].mxu0 %v2515
      %v4320 = vpop.f32.mrb[0].mxu0
      %v4321 = vadd.f32 %v4160, %v4320
      %v4322 = vpop.f32.mrb[0].mxu0
      %v4323 = vpop.f32.mrb[0].mxu0
      %v4324 = vadd.f32 %v4163, %v4323
      %v4325 = vpop.f32.mrb[0].mxu0
      %4326 = vmatprep.mubr.bf16.mxu0 0
      %4327 = vmatmul.mubr.bf16.gmra.mrb[0].mxu0 %v2516
      %v4328 = vpop.f32.mrb[0].mxu0
      %v4329 = vadd.f32 %v4168, %v4328
      %v4330 = vpop.f32.mrb[0].mxu0
      %v4331 = vpop.f32.mrb[0].mxu0
      %v4332 = vadd.f32 %v4171, %v4331
      %v4333 = vpop.f32.mrb[0].mxu0
      %4334 = vmatprep.mubr.bf16.mxu0 0
      %4335 = vmatmul.mubr.bf16.gmra.mrb[0].mxu0 %v2517
      %v4336 = vpop.f32.mrb[0].mxu0
      %v4337 = vadd.f32 %v4176, %v4336
      %v4338 = vpop.f32.mrb[0].mxu0
      %v4339 = vpop.f32.mrb[0].mxu0
      %v4340 = vadd.f32 %v4179, %v4339
      %v4341 = vpop.f32.mrb[0].mxu0
      %4342 = vmatprep.mubr.bf16.mxu0 0
      %4343 = vmatmul.mubr.bf16.gmra.mrb[0].mxu0 %v2518
      %v4344 = vpop.f32.mrb[0].mxu0
      %v4345 = vadd.f32 %v4184, %v4344
      %v4346 = vpop.f32.mrb[0].mxu0
      %v4347 = vpop.f32.mrb[0].mxu0
      %v4348 = vadd.f32 %v4187, %v4347
      %v4349 = vpop.f32.mrb[0].mxu0
      %4350 = vmatprep.mubr.bf16.mxu0 0
      %4351 = vmatmul.mubr.bf16.gmra.mrb[0].mxu0 %v2519
      %v4352 = vpop.f32.mrb[0].mxu0
      %v4353 = vadd.f32 %v4192, %v4352
      %v4354 = vpop.f32.mrb[0].mxu0
      %v4355 = vpop.f32.mrb[0].mxu0
      %v4356 = vadd.f32 %v4195, %v4355
      %v4357 = vpop.f32.mrb[0].mxu0
      %4358 = vmatprep.mubr.bf16.mxu0 0
      %4359 = vmatmul.mubr.bf16.gmra.mrb[0].mxu0 %v2520
      %v4360 = vpop.f32.mrb[0].mxu0
      %v4361 = vadd.f32 %v4200, %v4360
      %v4362 = vpop.f32.mrb[0].mxu0
      %v4363 = vpop.f32.mrb[0].mxu0
      %v4364 = vadd.f32 %v4203, %v4363
      %v4365 = vpop.f32.mrb[0].mxu0
      %4366 = vmatprep.mubr.bf16.mxu0 0
      %4367 = vmatmul.mubr.bf16.gmra.mrb[0].mxu0 %v2521
      %v4368 = vpop.f32.mrb[0].mxu0
      %v4369 = vadd.f32 %v4208, %v4368
      %v4370 = vpop.f32.mrb[0].mxu0
      %v4371 = vpop.f32.mrb[0].mxu0
      %v4372 = vadd.f32 %v4211, %v4371
      %v4373 = vpop.f32.mrb[0].mxu0
      %4374 = vmatprep.mubr.bf16.mxu0 0
      %4375 = vmatmul.mubr.bf16.gmra.mrb[0].mxu0 %v2522
      %v4376 = vpop.f32.mrb[0].mxu0
      %v4377 = vadd.f32 %v4216, %v4376
      %v4378 = vpop.f32.mrb[0].mxu0
      %v4379 = vpop.f32.mrb[0].mxu0
      %v4380 = vadd.f32 %v4219, %v4379
      %v4381 = vpop.f32.mrb[0].mxu0
      %4382 = vdwg.mxu0
      %s4383 = scalar_lea.vmem [#allocation2], 24
      %v4384 = vld [vmem:[%s4383] sm:$0xf]
      %v4385 = vld [vmem:[%s4383 + $0x4] sm:$0xf]
      %v4386 = vld [vmem:[%s4383 + $0xc] sm:$0xf]
      %v4387 = vld [vmem:[%s4383 + $0x10] sm:$0xf]
      %v4388 = vld [vmem:[%s4383 + $0x18] sm:$0xf]
      %v4389 = vld [vmem:[%s4383 + $0x1c] sm:$0xf]
      %v4390 = vld [vmem:[%s4383 + $0x24] sm:$0xf]
      %v4391 = vld [vmem:[%s4383 + $0x28] sm:$0xf]
      %v4392 = vld [vmem:[%s4383 + $0x30] sm:$0xf]
      %v4393 = vld [vmem:[%s4383 + $0x34] sm:$0xf]
      %v4394 = vld [vmem:[%s4383 + $0x3c] sm:$0xf]
      %v4395 = vld [vmem:[%s4383 + $0x40] sm:$0xf]
      %v4396 = vld [vmem:[%s4383 + $0x48] sm:$0xf]
      %v4397 = vld [vmem:[%s4383 + $0x4c] sm:$0xf]
      %v4398 = vld [vmem:[%s4383 + $0x54] sm:$0xf]
      %v4399 = vld [vmem:[%s4383 + $0x58] sm:$0xf]
      %v4400 = vld [vmem:[%s4383 + $0x60] sm:$0xf]
      %v4401 = vld [vmem:[%s4383 + $0x64] sm:$0xf]
      %v4402 = vld [vmem:[%s4383 + $0x6c] sm:$0xf]
      %v4403 = vld [vmem:[%s4383 + $0x70] sm:$0xf]
      %v4404 = vld [vmem:[%s4383 + $0x78] sm:$0xf]
      %v4405 = vld [vmem:[%s4383 + $0x7c] sm:$0xf]
      %v4406 = vld [vmem:[%s4383 + $0x84] sm:$0xf]
      %v4407 = vld [vmem:[%s4383 + $0x88] sm:$0xf]
      %v4408 = vld [vmem:[%s4383 + $0x90] sm:$0xf]
      %v4409 = vld [vmem:[%s4383 + $0x94] sm:$0xf]
      %v4410 = vld [vmem:[%s4383 + $0x9c] sm:$0xf]
      %v4411 = vld [vmem:[%s4383 + $0xa0] sm:$0xf]
      %v4412 = vld [vmem:[%s4383 + $0xa8] sm:$0xf]
      %v4413 = vld [vmem:[%s4383 + $0xac] sm:$0xf]
      %v4414 = vld [vmem:[%s4383 + $0xb4] sm:$0xf]
      %v4415 = vld [vmem:[%s4383 + $0xb8] sm:$0xf]
      %v4416 = vld [vmem:[%s4383 + $0x8] sm:$0x1]
      %v4417 = vld [vmem:[%s4383 + $0x14] sm:$0x1]
      %v4418 = vld [vmem:[%s4383 + $0x20] sm:$0x1]
      %v4419 = vld [vmem:[%s4383 + $0x2c] sm:$0x1]
      %v4420 = vld [vmem:[%s4383 + $0x38] sm:$0x1]
      %v4421 = vld [vmem:[%s4383 + $0x44] sm:$0x1]
      %v4422 = vld [vmem:[%s4383 + $0x50] sm:$0x1]
      %v4423 = vld [vmem:[%s4383 + $0x5c] sm:$0x1]
      %v4424 = vld [vmem:[%s4383 + $0x68] sm:$0x1]
      %v4425 = vld [vmem:[%s4383 + $0x74] sm:$0x1]
      %v4426 = vld [vmem:[%s4383 + $0x80] sm:$0x1]
      %v4427 = vld [vmem:[%s4383 + $0x8c] sm:$0x1]
      %v4428 = vld [vmem:[%s4383 + $0x98] sm:$0x1]
      %v4429 = vld [vmem:[%s4383 + $0xa4] sm:$0x1]
      %v4430 = vld [vmem:[%s4383 + $0xb0] sm:$0x1]
      %v4431 = vld [vmem:[%s4383 + $0xbc] sm:$0x1]
      %v4433 = vshrl.u32 %v4384, 16
      %v4435 = vrot.slane %v4433, 4
      %v4436 = vshll.u32 %v4384, 16
      %v4438 = vrot.slane %v4436, 5
      %v4439 = vor.u32 %v4435, %v4438
      %v4440 = vrot.slane %v4439, 4
      %v4442 = vshll.u32 %v4385, 16
      %v4444 = vrot.slane %v4442, 5
      %v4445 = vsel %vm1767, %v4440, %v4444
      %v4446 = vshrl.u32 %v4385, 16
      %v4448 = vrot.slane %v4446, 4
      %v4449 = vor.u32 %v4448, %v4444
      %v4450 = vrot.slane %v4449, 4
      %v4452 = vshll.u32 %v4416, 16
      %v4454 = vrot.slane %v4452, 5
      %v4455 = vsel %vm1767, %v4450, %v4454
      %v4457 = vshrl.u32 %v4386, 16
      %v4459 = vrot.slane %v4457, 4
      %v4460 = vshll.u32 %v4386, 16
      %v4462 = vrot.slane %v4460, 5
      %v4463 = vor.u32 %v4459, %v4462
      %v4464 = vrot.slane %v4463, 4
      %v4466 = vshll.u32 %v4387, 16
      %v4468 = vrot.slane %v4466, 5
      %v4469 = vsel %vm1767, %v4464, %v4468
      %v4470 = vshrl.u32 %v4387, 16
      %v4472 = vrot.slane %v4470, 4
      %v4473 = vor.u32 %v4472, %v4468
      %v4474 = vrot.slane %v4473, 4
      %v4476 = vshll.u32 %v4417, 16
      %v4478 = vrot.slane %v4476, 5
      %v4479 = vsel %vm1767, %v4474, %v4478
      %v4481 = vshrl.u32 %v4388, 16
      %v4483 = vrot.slane %v4481, 4
      %v4484 = vshll.u32 %v4388, 16
      %v4486 = vrot.slane %v4484, 5
      %v4487 = vor.u32 %v4483, %v4486
      %v4488 = vrot.slane %v4487, 4
      %v4490 = vshll.u32 %v4389, 16
      %v4492 = vrot.slane %v4490, 5
      %v4493 = vsel %vm1767, %v4488, %v4492
      %v4494 = vshrl.u32 %v4389, 16
      %v4496 = vrot.slane %v4494, 4
      %v4497 = vor.u32 %v4496, %v4492
      %v4498 = vrot.slane %v4497, 4
      %v4500 = vshll.u32 %v4418, 16
      %v4502 = vrot.slane %v4500, 5
      %v4503 = vsel %vm1767, %v4498, %v4502
      %v4505 = vshrl.u32 %v4390, 16
      %v4507 = vrot.slane %v4505, 4
      %v4508 = vshll.u32 %v4390, 16
      %v4510 = vrot.slane %v4508, 5
      %v4511 = vor.u32 %v4507, %v4510
      %v4512 = vrot.slane %v4511, 4
      %v4514 = vshll.u32 %v4391, 16
      %v4516 = vrot.slane %v4514, 5
      %v4517 = vsel %vm1767, %v4512, %v4516
      %v4518 = vshrl.u32 %v4391, 16
      %v4520 = vrot.slane %v4518, 4
      %v4521 = vor.u32 %v4520, %v4516
      %v4522 = vrot.slane %v4521, 4
      %v4524 = vshll.u32 %v4419, 16
      %v4526 = vrot.slane %v4524, 5
      %v4527 = vsel %vm1767, %v4522, %v4526
      %v4529 = vshrl.u32 %v4392, 16
      %v4531 = vrot.slane %v4529, 4
      %v4532 = vshll.u32 %v4392, 16
      %v4534 = vrot.slane %v4532, 5
      %v4535 = vor.u32 %v4531, %v4534
      %v4536 = vrot.slane %v4535, 4
      %v4538 = vshll.u32 %v4393, 16
      %v4540 = vrot.slane %v4538, 5
      %v4541 = vsel %vm1767, %v4536, %v4540
      %v4542 = vshrl.u32 %v4393, 16
      %v4544 = vrot.slane %v4542, 4
      %v4545 = vor.u32 %v4544, %v4540
      %v4546 = vrot.slane %v4545, 4
      %v4548 = vshll.u32 %v4420, 16
      %v4550 = vrot.slane %v4548, 5
      %v4551 = vsel %vm1767, %v4546, %v4550
      %v4553 = vshrl.u32 %v4394, 16
      %v4555 = vrot.slane %v4553, 4
      %v4556 = vshll.u32 %v4394, 16
      %v4558 = vrot.slane %v4556, 5
      %v4559 = vor.u32 %v4555, %v4558
      %v4560 = vrot.slane %v4559, 4
      %v4562 = vshll.u32 %v4395, 16
      %v4564 = vrot.slane %v4562, 5
      %v4565 = vsel %vm1767, %v4560, %v4564
      %v4566 = vshrl.u32 %v4395, 16
      %v4568 = vrot.slane %v4566, 4
      %v4569 = vor.u32 %v4568, %v4564
      %v4570 = vrot.slane %v4569, 4
      %v4572 = vshll.u32 %v4421, 16
      %v4574 = vrot.slane %v4572, 5
      %v4575 = vsel %vm1767, %v4570, %v4574
      %v4577 = vshrl.u32 %v4396, 16
      %v4579 = vrot.slane %v4577, 4
      %v4580 = vshll.u32 %v4396, 16
      %v4582 = vrot.slane %v4580, 5
      %v4583 = vor.u32 %v4579, %v4582
      %v4584 = vrot.slane %v4583, 4
      %v4586 = vshll.u32 %v4397, 16
      %v4588 = vrot.slane %v4586, 5
      %v4589 = vsel %vm1767, %v4584, %v4588
      %v4590 = vshrl.u32 %v4397, 16
      %v4592 = vrot.slane %v4590, 4
      %v4593 = vor.u32 %v4592, %v4588
      %v4594 = vrot.slane %v4593, 4
      %v4596 = vshll.u32 %v4422, 16
      %v4598 = vrot.slane %v4596, 5
      %v4599 = vsel %vm1767, %v4594, %v4598
      %v4601 = vshrl.u32 %v4398, 16
      %v4603 = vrot.slane %v4601, 4
      %v4604 = vshll.u32 %v4398, 16
      %v4606 = vrot.slane %v4604, 5
      %v4607 = vor.u32 %v4603, %v4606
      %v4608 = vrot.slane %v4607, 4
      %v4610 = vshll.u32 %v4399, 16
      %v4612 = vrot.slane %v4610, 5
      %v4613 = vsel %vm1767, %v4608, %v4612
      %v4614 = vshrl.u32 %v4399, 16
      %v4616 = vrot.slane %v4614, 4
      %v4617 = vor.u32 %v4616, %v4612
      %v4618 = vrot.slane %v4617, 4
      %v4620 = vshll.u32 %v4423, 16
      %v4622 = vrot.slane %v4620, 5
      %v4623 = vsel %vm1767, %v4618, %v4622
      %v4625 = vshrl.u32 %v4400, 16
      %v4627 = vrot.slane %v4625, 4
      %v4628 = vshll.u32 %v4400, 16
      %v4630 = vrot.slane %v4628, 5
      %v4631 = vor.u32 %v4627, %v4630
      %v4632 = vrot.slane %v4631, 4
      %v4634 = vshll.u32 %v4401, 16
      %v4636 = vrot.slane %v4634, 5
      %v4637 = vsel %vm1767, %v4632, %v4636
      %v4638 = vshrl.u32 %v4401, 16
      %v4640 = vrot.slane %v4638, 4
      %v4641 = vor.u32 %v4640, %v4636
      %v4642 = vrot.slane %v4641, 4
      %v4644 = vshll.u32 %v4424, 16
      %v4646 = vrot.slane %v4644, 5
      %v4647 = vsel %vm1767, %v4642, %v4646
      %v4649 = vshrl.u32 %v4402, 16
      %v4651 = vrot.slane %v4649, 4
      %v4652 = vshll.u32 %v4402, 16
      %v4654 = vrot.slane %v4652, 5
      %v4655 = vor.u32 %v4651, %v4654
      %v4656 = vrot.slane %v4655, 4
      %v4658 = vshll.u32 %v4403, 16
      %v4660 = vrot.slane %v4658, 5
      %v4661 = vsel %vm1767, %v4656, %v4660
      %v4662 = vshrl.u32 %v4403, 16
      %v4664 = vrot.slane %v4662, 4
      %v4665 = vor.u32 %v4664, %v4660
      %v4666 = vrot.slane %v4665, 4
      %v4668 = vshll.u32 %v4425, 16
      %v4670 = vrot.slane %v4668, 5
      %v4671 = vsel %vm1767, %v4666, %v4670
      %v4673 = vshrl.u32 %v4404, 16
      %v4675 = vrot.slane %v4673, 4
      %v4676 = vshll.u32 %v4404, 16
      %v4678 = vrot.slane %v4676, 5
      %v4679 = vor.u32 %v4675, %v4678
      %v4680 = vrot.slane %v4679, 4
      %v4682 = vshll.u32 %v4405, 16
      %v4684 = vrot.slane %v4682, 5
      %v4685 = vsel %vm1767, %v4680, %v4684
      %v4686 = vshrl.u32 %v4405, 16
      %v4688 = vrot.slane %v4686, 4
      %v4689 = vor.u32 %v4688, %v4684
      %v4690 = vrot.slane %v4689, 4
      %v4692 = vshll.u32 %v4426, 16
      %v4694 = vrot.slane %v4692, 5
      %v4695 = vsel %vm1767, %v4690, %v4694
      %v4697 = vshrl.u32 %v4406, 16
      %v4699 = vrot.slane %v4697, 4
      %v4700 = vshll.u32 %v4406, 16
      %v4702 = vrot.slane %v4700, 5
      %v4703 = vor.u32 %v4699, %v4702
      %v4704 = vrot.slane %v4703, 4
      %v4706 = vshll.u32 %v4407, 16
      %v4708 = vrot.slane %v4706, 5
      %v4709 = vsel %vm1767, %v4704, %v4708
      %v4710 = vshrl.u32 %v4407, 16
      %v4712 = vrot.slane %v4710, 4
      %v4713 = vor.u32 %v4712, %v4708
      %v4714 = vrot.slane %v4713, 4
      %v4716 = vshll.u32 %v4427, 16
      %v4718 = vrot.slane %v4716, 5
      %v4719 = vsel %vm1767, %v4714, %v4718
      %v4721 = vshrl.u32 %v4408, 16
      %v4723 = vrot.slane %v4721, 4
      %v4724 = vshll.u32 %v4408, 16
      %v4726 = vrot.slane %v4724, 5
      %v4727 = vor.u32 %v4723, %v4726
      %v4728 = vrot.slane %v4727, 4
      %v4730 = vshll.u32 %v4409, 16
      %v4732 = vrot.slane %v4730, 5
      %v4733 = vsel %vm1767, %v4728, %v4732
      %v4734 = vshrl.u32 %v4409, 16
      %v4736 = vrot.slane %v4734, 4
      %v4737 = vor.u32 %v4736, %v4732
      %v4738 = vrot.slane %v4737, 4
      %v4740 = vshll.u32 %v4428, 16
      %v4742 = vrot.slane %v4740, 5
      %v4743 = vsel %vm1767, %v4738, %v4742
      %v4745 = vshrl.u32 %v4410, 16
      %v4747 = vrot.slane %v4745, 4
      %v4748 = vshll.u32 %v4410, 16
      %v4750 = vrot.slane %v4748, 5
      %v4751 = vor.u32 %v4747, %v4750
      %v4752 = vrot.slane %v4751, 4
      %v4754 = vshll.u32 %v4411, 16
      %v4756 = vrot.slane %v4754, 5
      %v4757 = vsel %vm1767, %v4752, %v4756
      %v4758 = vshrl.u32 %v4411, 16
      %v4760 = vrot.slane %v4758, 4
      %v4761 = vor.u32 %v4760, %v4756
      %v4762 = vrot.slane %v4761, 4
      %v4764 = vshll.u32 %v4429, 16
      %v4766 = vrot.slane %v4764, 5
      %v4767 = vsel %vm1767, %v4762, %v4766
      %v4769 = vshrl.u32 %v4412, 16
      %v4771 = vrot.slane %v4769, 4
      %v4772 = vshll.u32 %v4412, 16
      %v4774 = vrot.slane %v4772, 5
      %v4775 = vor.u32 %v4771, %v4774
      %v4776 = vrot.slane %v4775, 4
      %v4778 = vshll.u32 %v4413, 16
      %v4780 = vrot.slane %v4778, 5
      %v4781 = vsel %vm1767, %v4776, %v4780
      %v4782 = vshrl.u32 %v4413, 16
      %v4784 = vrot.slane %v4782, 4
      %v4785 = vor.u32 %v4784, %v4780
      %v4786 = vrot.slane %v4785, 4
      %v4788 = vshll.u32 %v4430, 16
      %v4790 = vrot.slane %v4788, 5
      %v4791 = vsel %vm1767, %v4786, %v4790
      %v4793 = vshrl.u32 %v4414, 16
      %v4795 = vrot.slane %v4793, 4
      %v4796 = vshll.u32 %v4414, 16
      %v4798 = vrot.slane %v4796, 5
      %v4799 = vor.u32 %v4795, %v4798
      %v4800 = vrot.slane %v4799, 4
      %v4802 = vshll.u32 %v4415, 16
      %v4804 = vrot.slane %v4802, 5
      %v4805 = vsel %vm1767, %v4800, %v4804
      %v4806 = vshrl.u32 %v4415, 16
      %v4808 = vrot.slane %v4806, 4
      %v4809 = vor.u32 %v4808, %v4804
      %v4810 = vrot.slane %v4809, 4
      %v4812 = vshll.u32 %v4431, 16
      %v4814 = vrot.slane %v4812, 5
      %v4815 = vsel %vm1767, %v4810, %v4814
      %v4816 = vld [vmem:[%s4383] sm:$0xe]
      %v4817 = vld [vmem:[%s4383 + $0xc] sm:$0xe]
      %v4818 = vld [vmem:[%s4383 + $0x18] sm:$0xe]
      %v4819 = vld [vmem:[%s4383 + $0x24] sm:$0xe]
      %v4820 = vld [vmem:[%s4383 + $0x30] sm:$0xe]
      %v4821 = vld [vmem:[%s4383 + $0x3c] sm:$0xe]
      %v4822 = vld [vmem:[%s4383 + $0x48] sm:$0xe]
      %v4823 = vld [vmem:[%s4383 + $0x54] sm:$0xe]
      %v4824 = vld [vmem:[%s4383 + $0x60] sm:$0xe]
      %v4825 = vld [vmem:[%s4383 + $0x6c] sm:$0xe]
      %v4826 = vld [vmem:[%s4383 + $0x78] sm:$0xe]
      %v4827 = vld [vmem:[%s4383 + $0x84] sm:$0xe]
      %v4828 = vld [vmem:[%s4383 + $0x90] sm:$0xe]
      %v4829 = vld [vmem:[%s4383 + $0x9c] sm:$0xe]
      %v4830 = vld [vmem:[%s4383 + $0xa8] sm:$0xe]
      %v4831 = vld [vmem:[%s4383 + $0xb4] sm:$0xe]
      %v4880 = vrot.slane %v4816, 5
      %v4881 = vrot.slane %v4880, 4
      %v4882 = vrot.slane %v4385, 5
      %v4883 = vsel %vm2218, %v4881, %v4882
      %v4884 = vrot.slane %v4882, 4
      %v4885 = vrot.slane %v4416, 5
      %v4886 = vsel %vm2218, %v4884, %v4885
      %v4887 = vrot.slane %v4817, 5
      %v4888 = vrot.slane %v4887, 4
      %v4889 = vrot.slane %v4387, 5
      %v4890 = vsel %vm2218, %v4888, %v4889
      %v4891 = vrot.slane %v4889, 4
      %v4892 = vrot.slane %v4417, 5
      %v4893 = vsel %vm2218, %v4891, %v4892
      %v4894 = vrot.slane %v4818, 5
      %v4895 = vrot.slane %v4894, 4
      %v4896 = vrot.slane %v4389, 5
      %v4897 = vsel %vm2218, %v4895, %v4896
      %v4898 = vrot.slane %v4896, 4
      %v4899 = vrot.slane %v4418, 5
      %v4900 = vsel %vm2218, %v4898, %v4899
      %v4901 = vrot.slane %v4819, 5
      %v4902 = vrot.slane %v4901, 4
      %v4903 = vrot.slane %v4391, 5
      %v4904 = vsel %vm2218, %v4902, %v4903
      %v4905 = vrot.slane %v4903, 4
      %v4906 = vrot.slane %v4419, 5
      %v4907 = vsel %vm2218, %v4905, %v4906
      %v4908 = vrot.slane %v4820, 5
      %v4909 = vrot.slane %v4908, 4
      %v4910 = vrot.slane %v4393, 5
      %v4911 = vsel %vm2218, %v4909, %v4910
      %v4912 = vrot.slane %v4910, 4
      %v4913 = vrot.slane %v4420, 5
      %v4914 = vsel %vm2218, %v4912, %v4913
      %v4915 = vrot.slane %v4821, 5
      %v4916 = vrot.slane %v4915, 4
      %v4917 = vrot.slane %v4395, 5
      %v4918 = vsel %vm2218, %v4916, %v4917
      %v4919 = vrot.slane %v4917, 4
      %v4920 = vrot.slane %v4421, 5
      %v4921 = vsel %vm2218, %v4919, %v4920
      %v4922 = vrot.slane %v4822, 5
      %v4923 = vrot.slane %v4922, 4
      %v4924 = vrot.slane %v4397, 5
      %v4925 = vsel %vm2218, %v4923, %v4924
      %v4926 = vrot.slane %v4924, 4
      %v4927 = vrot.slane %v4422, 5
      %v4928 = vsel %vm2218, %v4926, %v4927
      %v4929 = vrot.slane %v4823, 5
      %v4930 = vrot.slane %v4929, 4
      %v4931 = vrot.slane %v4399, 5
      %v4932 = vsel %vm2218, %v4930, %v4931
      %v4933 = vrot.slane %v4931, 4
      %v4934 = vrot.slane %v4423, 5
      %v4935 = vsel %vm2218, %v4933, %v4934
      %v4936 = vrot.slane %v4824, 5
      %v4937 = vrot.slane %v4936, 4
      %v4938 = vrot.slane %v4401, 5
      %v4939 = vsel %vm2218, %v4937, %v4938
      %v4940 = vrot.slane %v4938, 4
      %v4941 = vrot.slane %v4424, 5
      %v4942 = vsel %vm2218, %v4940, %v4941
      %v4943 = vrot.slane %v4825, 5
      %v4944 = vrot.slane %v4943, 4
      %v4945 = vrot.slane %v4403, 5
      %v4946 = vsel %vm2218, %v4944, %v4945
      %v4947 = vrot.slane %v4945, 4
      %v4948 = vrot.slane %v4425, 5
      %v4949 = vsel %vm2218, %v4947, %v4948
      %v4950 = vrot.slane %v4826, 5
      %v4951 = vrot.slane %v4950, 4
      %v4952 = vrot.slane %v4405, 5
      %v4953 = vsel %vm2218, %v4951, %v4952
      %v4954 = vrot.slane %v4952, 4
      %v4955 = vrot.slane %v4426, 5
      %v4956 = vsel %vm2218, %v4954, %v4955
      %v4957 = vrot.slane %v4827, 5
      %v4958 = vrot.slane %v4957, 4
      %v4959 = vrot.slane %v4407, 5
      %v4960 = vsel %vm2218, %v4958, %v4959
      %v4961 = vrot.slane %v4959, 4
      %v4962 = vrot.slane %v4427, 5
      %v4963 = vsel %vm2218, %v4961, %v4962
      %v4964 = vrot.slane %v4828, 5
      %v4965 = vrot.slane %v4964, 4
      %v4966 = vrot.slane %v4409, 5
      %v4967 = vsel %vm2218, %v4965, %v4966
      %v4968 = vrot.slane %v4966, 4
      %v4969 = vrot.slane %v4428, 5
      %v4970 = vsel %vm2218, %v4968, %v4969
      %v4971 = vrot.slane %v4829, 5
      %v4972 = vrot.slane %v4971, 4
      %v4973 = vrot.slane %v4411, 5
      %v4974 = vsel %vm2218, %v4972, %v4973
      %v4975 = vrot.slane %v4973, 4
      %v4976 = vrot.slane %v4429, 5
      %v4977 = vsel %vm2218, %v4975, %v4976
      %v4978 = vrot.slane %v4830, 5
      %v4979 = vrot.slane %v4978, 4
      %v4980 = vrot.slane %v4413, 5
      %v4981 = vsel %vm2218, %v4979, %v4980
      %v4982 = vrot.slane %v4980, 4
      %v4983 = vrot.slane %v4430, 5
      %v4984 = vsel %vm2218, %v4982, %v4983
      %v4985 = vrot.slane %v4831, 5
      %v4986 = vrot.slane %v4985, 4
      %v4987 = vrot.slane %v4415, 5
      %v4988 = vsel %vm2218, %v4986, %v4987
      %v4989 = vrot.slane %v4987, 4
      %v4990 = vrot.slane %v4431, 5
      %v4991 = vsel %vm2218, %v4989, %v4990
      %v5008 = vunpack.c.l.b16 %v4384
      %v5009 = vunpack.c.l.b16 %v4385
      %v5010 = vunpack.c.l.b16 %v4386
      %v5011 = vunpack.c.l.b16 %v4387
      %v5012 = vunpack.c.l.b16 %v4388
      %v5013 = vunpack.c.l.b16 %v4389
      %v5014 = vunpack.c.l.b16 %v4390
      %v5015 = vunpack.c.l.b16 %v4391
      %v5016 = vunpack.c.l.b16 %v4392
      %v5017 = vunpack.c.l.b16 %v4393
      %v5018 = vunpack.c.l.b16 %v4394
      %v5019 = vunpack.c.l.b16 %v4395
      %v5020 = vunpack.c.l.b16 %v4396
      %v5021 = vunpack.c.l.b16 %v4397
      %v5022 = vunpack.c.l.b16 %v4398
      %v5023 = vunpack.c.l.b16 %v4399
      %v5024 = vunpack.c.l.b16 %v4400
      %v5025 = vunpack.c.l.b16 %v4401
      %v5026 = vunpack.c.l.b16 %v4402
      %v5027 = vunpack.c.l.b16 %v4403
      %v5028 = vunpack.c.l.b16 %v4404
      %v5029 = vunpack.c.l.b16 %v4405
      %v5030 = vunpack.c.l.b16 %v4406
      %v5031 = vunpack.c.l.b16 %v4407
      %v5032 = vunpack.c.l.b16 %v4408
      %v5033 = vunpack.c.l.b16 %v4409
      %v5034 = vunpack.c.l.b16 %v4410
      %v5035 = vunpack.c.l.b16 %v4411
      %v5036 = vunpack.c.l.b16 %v4412
      %v5037 = vunpack.c.l.b16 %v4413
      %v5038 = vunpack.c.l.b16 %v4414
      %v5039 = vunpack.c.l.b16 %v4415
      %v5040 = vpack.c.b16 %v5009, %v5008
      %v5041 = vpack.c.b16 %v5011, %v5010
      %v5042 = vpack.c.b16 %v5013, %v5012
      %v5043 = vpack.c.b16 %v5015, %v5014
      %v5044 = vpack.c.b16 %v5017, %v5016
      %v5045 = vpack.c.b16 %v5019, %v5018
      %v5046 = vpack.c.b16 %v5021, %v5020
      %v5047 = vpack.c.b16 %v5023, %v5022
      %v5048 = vpack.c.b16 %v5025, %v5024
      %v5049 = vpack.c.b16 %v5027, %v5026
      %v5050 = vpack.c.b16 %v5029, %v5028
      %v5051 = vpack.c.b16 %v5031, %v5030
      %v5052 = vpack.c.b16 %v5033, %v5032
      %v5053 = vpack.c.b16 %v5035, %v5034
      %v5054 = vpack.c.b16 %v5037, %v5036
      %v5055 = vpack.c.b16 %v5039, %v5038
      %v5072 = vunpack.c.l.b16 %v4445
      %v5073 = vunpack.c.l.b16 %v4455
      %v5074 = vunpack.c.l.b16 %v4469
      %v5075 = vunpack.c.l.b16 %v4479
      %v5076 = vunpack.c.l.b16 %v4493
      %v5077 = vunpack.c.l.b16 %v4503
      %v5078 = vunpack.c.l.b16 %v4517
      %v5079 = vunpack.c.l.b16 %v4527
      %v5080 = vunpack.c.l.b16 %v4541
      %v5081 = vunpack.c.l.b16 %v4551
      %v5082 = vunpack.c.l.b16 %v4565
      %v5083 = vunpack.c.l.b16 %v4575
      %v5084 = vunpack.c.l.b16 %v4589
      %v5085 = vunpack.c.l.b16 %v4599
      %v5086 = vunpack.c.l.b16 %v4613
      %v5087 = vunpack.c.l.b16 %v4623
      %v5088 = vunpack.c.l.b16 %v4637
      %v5089 = vunpack.c.l.b16 %v4647
      %v5090 = vunpack.c.l.b16 %v4661
      %v5091 = vunpack.c.l.b16 %v4671
      %v5092 = vunpack.c.l.b16 %v4685
      %v5093 = vunpack.c.l.b16 %v4695
      %v5094 = vunpack.c.l.b16 %v4709
      %v5095 = vunpack.c.l.b16 %v4719
      %v5096 = vunpack.c.l.b16 %v4733
      %v5097 = vunpack.c.l.b16 %v4743
      %v5098 = vunpack.c.l.b16 %v4757
      %v5099 = vunpack.c.l.b16 %v4767
      %v5100 = vunpack.c.l.b16 %v4781
      %v5101 = vunpack.c.l.b16 %v4791
      %v5102 = vunpack.c.l.b16 %v4805
      %v5103 = vunpack.c.l.b16 %v4815
      %v5104 = vpack.c.b16 %v5073, %v5072
      %v5105 = vpack.c.b16 %v5075, %v5074
      %v5106 = vpack.c.b16 %v5077, %v5076
      %v5107 = vpack.c.b16 %v5079, %v5078
      %v5108 = vpack.c.b16 %v5081, %v5080
      %v5109 = vpack.c.b16 %v5083, %v5082
      %v5110 = vpack.c.b16 %v5085, %v5084
      %v5111 = vpack.c.b16 %v5087, %v5086
      %v5112 = vpack.c.b16 %v5089, %v5088
      %v5113 = vpack.c.b16 %v5091, %v5090
      %v5114 = vpack.c.b16 %v5093, %v5092
      %v5115 = vpack.c.b16 %v5095, %v5094
      %v5116 = vpack.c.b16 %v5097, %v5096
      %v5117 = vpack.c.b16 %v5099, %v5098
      %v5118 = vpack.c.b16 %v5101, %v5100
      %v5119 = vpack.c.b16 %v5103, %v5102
      %v5136 = vunpack.c.l.b16 %v4883
      %v5137 = vunpack.c.l.b16 %v4886
      %v5138 = vunpack.c.l.b16 %v4890
      %v5139 = vunpack.c.l.b16 %v4893
      %v5140 = vunpack.c.l.b16 %v4897
      %v5141 = vunpack.c.l.b16 %v4900
      %v5142 = vunpack.c.l.b16 %v4904
      %v5143 = vunpack.c.l.b16 %v4907
      %v5144 = vunpack.c.l.b16 %v4911
      %v5145 = vunpack.c.l.b16 %v4914
      %v5146 = vunpack.c.l.b16 %v4918
      %v5147 = vunpack.c.l.b16 %v4921
      %v5148 = vunpack.c.l.b16 %v4925
      %v5149 = vunpack.c.l.b16 %v4928
      %v5150 = vunpack.c.l.b16 %v4932
      %v5151 = vunpack.c.l.b16 %v4935
      %v5152 = vunpack.c.l.b16 %v4939
      %v5153 = vunpack.c.l.b16 %v4942
      %v5154 = vunpack.c.l.b16 %v4946
      %v5155 = vunpack.c.l.b16 %v4949
      %v5156 = vunpack.c.l.b16 %v4953
      %v5157 = vunpack.c.l.b16 %v4956
      %v5158 = vunpack.c.l.b16 %v4960
      %v5159 = vunpack.c.l.b16 %v4963
      %v5160 = vunpack.c.l.b16 %v4967
      %v5161 = vunpack.c.l.b16 %v4970
      %v5162 = vunpack.c.l.b16 %v4974
      %v5163 = vunpack.c.l.b16 %v4977
      %v5164 = vunpack.c.l.b16 %v4981
      %v5165 = vunpack.c.l.b16 %v4984
      %v5166 = vunpack.c.l.b16 %v4988
      %v5167 = vunpack.c.l.b16 %v4991
      %v5168 = vpack.c.b16 %v5137, %v5136
      %v5169 = vpack.c.b16 %v5139, %v5138
      %v5170 = vpack.c.b16 %v5141, %v5140
      %v5171 = vpack.c.b16 %v5143, %v5142
      %v5172 = vpack.c.b16 %v5145, %v5144
      %v5173 = vpack.c.b16 %v5147, %v5146
      %v5174 = vpack.c.b16 %v5149, %v5148
      %v5175 = vpack.c.b16 %v5151, %v5150
      %v5176 = vpack.c.b16 %v5153, %v5152
      %v5177 = vpack.c.b16 %v5155, %v5154
      %v5178 = vpack.c.b16 %v5157, %v5156
      %v5179 = vpack.c.b16 %v5159, %v5158
      %v5180 = vpack.c.b16 %v5161, %v5160
      %v5181 = vpack.c.b16 %v5163, %v5162
      %v5182 = vpack.c.b16 %v5165, %v5164
      %v5183 = vpack.c.b16 %v5167, %v5166
      %v5200 = vld [vmem:[%s5 + $0x180] sm:$0xf]
      %v5201 = vld [vmem:[%s5 + $0x184] sm:$0xf]
      %v5202 = vld [vmem:[%s5 + $0x188] sm:$0xf]
      %v5203 = vld [vmem:[%s5 + $0x18c] sm:$0xf]
      %v5204 = vld [vmem:[%s5 + $0x190] sm:$0xf]
      %v5205 = vld [vmem:[%s5 + $0x194] sm:$0xf]
      %v5206 = vld [vmem:[%s5 + $0x198] sm:$0xf]
      %v5207 = vld [vmem:[%s5 + $0x19c] sm:$0xf]
      %v5208 = vld [vmem:[%s5 + $0x1a0] sm:$0xf]
      %v5209 = vld [vmem:[%s5 + $0x1a4] sm:$0xf]
      %v5210 = vld [vmem:[%s5 + $0x1a8] sm:$0xf]
      %v5211 = vld [vmem:[%s5 + $0x1ac] sm:$0xf]
      %v5212 = vld [vmem:[%s5 + $0x1b0] sm:$0xf]
      %v5213 = vld [vmem:[%s5 + $0x1b4] sm:$0xf]
      %v5214 = vld [vmem:[%s5 + $0x1b8] sm:$0xf]
      %v5215 = vld [vmem:[%s5 + $0x1bc] sm:$0xf]
      %v5216 = vld [vmem:[%s5 + $0x1c0] sm:$0xf]
      %v5217 = vld [vmem:[%s5 + $0x1c4] sm:$0xf]
      %v5218 = vld [vmem:[%s5 + $0x1c8] sm:$0xf]
      %v5219 = vld [vmem:[%s5 + $0x1cc] sm:$0xf]
      %v5220 = vld [vmem:[%s5 + $0x1d0] sm:$0xf]
      %v5221 = vld [vmem:[%s5 + $0x1d4] sm:$0xf]
      %v5222 = vld [vmem:[%s5 + $0x1d8] sm:$0xf]
      %v5223 = vld [vmem:[%s5 + $0x1dc] sm:$0xf]
      %v5224 = vld [vmem:[%s5 + $0x1e0] sm:$0xf]
      %v5225 = vld [vmem:[%s5 + $0x1e4] sm:$0xf]
      %v5226 = vld [vmem:[%s5 + $0x1e8] sm:$0xf]
      %v5227 = vld [vmem:[%s5 + $0x1ec] sm:$0xf]
      %v5228 = vld [vmem:[%s5 + $0x1f0] sm:$0xf]
      %v5229 = vld [vmem:[%s5 + $0x1f4] sm:$0xf]
      %v5230 = vld [vmem:[%s5 + $0x1f8] sm:$0xf]
      %v5231 = vld [vmem:[%s5 + $0x1fc] sm:$0xf]
      %v5232 = vld [vmem:[%s5 + $0x200] sm:$0xf]
      %v5233 = vld [vmem:[%s5 + $0x204] sm:$0xf]
      %v5234 = vld [vmem:[%s5 + $0x208] sm:$0xf]
      %v5235 = vld [vmem:[%s5 + $0x20c] sm:$0xf]
      %v5236 = vld [vmem:[%s5 + $0x210] sm:$0xf]
      %v5237 = vld [vmem:[%s5 + $0x214] sm:$0xf]
      %v5238 = vld [vmem:[%s5 + $0x218] sm:$0xf]
      %v5239 = vld [vmem:[%s5 + $0x21c] sm:$0xf]
      %v5240 = vld [vmem:[%s5 + $0x220] sm:$0xf]
      %v5241 = vld [vmem:[%s5 + $0x224] sm:$0xf]
      %v5242 = vld [vmem:[%s5 + $0x228] sm:$0xf]
      %v5243 = vld [vmem:[%s5 + $0x22c] sm:$0xf]
      %v5244 = vld [vmem:[%s5 + $0x230] sm:$0xf]
      %v5245 = vld [vmem:[%s5 + $0x234] sm:$0xf]
      %v5246 = vld [vmem:[%s5 + $0x238] sm:$0xf]
      %v5247 = vld [vmem:[%s5 + $0x23c] sm:$0xf]
      %v5296 = vunpack.c.l.b16 %v5200
      %v5297 = vunpack.c.l.b16 %v5201
      %v5298 = vunpack.c.l.b16 %v5202
      %v5299 = vunpack.c.l.b16 %v5203
      %v5300 = vunpack.c.l.b16 %v5204
      %v5301 = vunpack.c.l.b16 %v5205
      %v5302 = vunpack.c.l.b16 %v5206
      %v5303 = vunpack.c.l.b16 %v5207
      %v5304 = vunpack.c.l.b16 %v5208
      %v5305 = vunpack.c.l.b16 %v5209
      %v5306 = vunpack.c.l.b16 %v5210
      %v5307 = vunpack.c.l.b16 %v5211
      %v5308 = vunpack.c.l.b16 %v5212
      %v5309 = vunpack.c.l.b16 %v5213
      %v5310 = vunpack.c.l.b16 %v5214
      %v5311 = vunpack.c.l.b16 %v5215
      %v5312 = vunpack.c.l.b16 %v5216
      %v5313 = vunpack.c.l.b16 %v5217
      %v5314 = vunpack.c.l.b16 %v5218
      %v5315 = vunpack.c.l.b16 %v5219
      %v5316 = vunpack.c.l.b16 %v5220
      %v5317 = vunpack.c.l.b16 %v5221
      %v5318 = vunpack.c.l.b16 %v5222
      %v5319 = vunpack.c.l.b16 %v5223
      %v5320 = vunpack.c.l.b16 %v5224
      %v5321 = vunpack.c.l.b16 %v5225
      %v5322 = vunpack.c.l.b16 %v5226
      %v5323 = vunpack.c.l.b16 %v5227
      %v5324 = vunpack.c.l.b16 %v5228
      %v5325 = vunpack.c.l.b16 %v5229
      %v5326 = vunpack.c.l.b16 %v5230
      %v5327 = vunpack.c.l.b16 %v5231
      %v5328 = vunpack.c.l.b16 %v5232
      %v5329 = vunpack.c.l.b16 %v5233
      %v5330 = vunpack.c.l.b16 %v5234
      %v5331 = vunpack.c.l.b16 %v5235
      %v5332 = vunpack.c.l.b16 %v5236
      %v5333 = vunpack.c.l.b16 %v5237
      %v5334 = vunpack.c.l.b16 %v5238
      %v5335 = vunpack.c.l.b16 %v5239
      %v5336 = vunpack.c.l.b16 %v5240
      %v5337 = vunpack.c.l.b16 %v5241
      %v5338 = vunpack.c.l.b16 %v5242
      %v5339 = vunpack.c.l.b16 %v5243
      %v5340 = vunpack.c.l.b16 %v5244
      %v5341 = vunpack.c.l.b16 %v5245
      %v5342 = vunpack.c.l.b16 %v5246
      %v5343 = vunpack.c.l.b16 %v5247
      %v5344 = vpack.c.b16 %v5297, %v5296
      %v5345 = vpack.c.b16 %v5299, %v5298
      %v5346 = vpack.c.b16 %v5301, %v5300
      %v5347 = vpack.c.b16 %v5303, %v5302
      %v5348 = vpack.c.b16 %v5305, %v5304
      %v5349 = vpack.c.b16 %v5307, %v5306
      %v5350 = vpack.c.b16 %v5309, %v5308
      %v5351 = vpack.c.b16 %v5311, %v5310
      %v5352 = vpack.c.b16 %v5313, %v5312
      %v5353 = vpack.c.b16 %v5315, %v5314
      %v5354 = vpack.c.b16 %v5317, %v5316
      %v5355 = vpack.c.b16 %v5319, %v5318
      %v5356 = vpack.c.b16 %v5321, %v5320
      %v5357 = vpack.c.b16 %v5323, %v5322
      %v5358 = vpack.c.b16 %v5325, %v5324
      %v5359 = vpack.c.b16 %v5327, %v5326
      %v5360 = vpack.c.b16 %v5329, %v5328
      %v5361 = vpack.c.b16 %v5331, %v5330
      %v5362 = vpack.c.b16 %v5333, %v5332
      %v5363 = vpack.c.b16 %v5335, %v5334
      %v5364 = vpack.c.b16 %v5337, %v5336
      %v5365 = vpack.c.b16 %v5339, %v5338
      %v5366 = vpack.c.b16 %v5341, %v5340
      %v5367 = vpack.c.b16 %v5343, %v5342
      %5392 = vmatprep.subr.bf16.mxu0 0
      %5393 = vmatpush1.bf16.msra.mxu0 %v5344
      %5394 = vmatprep.subr.bf16.mxu0 0
      %5395 = vmatpush1.bf16.msra.mxu0 %v5345
      %5396 = vmatprep.subr.bf16.mxu0 0
      %5397 = vmatpush1.bf16.msra.mxu0 %v5346
      %5398 = vmatprep.subr.bf16.mxu0 0
      %5399 = vmatpush1.bf16.msra.mxu0 %v5347
      %5400 = vmatprep.subr.bf16.mxu0 0
      %5401 = vmatpush1.bf16.msra.mxu0 %v5348
      %5402 = vmatprep.subr.bf16.mxu0 0
      %5403 = vmatpush1.bf16.msra.mxu0 %v5349
      %5404 = vmatprep.subr.bf16.mxu0 0
      %5405 = vmatpush1.bf16.msra.mxu0 %v5350
      %5406 = vmatprep.subr.bf16.mxu0 0
      %5407 = vmatpush1.bf16.msra.mxu0 %v5351
      %5408 = vmatprep.subr.bf16.mxu0 0
      %5409 = vmatpush1.bf16.msra.mxu0 %v5352
      %5410 = vmatprep.subr.bf16.mxu0 0
      %5411 = vmatpush1.bf16.msra.mxu0 %v5353
      %5412 = vmatprep.subr.bf16.mxu0 0
      %5413 = vmatpush1.bf16.msra.mxu0 %v5354
      %5414 = vmatprep.subr.bf16.mxu0 0
      %5415 = vmatpush1.bf16.msra.mxu0 %v5355
      %5416 = vmatprep.subr.bf16.mxu0 0
      %5417 = vmatpush1.bf16.msra.mxu0 %v5356
      %5418 = vmatprep.subr.bf16.mxu0 0
      %5419 = vmatpush1.bf16.msra.mxu0 %v5357
      %5420 = vmatprep.subr.bf16.mxu0 0
      %5421 = vmatpush1.bf16.msra.mxu0 %v5358
      %5422 = vmatprep.subr.bf16.mxu0 0
      %5423 = vmatpush1.bf16.msra.mxu0 %v5359
      %5424 = vmatprep.mubr.bf16.mxu0 %v5104
      %5425 = vmatmul.mubr.bf16.gmra.mrb[0].mxu0 %v5040
      %v5426 = vpop.f32.mrb[0].mxu0
      %v5427 = vadd.f32 0.0, %v5426
      %v5428 = vpop.f32.mrb[0].mxu0
      %v5429 = vpop.f32.mrb[0].mxu0
      %v5430 = vadd.f32 0.0, %v5429
      %v5431 = vpop.f32.mrb[0].mxu0
      %5432 = vmatprep.mubr.bf16.mxu0 %v5105
      %5433 = vmatmul.mubr.bf16.gmra.mrb[0].mxu0 %v5041
      %v5434 = vpop.f32.mrb[0].mxu0
      %v5435 = vadd.f32 0.0, %v5434
      %v5436 = vpop.f32.mrb[0].mxu0
      %v5437 = vpop.f32.mrb[0].mxu0
      %v5438 = vadd.f32 0.0, %v5437
      %v5439 = vpop.f32.mrb[0].mxu0
      %5440 = vmatprep.mubr.bf16.mxu0 %v5106
      %5441 = vmatmul.mubr.bf16.gmra.mrb[0].mxu0 %v5042
      %v5442 = vpop.f32.mrb[0].mxu0
      %v5443 = vadd.f32 0.0, %v5442
      %v5444 = vpop.f32.mrb[0].mxu0
      %v5445 = vpop.f32.mrb[0].mxu0
      %v5446 = vadd.f32 0.0, %v5445
      %v5447 = vpop.f32.mrb[0].mxu0
      %5448 = vmatprep.mubr.bf16.mxu0 %v5107
      %5449 = vmatmul.mubr.bf16.gmra.mrb[0].mxu0 %v5043
      %v5450 = vpop.f32.mrb[0].mxu0
      %v5451 = vadd.f32 0.0, %v5450
      %v5452 = vpop.f32.mrb[0].mxu0
      %v5453 = vpop.f32.mrb[0].mxu0
      %v5454 = vadd.f32 0.0, %v5453
      %v5455 = vpop.f32.mrb[0].mxu0
      %5456 = vmatprep.mubr.bf16.mxu0 %v5108
      %5457 = vmatmul.mubr.bf16.gmra.mrb[0].mxu0 %v5044
      %v5458 = vpop.f32.mrb[0].mxu0
      %v5459 = vadd.f32 0.0, %v5458
      %v5460 = vpop.f32.mrb[0].mxu0
      %v5461 = vpop.f32.mrb[0].mxu0
      %v5462 = vadd.f32 0.0, %v5461
      %v5463 = vpop.f32.mrb[0].mxu0
      %5464 = vmatprep.mubr.bf16.mxu0 %v5109
      %5465 = vmatmul.mubr.bf16.gmra.mrb[0].mxu0 %v5045
      %v5466 = vpop.f32.mrb[0].mxu0
      %v5467 = vadd.f32 0.0, %v5466
      %v5468 = vpop.f32.mrb[0].mxu0
      %v5469 = vpop.f32.mrb[0].mxu0
      %v5470 = vadd.f32 0.0, %v5469
      %v5471 = vpop.f32.mrb[0].mxu0
      %5472 = vmatprep.mubr.bf16.mxu0 %v5110
      %5473 = vmatmul.mubr.bf16.gmra.mrb[0].mxu0 %v5046
      %v5474 = vpop.f32.mrb[0].mxu0
      %v5475 = vadd.f32 0.0, %v5474
      %v5476 = vpop.f32.mrb[0].mxu0
      %v5477 = vpop.f32.mrb[0].mxu0
      %v5478 = vadd.f32 0.0, %v5477
      %v5479 = vpop.f32.mrb[0].mxu0
      %5480 = vmatprep.mubr.bf16.mxu0 %v5111
      %5481 = vmatmul.mubr.bf16.gmra.mrb[0].mxu0 %v5047
      %v5482 = vpop.f32.mrb[0].mxu0
      %v5483 = vadd.f32 0.0, %v5482
      %v5484 = vpop.f32.mrb[0].mxu0
      %v5485 = vpop.f32.mrb[0].mxu0
      %v5486 = vadd.f32 0.0, %v5485
      %v5487 = vpop.f32.mrb[0].mxu0
      %5488 = vmatprep.mubr.bf16.mxu0 %v5112
      %5489 = vmatmul.mubr.bf16.gmra.mrb[0].mxu0 %v5048
      %v5490 = vpop.f32.mrb[0].mxu0
      %v5491 = vadd.f32 0.0, %v5490
      %v5492 = vpop.f32.mrb[0].mxu0
      %v5493 = vpop.f32.mrb[0].mxu0
      %v5494 = vadd.f32 0.0, %v5493
      %v5495 = vpop.f32.mrb[0].mxu0
      %5496 = vmatprep.mubr.bf16.mxu0 %v5113
      %5497 = vmatmul.mubr.bf16.gmra.mrb[0].mxu0 %v5049
      %v5498 = vpop.f32.mrb[0].mxu0
      %v5499 = vadd.f32 0.0, %v5498
      %v5500 = vpop.f32.mrb[0].mxu0
      %v5501 = vpop.f32.mrb[0].mxu0
      %v5502 = vadd.f32 0.0, %v5501
      %v5503 = vpop.f32.mrb[0].mxu0
      %5504 = vmatprep.mubr.bf16.mxu0 %v5114
      %5505 = vmatmul.mubr.bf16.gmra.mrb[0].mxu0 %v5050
      %v5506 = vpop.f32.mrb[0].mxu0
      %v5507 = vadd.f32 0.0, %v5506
      %v5508 = vpop.f32.mrb[0].mxu0
      %v5509 = vpop.f32.mrb[0].mxu0
      %v5510 = vadd.f32 0.0, %v5509
      %v5511 = vpop.f32.mrb[0].mxu0
      %5512 = vmatprep.mubr.bf16.mxu0 %v5115
      %5513 = vmatmul.mubr.bf16.gmra.mrb[0].mxu0 %v5051
      %v5514 = vpop.f32.mrb[0].mxu0
      %v5515 = vadd.f32 0.0, %v5514
      %v5516 = vpop.f32.mrb[0].mxu0
      %v5517 = vpop.f32.mrb[0].mxu0
      %v5518 = vadd.f32 0.0, %v5517
      %v5519 = vpop.f32.mrb[0].mxu0
      %5520 = vmatprep.mubr.bf16.mxu0 %v5116
      %5521 = vmatmul.mubr.bf16.gmra.mrb[0].mxu0 %v5052
      %v5522 = vpop.f32.mrb[0].mxu0
      %v5523 = vadd.f32 0.0, %v5522
      %v5524 = vpop.f32.mrb[0].mxu0
      %v5525 = vpop.f32.mrb[0].mxu0
      %v5526 = vadd.f32 0.0, %v5525
      %v5527 = vpop.f32.mrb[0].mxu0
      %5528 = vmatprep.mubr.bf16.mxu0 %v5117
      %5529 = vmatmul.mubr.bf16.gmra.mrb[0].mxu0 %v5053
      %v5530 = vpop.f32.mrb[0].mxu0
      %v5531 = vadd.f32 0.0, %v5530
      %v5532 = vpop.f32.mrb[0].mxu0
      %v5533 = vpop.f32.mrb[0].mxu0
      %v5534 = vadd.f32 0.0, %v5533
      %v5535 = vpop.f32.mrb[0].mxu0
      %5536 = vmatprep.mubr.bf16.mxu0 %v5118
      %5537 = vmatmul.mubr.bf16.gmra.mrb[0].mxu0 %v5054
      %v5538 = vpop.f32.mrb[0].mxu0
      %v5539 = vadd.f32 0.0, %v5538
      %v5540 = vpop.f32.mrb[0].mxu0
      %v5541 = vpop.f32.mrb[0].mxu0
      %v5542 = vadd.f32 0.0, %v5541
      %v5543 = vpop.f32.mrb[0].mxu0
      %5544 = vmatprep.mubr.bf16.mxu0 %v5119
      %5545 = vmatmul.mubr.bf16.gmra.mrb[0].mxu0 %v5055
      %v5546 = vpop.f32.mrb[0].mxu0
      %v5547 = vadd.f32 0.0, %v5546
      %v5548 = vpop.f32.mrb[0].mxu0
      %v5549 = vpop.f32.mrb[0].mxu0
      %v5550 = vadd.f32 0.0, %v5549
      %v5551 = vpop.f32.mrb[0].mxu0
      %5552 = vdwg.mxu0
      %5553 = vmatprep.subr.bf16.mxu0 0
      %5554 = vmatpush1.bf16.msra.mxu0 %v5360
      %5555 = vmatprep.subr.bf16.mxu0 0
      %5556 = vmatpush1.bf16.msra.mxu0 %v5361
      %5557 = vmatprep.subr.bf16.mxu0 0
      %5558 = vmatpush1.bf16.msra.mxu0 %v5362
      %5559 = vmatprep.subr.bf16.mxu0 0
      %5560 = vmatpush1.bf16.msra.mxu0 %v5363
      %5561 = vmatprep.subr.bf16.mxu0 0
      %5562 = vmatpush1.bf16.msra.mxu0 %v5364
      %5563 = vmatprep.subr.bf16.mxu0 0
      %5564 = vmatpush1.bf16.msra.mxu0 %v5365
      %5565 = vmatprep.subr.bf16.mxu0 0
      %5566 = vmatpush1.bf16.msra.mxu0 %v5366
      %5567 = vmatprep.subr.bf16.mxu0 0
      %5568 = vmatpush1.bf16.msra.mxu0 %v5367
      %5569 = vmatprep.subr.bf16.mxu0 0
      %5570 = vmatpush1.bf16.msra.mxu0 0
      %5571 = vmatprep.subr.bf16.mxu0 0
      %5572 = vmatpush1.bf16.msra.mxu0 0
      %5573 = vmatprep.subr.bf16.mxu0 0
      %5574 = vmatpush1.bf16.msra.mxu0 0
      %5575 = vmatprep.subr.bf16.mxu0 0
      %5576 = vmatpush1.bf16.msra.mxu0 0
      %5577 = vmatprep.subr.bf16.mxu0 0
      %5578 = vmatpush1.bf16.msra.mxu0 0
      %5579 = vmatprep.subr.bf16.mxu0 0
      %5580 = vmatpush1.bf16.msra.mxu0 0
      %5581 = vmatprep.subr.bf16.mxu0 0
      %5582 = vmatpush1.bf16.msra.mxu0 0
      %5583 = vmatprep.subr.bf16.mxu0 0
      %5584 = vmatpush1.bf16.msra.mxu0 0
      %5585 = vmatprep.mubr.bf16.mxu0 0
      %5586 = vmatmul.mubr.bf16.gmra.mrb[0].mxu0 %v5168
      %v5587 = vpop.f32.mrb[0].mxu0
      %v5588 = vadd.f32 %v5427, %v5587
      %v5589 = vpop.f32.mrb[0].mxu0
      %v5590 = vpop.f32.mrb[0].mxu0
      %v5591 = vadd.f32 %v5430, %v5590
      %v5592 = vpop.f32.mrb[0].mxu0
      %5593 = vmatprep.mubr.bf16.mxu0 0
      %5594 = vmatmul.mubr.bf16.gmra.mrb[0].mxu0 %v5169
      %v5595 = vpop.f32.mrb[0].mxu0
      %v5596 = vadd.f32 %v5435, %v5595
      %v5597 = vpop.f32.mrb[0].mxu0
      %v5598 = vpop.f32.mrb[0].mxu0
      %v5599 = vadd.f32 %v5438, %v5598
      %v5600 = vpop.f32.mrb[0].mxu0
      %5601 = vmatprep.mubr.bf16.mxu0 0
      %5602 = vmatmul.mubr.bf16.gmra.mrb[0].mxu0 %v5170
      %v5603 = vpop.f32.mrb[0].mxu0
      %v5604 = vadd.f32 %v5443, %v5603
      %v5605 = vpop.f32.mrb[0].mxu0
      %v5606 = vpop.f32.mrb[0].mxu0
      %v5607 = vadd.f32 %v5446, %v5606
      %v5608 = vpop.f32.mrb[0].mxu0
      %5609 = vmatprep.mubr.bf16.mxu0 0
      %5610 = vmatmul.mubr.bf16.gmra.mrb[0].mxu0 %v5171
      %v5611 = vpop.f32.mrb[0].mxu0
      %v5612 = vadd.f32 %v5451, %v5611
      %v5613 = vpop.f32.mrb[0].mxu0
      %v5614 = vpop.f32.mrb[0].mxu0
      %v5615 = vadd.f32 %v5454, %v5614
      %v5616 = vpop.f32.mrb[0].mxu0
      %5617 = vmatprep.mubr.bf16.mxu0 0
      %5618 = vmatmul.mubr.bf16.gmra.mrb[0].mxu0 %v5172
      %v5619 = vpop.f32.mrb[0].mxu0
      %v5620 = vadd.f32 %v5459, %v5619
      %v5621 = vpop.f32.mrb[0].mxu0
      %v5622 = vpop.f32.mrb[0].mxu0
      %v5623 = vadd.f32 %v5462, %v5622
      %v5624 = vpop.f32.mrb[0].mxu0
      %5625 = vmatprep.mubr.bf16.mxu0 0
      %5626 = vmatmul.mubr.bf16.gmra.mrb[0].mxu0 %v5173
      %v5627 = vpop.f32.mrb[0].mxu0
      %v5628 = vadd.f32 %v5467, %v5627
      %v5629 = vpop.f32.mrb[0].mxu0
      %v5630 = vpop.f32.mrb[0].mxu0
      %v5631 = vadd.f32 %v5470, %v5630
      %v5632 = vpop.f32.mrb[0].mxu0
      %5633 = vmatprep.mubr.bf16.mxu0 0
      %5634 = vmatmul.mubr.bf16.gmra.mrb[0].mxu0 %v5174
      %v5635 = vpop.f32.mrb[0].mxu0
      %v5636 = vadd.f32 %v5475, %v5635
      %v5637 = vpop.f32.mrb[0].mxu0
      %v5638 = vpop.f32.mrb[0].mxu0
      %v5639 = vadd.f32 %v5478, %v5638
      %v5640 = vpop.f32.mrb[0].mxu0
      %5641 = vmatprep.mubr.bf16.mxu0 0
      %5642 = vmatmul.mubr.bf16.gmra.mrb[0].mxu0 %v5175
      %v5643 = vpop.f32.mrb[0].mxu0
      %v5644 = vadd.f32 %v5483, %v5643
      %v5645 = vpop.f32.mrb[0].mxu0
      %v5646 = vpop.f32.mrb[0].mxu0
      %v5647 = vadd.f32 %v5486, %v5646
      %v5648 = vpop.f32.mrb[0].mxu0
      %5649 = vmatprep.mubr.bf16.mxu0 0
      %5650 = vmatmul.mubr.bf16.gmra.mrb[0].mxu0 %v5176
      %v5651 = vpop.f32.mrb[0].mxu0
      %v5652 = vadd.f32 %v5491, %v5651
      %v5653 = vpop.f32.mrb[0].mxu0
      %v5654 = vpop.f32.mrb[0].mxu0
      %v5655 = vadd.f32 %v5494, %v5654
      %v5656 = vpop.f32.mrb[0].mxu0
      %5657 = vmatprep.mubr.bf16.mxu0 0
      %5658 = vmatmul.mubr.bf16.gmra.mrb[0].mxu0 %v5177
      %v5659 = vpop.f32.mrb[0].mxu0
      %v5660 = vadd.f32 %v5499, %v5659
      %v5661 = vpop.f32.mrb[0].mxu0
      %v5662 = vpop.f32.mrb[0].mxu0
      %v5663 = vadd.f32 %v5502, %v5662
      %v5664 = vpop.f32.mrb[0].mxu0
      %5665 = vmatprep.mubr.bf16.mxu0 0
      %5666 = vmatmul.mubr.bf16.gmra.mrb[0].mxu0 %v5178
      %v5667 = vpop.f32.mrb[0].mxu0
      %v5668 = vadd.f32 %v5507, %v5667
      %v5669 = vpop.f32.mrb[0].mxu0
      %v5670 = vpop.f32.mrb[0].mxu0
      %v5671 = vadd.f32 %v5510, %v5670
      %v5672 = vpop.f32.mrb[0].mxu0
      %5673 = vmatprep.mubr.bf16.mxu0 0
      %5674 = vmatmul.mubr.bf16.gmra.mrb[0].mxu0 %v5179
      %v5675 = vpop.f32.mrb[0].mxu0
      %v5676 = vadd.f32 %v5515, %v5675
      %v5677 = vpop.f32.mrb[0].mxu0
      %v5678 = vpop.f32.mrb[0].mxu0
      %v5679 = vadd.f32 %v5518, %v5678
      %v5680 = vpop.f32.mrb[0].mxu0
      %5681 = vmatprep.mubr.bf16.mxu0 0
      %5682 = vmatmul.mubr.bf16.gmra.mrb[0].mxu0 %v5180
      %v5683 = vpop.f32.mrb[0].mxu0
      %v5684 = vadd.f32 %v5523, %v5683
      %v5685 = vpop.f32.mrb[0].mxu0
      %v5686 = vpop.f32.mrb[0].mxu0
      %v5687 = vadd.f32 %v5526, %v5686
      %v5688 = vpop.f32.mrb[0].mxu0
      %5689 = vmatprep.mubr.bf16.mxu0 0
      %5690 = vmatmul.mubr.bf16.gmra.mrb[0].mxu0 %v5181
      %v5691 = vpop.f32.mrb[0].mxu0
      %v5692 = vadd.f32 %v5531, %v5691
      %v5693 = vpop.f32.mrb[0].mxu0
      %v5694 = vpop.f32.mrb[0].mxu0
      %v5695 = vadd.f32 %v5534, %v5694
      %v5696 = vpop.f32.mrb[0].mxu0
      %5697 = vmatprep.mubr.bf16.mxu0 0
      %5698 = vmatmul.mubr.bf16.gmra.mrb[0].mxu0 %v5182
      %v5699 = vpop.f32.mrb[0].mxu0
      %v5700 = vadd.f32 %v5539, %v5699
      %v5701 = vpop.f32.mrb[0].mxu0
      %v5702 = vpop.f32.mrb[0].mxu0
      %v5703 = vadd.f32 %v5542, %v5702
      %v5704 = vpop.f32.mrb[0].mxu0
      %5705 = vmatprep.mubr.bf16.mxu0 0
      %5706 = vmatmul.mubr.bf16.gmra.mrb[0].mxu0 %v5183
      %v5707 = vpop.f32.mrb[0].mxu0
      %v5708 = vadd.f32 %v5547, %v5707
      %v5709 = vpop.f32.mrb[0].mxu0
      %v5710 = vpop.f32.mrb[0].mxu0
      %v5711 = vadd.f32 %v5550, %v5710
      %v5712 = vpop.f32.mrb[0].mxu0
      %5713 = vdwg.mxu0
      %v5714 = vadd.f32 %v4257, %v5588
      %v5715 = vadd.f32 %v4260, %v5591
      %v5716 = vadd.f32 %v4265, %v5596
      %v5717 = vadd.f32 %v4268, %v5599
      %v5718 = vadd.f32 %v4273, %v5604
      %v5719 = vadd.f32 %v4276, %v5607
      %v5720 = vadd.f32 %v4281, %v5612
      %v5721 = vadd.f32 %v4284, %v5615
      %v5722 = vadd.f32 %v4289, %v5620
      %v5723 = vadd.f32 %v4292, %v5623
      %v5724 = vadd.f32 %v4297, %v5628
      %v5725 = vadd.f32 %v4300, %v5631
      %v5726 = vadd.f32 %v4305, %v5636
      %v5727 = vadd.f32 %v4308, %v5639
      %v5728 = vadd.f32 %v4313, %v5644
      %v5729 = vadd.f32 %v4316, %v5647
      %v5730 = vadd.f32 %v4321, %v5652
      %v5731 = vadd.f32 %v4324, %v5655
      %v5732 = vadd.f32 %v4329, %v5660
      %v5733 = vadd.f32 %v4332, %v5663
      %v5734 = vadd.f32 %v4337, %v5668
      %v5735 = vadd.f32 %v4340, %v5671
      %v5736 = vadd.f32 %v4345, %v5676
      %v5737 = vadd.f32 %v4348, %v5679
      %v5738 = vadd.f32 %v4353, %v5684
      %v5739 = vadd.f32 %v4356, %v5687
      %v5740 = vadd.f32 %v4361, %v5692
      %v5741 = vadd.f32 %v4364, %v5695
      %v5742 = vadd.f32 %v4369, %v5700
      %v5743 = vadd.f32 %v4372, %v5703
      %v5744 = vadd.f32 %v4377, %v5708
      %v5745 = vadd.f32 %v4380, %v5711
      %v5746 = vld [vmem:[%s6] sm:$0x1]
      %v5748 = vlaneseq
      %v5749 = vshrl.u32 %v5748, 7
      %v5750 = vsub.s32 0, %v5749
      %v5751 = vrot.slane %v5746, %v5750
      %v5753 = vadd.f32 %v5714, %v5751
      %v5754 = vadd.f32 %v5715, %v5751
      %v5755 = vadd.f32 %v5716, %v5751
      %v5756 = vadd.f32 %v5717, %v5751
      %v5757 = vadd.f32 %v5718, %v5751
      %v5758 = vadd.f32 %v5719, %v5751
      %v5759 = vadd.f32 %v5720, %v5751
      %v5760 = vadd.f32 %v5721, %v5751
      %v5761 = vadd.f32 %v5722, %v5751
      %v5762 = vadd.f32 %v5723, %v5751
      %v5763 = vadd.f32 %v5724, %v5751
      %v5764 = vadd.f32 %v5725, %v5751
      %v5765 = vadd.f32 %v5726, %v5751
      %v5766 = vadd.f32 %v5727, %v5751
      %v5767 = vadd.f32 %v5728, %v5751
      %v5768 = vadd.f32 %v5729, %v5751
      %v5769 = vadd.f32 %v5730, %v5751
      %v5770 = vadd.f32 %v5731, %v5751
      %v5771 = vadd.f32 %v5732, %v5751
      %v5772 = vadd.f32 %v5733, %v5751
      %v5773 = vadd.f32 %v5734, %v5751
      %v5774 = vadd.f32 %v5735, %v5751
      %v5775 = vadd.f32 %v5736, %v5751
      %v5776 = vadd.f32 %v5737, %v5751
      %v5777 = vadd.f32 %v5738, %v5751
      %v5778 = vadd.f32 %v5739, %v5751
      %v5779 = vadd.f32 %v5740, %v5751
      %v5780 = vadd.f32 %v5741, %v5751
      %v5781 = vadd.f32 %v5742, %v5751
      %v5782 = vadd.f32 %v5743, %v5751
      %v5783 = vadd.f32 %v5744, %v5751
      %v5784 = vadd.f32 %v5745, %v5751
      %v5785 = vpack.c.bf16 %v5754, %v5753
      %v5786 = vpack.c.bf16 %v5756, %v5755
      %v5787 = vpack.c.bf16 %v5758, %v5757
      %v5788 = vpack.c.bf16 %v5760, %v5759
      %v5789 = vpack.c.bf16 %v5762, %v5761
      %v5790 = vpack.c.bf16 %v5764, %v5763
      %v5791 = vpack.c.bf16 %v5766, %v5765
      %v5792 = vpack.c.bf16 %v5768, %v5767
      %v5793 = vpack.c.bf16 %v5770, %v5769
      %v5794 = vpack.c.bf16 %v5772, %v5771
      %v5795 = vpack.c.bf16 %v5774, %v5773
      %v5796 = vpack.c.bf16 %v5776, %v5775
      %v5797 = vpack.c.bf16 %v5778, %v5777
      %v5798 = vpack.c.bf16 %v5780, %v5779
      %v5799 = vpack.c.bf16 %v5782, %v5781
      %v5800 = vpack.c.bf16 %v5784, %v5783
      %v5817 = vunpack.c.l.b16 %v5785
      %v5818 = vunpack.c.h.b16 %v5785
      %v5819 = vunpack.c.l.b16 %v5786
      %v5820 = vunpack.c.h.b16 %v5786
      %v5821 = vunpack.c.l.b16 %v5787
      %v5822 = vunpack.c.h.b16 %v5787
      %v5823 = vunpack.c.l.b16 %v5788
      %v5824 = vunpack.c.h.b16 %v5788
      %v5825 = vunpack.c.l.b16 %v5789
      %v5826 = vunpack.c.h.b16 %v5789
      %v5827 = vunpack.c.l.b16 %v5790
      %v5828 = vunpack.c.h.b16 %v5790
      %v5829 = vunpack.c.l.b16 %v5791
      %v5830 = vunpack.c.h.b16 %v5791
      %v5831 = vunpack.c.l.b16 %v5792
      %v5832 = vunpack.c.h.b16 %v5792
      %v5833 = vunpack.c.l.b16 %v5793
      %v5834 = vunpack.c.h.b16 %v5793
      %v5835 = vunpack.c.l.b16 %v5794
      %v5836 = vunpack.c.h.b16 %v5794
      %v5837 = vunpack.c.l.b16 %v5795
      %v5838 = vunpack.c.h.b16 %v5795
      %v5839 = vunpack.c.l.b16 %v5796
      %v5840 = vunpack.c.h.b16 %v5796
      %v5841 = vunpack.c.l.b16 %v5797
      %v5842 = vunpack.c.h.b16 %v5797
      %v5843 = vunpack.c.l.b16 %v5798
      %v5844 = vunpack.c.h.b16 %v5798
      %v5845 = vunpack.c.l.b16 %v5799
      %v5846 = vunpack.c.h.b16 %v5799
      %v5847 = vunpack.c.l.b16 %v5800
      %v5848 = vunpack.c.h.b16 %v5800
      %v5849 = vpack.c.b16 %v5817, %v5817
      %v5850 = vpack.c.b16 %v5818, %v5818
      %v5851 = vpack.c.b16 %v5819, %v5819
      %v5852 = vpack.c.b16 %v5820, %v5820
      %v5853 = vpack.c.b16 %v5821, %v5821
      %v5854 = vpack.c.b16 %v5822, %v5822
      %v5855 = vpack.c.b16 %v5823, %v5823
      %v5856 = vpack.c.b16 %v5824, %v5824
      %v5857 = vpack.c.b16 %v5825, %v5825
      %v5858 = vpack.c.b16 %v5826, %v5826
      %v5859 = vpack.c.b16 %v5827, %v5827
      %v5860 = vpack.c.b16 %v5828, %v5828
      %v5861 = vpack.c.b16 %v5829, %v5829
      %v5862 = vpack.c.b16 %v5830, %v5830
      %v5863 = vpack.c.b16 %v5831, %v5831
      %v5864 = vpack.c.b16 %v5832, %v5832
      %v5865 = vpack.c.b16 %v5833, %v5833
      %v5866 = vpack.c.b16 %v5834, %v5834
      %v5867 = vpack.c.b16 %v5835, %v5835
      %v5868 = vpack.c.b16 %v5836, %v5836
      %v5869 = vpack.c.b16 %v5837, %v5837
      %v5870 = vpack.c.b16 %v5838, %v5838
      %v5871 = vpack.c.b16 %v5839, %v5839
      %v5872 = vpack.c.b16 %v5840, %v5840
      %v5873 = vpack.c.b16 %v5841, %v5841
      %v5874 = vpack.c.b16 %v5842, %v5842
      %v5875 = vpack.c.b16 %v5843, %v5843
      %v5876 = vpack.c.b16 %v5844, %v5844
      %v5877 = vpack.c.b16 %v5845, %v5845
      %v5878 = vpack.c.b16 %v5846, %v5846
      %v5879 = vpack.c.b16 %v5847, %v5847
      %v5880 = vpack.c.b16 %v5848, %v5848
      %5913 = vst [vmem:[%s278 + $0x4] sm:$0xf] %v5849
      %5914 = vst [vmem:[%s278 + $0xc] sm:$0xf] %v5850
      %5915 = vst [vmem:[%s278 + $0x14] sm:$0xf] %v5851
      %5916 = vst [vmem:[%s278 + $0x1c] sm:$0xf] %v5852
      %5917 = vst [vmem:[%s278 + $0x24] sm:$0xf] %v5853
      %5918 = vst [vmem:[%s278 + $0x2c] sm:$0xf] %v5854
      %5919 = vst [vmem:[%s278 + $0x34] sm:$0xf] %v5855
      %5920 = vst [vmem:[%s278 + $0x3c] sm:$0xf] %v5856
      %5921 = vst [vmem:[%s278 + $0x44] sm:$0xf] %v5857
      %5922 = vst [vmem:[%s278 + $0x4c] sm:$0xf] %v5858
      %5923 = vst [vmem:[%s278 + $0x54] sm:$0xf] %v5859
      %5924 = vst [vmem:[%s278 + $0x5c] sm:$0xf] %v5860
      %5925 = vst [vmem:[%s278 + $0x64] sm:$0xf] %v5861
      %5926 = vst [vmem:[%s278 + $0x6c] sm:$0xf] %v5862
      %5927 = vst [vmem:[%s278 + $0x74] sm:$0xf] %v5863
      %5928 = vst [vmem:[%s278 + $0x7c] sm:$0xf] %v5864
      %5929 = vst [vmem:[%s278 + $0x84] sm:$0xf] %v5865
      %5930 = vst [vmem:[%s278 + $0x8c] sm:$0xf] %v5866
      %5931 = vst [vmem:[%s278 + $0x94] sm:$0xf] %v5867
      %5932 = vst [vmem:[%s278 + $0x9c] sm:$0xf] %v5868
      %5933 = vst [vmem:[%s278 + $0xa4] sm:$0xf] %v5869
      %5934 = vst [vmem:[%s278 + $0xac] sm:$0xf] %v5870
      %5935 = vst [vmem:[%s278 + $0xb4] sm:$0xf] %v5871
      %5936 = vst [vmem:[%s278 + $0xbc] sm:$0xf] %v5872
      %5937 = vst [vmem:[%s278 + $0xc4] sm:$0xf] %v5873
      %5938 = vst [vmem:[%s278 + $0xcc] sm:$0xf] %v5874
      %5939 = vst [vmem:[%s278 + $0xd4] sm:$0xf] %v5875
      %5940 = vst [vmem:[%s278 + $0xdc] sm:$0xf] %v5876
      %5941 = vst [vmem:[%s278 + $0xe4] sm:$0xf] %v5877
      %5942 = vst [vmem:[%s278 + $0xec] sm:$0xf] %v5878
      %5943 = vst [vmem:[%s278 + $0xf4] sm:$0xf] %v5879
      %5944 = vst [vmem:[%s278 + $0xfc] sm:$0xf] %v5880
      %p5945 = scmp.lt.s32.totalorder %s18, 1
      %s5946 = scalar_select %p5945, %s18, 1
      %s5947 = smul.addr %s5946, 64
      %s5948 = smul.addr %s5947, 4
      %s5949 = scalar_lea.vmem %s7, %s5948
      // Predicated region
      $region49: #{fire_forward.1} parent=47 // pred_check
        %p5950 = pneg %p188
      $region50: #{fire_forward.1} parent=47 // pred_check_branch
        %5952 = sbr.rel (%p5950) target = $region52
      $region51: #{fire_forward.1} parent=47 // pred_region
        _
      $region52: #{fire_forward.1} parent=47 // pred_fallthru
        _
    $region48: #{fire_forward.1} parent=5 // pred_fallthru
      _
    %p5953 = scmp.le.s32.totalorder 2, %s13
    // Predicated region
    $region53: #{fire_forward.1} parent=5 // pred_check
      %p5954 = pneg %p5953
    $region54: #{fire_forward.1} parent=5 // pred_check_branch
      %5956 = sbr.rel (%p5954) target = $region56
    $region55: #{fire_forward.1} parent=5 // pred_region
      %s5957 = ssub.s32 %s13, 2
      // Predicated region
      $region57: #{fire_forward.1} parent=55 // pred_check
        %p5958 = pneg %p194
      $region58: #{fire_forward.1} parent=55 // pred_check_branch
        %5960 = sbr.rel (%p5958) target = $region60
      $region59: #{fire_forward.1} parent=55 // pred_region
        %p5961 = scmp.lt.s32.totalorder %s19, 1
        %s5962 = scalar_select %p5961, %s19, 1
        %s5963 = smul.addr %s5962, 64
        %s5964 = smul.addr %s5963, 4
        %s5965 = scalar_lea.vmem %s7, %s5964
      $region60: #{fire_forward.1} parent=55 // pred_fallthru
        _
    $region56: #{fire_forward.1} parent=5 // pred_fallthru
      _
  $region6: #{fire_forward.1} parent=0 // loop_footer
    %s17 = sadd.s32 1, %s13
  $region7: #{fire_forward.1} parent=0 // loop_footer_branch
    %12 = sbr.rel target = $region3
  $region8: #{fire_forward.1} parent=0 // loop_exit
    _

</llo_original>
